<compile_context>
chip_gen: v7x
topology: tpu7x:2x2x1
jax: 0.10.0
libtpu: 0.0.40
codegen_flags: <defaults>
</compile_context>

<pallas_src>
import jax
import jax.numpy as jnp
from jax import lax
from jax.experimental import pallas as pl
from jax.experimental.pallas import tpu as pltpu

NODE_FEATURE_DIM = 16   # input feature dim per node
GC1_DIM = 441           # gc1/gc2 width; fixed at 441 by fc1 = Linear(441, FC1)
GC1_PAD = 512           # lane-aligned padded gc width (zero padding is numerically inert)
FC1_DIM = 32
FC2_DIM = 32            # must equal FC1_DIM (forward feeds fc1 output into fc2)
ACTION_DIM = 4
ACTION_PAD = 128        # lane-dense output slab; sliced back to ACTION_DIM in the wrapper
NUM_NODES = 8

# load-bearing contracts of the original module:
assert GC1_DIM == 441, "fc1 = nn.Linear(441, FC1) hard-codes the gc width to 441"
assert FC1_DIM == FC2_DIM, "forward chains fc1 -> fc2, so FC1 must equal FC2"
assert GC1_PAD >= GC1_DIM and GC1_PAD % 128 == 0
assert ACTION_PAD >= ACTION_DIM and ACTION_PAD % 128 == 0


def _graph_network_kernel(adj_ref, x_ref,
                          w1_ref, b1_ref, w2_ref, b2_ref,
                          wf1_ref, bf1_ref, wf2_ref, bf2_ref, wf3_ref, bf3_ref,
                          out_ref):
    tb, n, _ = adj_ref.shape
    f_in = x_ref.shape[2]
    gc = w1_ref.shape[1]

    adj = adj_ref[...]                                       # (TB, n, n)
    x = x_ref[...]                                           # (TB, n, F_in)

    # --- A + I (identity broadcast over the batch block) ------------------------
    ri = lax.broadcasted_iota(jnp.int32, (n, n), 0)
    ci = lax.broadcasted_iota(jnp.int32, (n, n), 1)
    eye = jnp.where(ri == ci, 1.0, 0.0).astype(jnp.float32)
    a = adj + eye[None, :, :]                                # (TB, n, n)

    # --- symmetric normalization via row degrees only (adj symmetric) -----------
    #   A_hat @ M == dinv * (A @ (dinv * M)),  dinv = D^{-1/2}
    dinv = lax.rsqrt(jnp.sum(a, axis=2, keepdims=True))      # (TB, n, 1)

    # --- gc1 aggregation on the VPU (aggregate-then-project keeps A on F=16) ----
    xs = dinv * x                                            # (TB, n, F_in)
    s = a[:, :, 0:1] * xs[:, 0:1, :]
    for j in range(1, n):                                    # static unroll, n = 8
        s = s + a[:, :, j:j+1] * xs[:, j:j+1, :]
    agg = dinv * s                                           # (TB, n, F_in)

    # --- gc1 projection: one batched (TB*n, F_in) x (F_in, GC) MXU matmul -------
    agg_flat = agg.reshape(tb * n, f_in)
    h1 = jnp.maximum(
        jnp.dot(agg_flat, w1_ref[...], preferred_element_type=jnp.float32)
        + b1_ref[...], 0.0)                                  # (TB*n, GC)
    h1 = h1.reshape(tb, n, gc)                               # (TB, n, GC)

    # --- gc2, node-0 row only, A_hat contraction on VPU/XLU ---------------------
    #   coef[b,j] = dinv[b,0] * a[b,j,0] * dinv[b,j]   (a symmetric: a[j,0] == a[0,j])
    coef = dinv[:, 0:1, 0:1] * a[:, :, 0:1] * dinv           # (TB, n, 1)
    v1 = jnp.sum(coef * h1, axis=1)                          # (TB, GC)  sublane reduce
    v = jnp.maximum(
        jnp.dot(v1.astype(jnp.bfloat16), w2_ref[...],        # (TB,GC)x(GC,GC) bf16 MXU
                preferred_element_type=jnp.float32) + b2_ref[...], 0.0)

    # --- fc1 -> fc2 -> fc3, each with relu, batched over TB ---------------------
    h3 = jnp.maximum(
        jnp.dot(v.astype(jnp.bfloat16), wf1_ref[...],
                preferred_element_type=jnp.float32) + bf1_ref[...], 0.0)   # (TB, FC1)
    h4 = jnp.maximum(
        jnp.dot(h3, wf2_ref[...], preferred_element_type=jnp.float32)
        + bf2_ref[...], 0.0)                                               # (TB, FC2)
    out = jnp.maximum(
        jnp.dot(h4, wf3_ref[...], preferred_element_type=jnp.float32)
        + bf3_ref[...], 0.0)                                               # (TB, ACTION_PAD)

    out_ref[...] = out


def graph_network_forward_batched(states, adjs, params, *, block_batch=8):
    """states: (B, N, F_in) f32; adjs: (B, N, N) f32, SYMMETRIC 0/1 (required by the
    row-degree-only normalization and the node-0 coef trick). Returns (B, ACTION_DIM).
    block_batch: samples per grid step; use multiples of 256 (v6e/v7x) or 128 (v5e)."""
    B = states.shape[0]
    n = NUM_NODES
    tb = int(block_batch)
    assert tb % 8 == 0, "block_batch must be a multiple of 8 (sublane-aligned output tile)"

    pad = (-B) % tb
    if pad:
        states = jnp.pad(states, ((0, pad), (0, 0), (0, 0)))
        adjs = jnp.pad(adjs, ((0, pad), (0, 0), (0, 0)))     # zero adj -> A+I = I, deg = 1
    b_pad = B + pad
    num_steps = pl.cdiv(b_pad, tb)

    per_block = lambda b: (b, 0, 0)
    resident = lambda b: (0, 0)   # constant block index => weights DMA'd once, stay in VMEM

    in_specs = [
        pl.BlockSpec((tb, n, n), per_block),                    # adj
        pl.BlockSpec((tb, n, NODE_FEATURE_DIM), per_block),     # state
        pl.BlockSpec((NODE_FEATURE_DIM, GC1_PAD), resident),    # w1
        pl.BlockSpec((1, GC1_PAD), resident),                   # b1
        pl.BlockSpec((GC1_PAD, GC1_PAD), resident),             # w2 (bf16)
        pl.BlockSpec((1, GC1_PAD), resident),                   # b2
        pl.BlockSpec((GC1_PAD, FC1_DIM), resident),             # wf1 (bf16)
        pl.BlockSpec((1, FC1_DIM), resident),                   # bf1
        pl.BlockSpec((FC2_DIM, FC2_DIM), resident),             # wf2
        pl.BlockSpec((1, FC2_DIM), resident),                   # bf2
        pl.BlockSpec((FC2_DIM, ACTION_PAD), resident),          # wf3 (cols padded to 128)
        pl.BlockSpec((1, ACTION_PAD), resident),                # bf3 (cols padded to 128)
    ]
    out_specs = pl.BlockSpec((tb, ACTION_PAD), lambda b: (b, 0))

    out = pl.pallas_call(
        _graph_network_kernel,
        out_shape=jax.ShapeDtypeStruct((b_pad, ACTION_PAD), jnp.float32),
        grid=(num_steps,),
        in_specs=in_specs,
        out_specs=out_specs,
        compiler_params=pltpu.CompilerParams(
            dimension_semantics=("parallel",)),   # shard batch blocks across TCs (v7x)
    )(adjs, states,
      params["w1"], params["b1"], params["w2"], params["b2"],
      params["wf1"], params["bf1"], params["wf2"], params["bf2"],
      params["wf3"], params["bf3"])
    return out[:B, :ACTION_DIM]


def graph_network_forward(state, adj, params):
    """Single-sample path matching the PyTorch module's (ACTION_DIM,) output."""
    out = graph_network_forward_batched(state[None], adj[None], params)
    return out[0]


def init_params(key):
    ks = jax.random.split(key, 10)

    def u(k, shape, fan_in):
        bound = 1.0 / jnp.sqrt(float(fan_in))
        return jax.random.uniform(k, shape, jnp.float32, -bound, bound)

    def pad2(w, rows, cols):
        return jnp.zeros((rows, cols), jnp.float32).at[: w.shape[0], : w.shape[1]].set(w)

    w1 = u(ks[0], (NODE_FEATURE_DIM, GC1_DIM), NODE_FEATURE_DIM)
    b1 = u(ks[1], (1, GC1_DIM), NODE_FEATURE_DIM)
    w2 = u(ks[2], (GC1_DIM, GC1_DIM), GC1_DIM)
    b2 = u(ks[3], (1, GC1_DIM), GC1_DIM)
    wf1 = u(ks[4], (GC1_DIM, FC1_DIM), GC1_DIM)
    bf1 = u(ks[5], (1, FC1_DIM), GC1_DIM)
    wf2 = u(ks[6], (FC2_DIM, FC2_DIM), FC2_DIM)
    bf2 = u(ks[7], (1, FC2_DIM), FC2_DIM)
    wf3 = u(ks[8], (FC2_DIM, ACTION_DIM), FC2_DIM)
    bf3 = u(ks[9], (1, ACTION_DIM), FC2_DIM)

    return {
        # Weights stored (in, out); 441 axes zero-padded to 512, ACTION padded to 128
        # (both paddings numerically inert: relu(0+0)=0, zero rows/cols contribute nothing).
        # The two large weights are bf16 (kernel is HBM/MXU-operand bound), rest f32.
        "w1":  pad2(w1, NODE_FEATURE_DIM, GC1_PAD),
        "b1":  pad2(b1, 1, GC1_PAD),
        "w2":  pad2(w2, GC1_PAD, GC1_PAD).astype(jnp.bfloat16),
        "b2":  pad2(b2, 1, GC1_PAD),
        "wf1": pad2(wf1, GC1_PAD, FC1_DIM).astype(jnp.bfloat16),
        "bf1": bf1,
        "wf2": wf2, "bf2": bf2,
        "wf3": pad2(wf3, FC2_DIM, ACTION_PAD),
        "bf3": pad2(bf3, 1, ACTION_PAD),
    }


def _reference_forward_matched(state, adj, p):
    """Pure-JAX reference mirroring the kernel's exact algebra / dtypes (tight check)."""
    hp = lax.Precision.HIGHEST
    a = adj + jnp.eye(adj.shape[0], dtype=jnp.float32)
    dinv = lax.rsqrt(jnp.sum(a, axis=1, keepdims=True))          # (n, 1)
    agg = dinv * jnp.dot(a, dinv * state, precision=hp)
    h1 = jax.nn.relu(jnp.dot(agg, p["w1"], precision=hp) + p["b1"])
    coef = dinv[0:1, 0:1] * a[:, 0:1] * dinv                     # (n, 1)
    v1 = jnp.sum(coef * h1, axis=0, keepdims=True)               # (1, GC)
    v = jax.nn.relu(jnp.dot(v1.astype(jnp.bfloat16), p["w2"],
                            preferred_element_type=jnp.float32, precision=hp) + p["b2"])
    h3 = jax.nn.relu(jnp.dot(v.astype(jnp.bfloat16), p["wf1"],
                             preferred_element_type=jnp.float32, precision=hp) + p["bf1"])
    h4 = jax.nn.relu(jnp.dot(h3, p["wf2"], precision=hp) + p["bf2"])
    out = jax.nn.relu(jnp.dot(h4, p["wf3"], precision=hp) + p["bf3"])
    return out[0, :ACTION_DIM]


def _reference_forward_module_order(state, adj, p):
    """Pure-JAX reference following the original module's op order (semantics check)."""
    hp = lax.Precision.HIGHEST
    n = adj.shape[0]
    a = adj + jnp.eye(n, dtype=jnp.float32)
    dinv = lax.rsqrt(jnp.sum(a, axis=1))
    a_hat = dinv[:, None] * a * dinv[None, :]
    w2 = p["w2"].astype(jnp.float32)
    wf1 = p["wf1"].astype(jnp.float32)
    h1 = jax.nn.relu(jnp.dot(a_hat, jnp.dot(state, p["w1"], precision=hp), precision=hp)
                     + p["b1"])
    h2 = jax.nn.relu(jnp.dot(a_hat, jnp.dot(h1, w2, precision=hp), precision=hp) + p["b2"])
    v = h2.reshape(n, -1)[0]                              # x.view(N, -1)[0]
    h3 = jax.nn.relu(jnp.dot(v, wf1, precision=hp) + p["bf1"][0])
    h4 = jax.nn.relu(jnp.dot(h3, p["wf2"], precision=hp) + p["bf2"][0])
    out = jax.nn.relu(jnp.dot(h4, p["wf3"], precision=hp) + p["bf3"][0])
    return out[:ACTION_DIM]


if __name__ == "__main__":
    key = jax.random.PRNGKey(0)
    k_adj, k_state, k_params = jax.random.split(key, 3)
    B = 16
    TB = 8   # demo tile; production: multiples of 256 (v6e/v7x) or 128 (v5e)

    # Deterministic symmetric binary adjacencies (no self loops; GCN adds them).
    raw = jax.random.bernoulli(k_adj, 0.4, (B, NUM_NODES, NUM_NODES)).astype(jnp.float32)
    adjs = jnp.clip(raw + jnp.swapaxes(raw, -1, -2), 0.0, 1.0)
    adjs = adjs * (1.0 - jnp.eye(NUM_NODES, dtype=jnp.float32))
    # the row-degree normalization and node-0 coef trick assume symmetry (as PyG dense GCN):
    assert bool(jnp.all(adjs == jnp.swapaxes(adjs, -1, -2)))

    states = jax.random.normal(k_state, (B, NUM_NODES, NODE_FEATURE_DIM), jnp.float32)
    params = init_params(k_params)

    out = graph_network_forward_batched(states, adjs, params, block_batch=TB)
    out = jax.block_until_ready(out)
    assert out.shape == (B, ACTION_DIM)

    for b in range(B):
        ref_m = _reference_forward_matched(states[b], adjs[b], params)
        ref_o = _reference_forward_module_order(states[b], adjs[b], params)
        assert jnp.allclose(out[b], ref_m, rtol=2e-3, atol=2e-3), (b, out[b], ref_m)
        assert jnp.allclose(out[b], ref_o, rtol=5e-2, atol=5e-2), (b, out[b], ref_o)

    # single-sample wrapper matches the module's 1-D (ACTION_DIM,) output
    single = graph_network_forward(states[0], adjs[0], params)
    single = jax.block_until_ready(single)
    assert single.shape == (ACTION_DIM,)
    assert jnp.allclose(single, out[0], rtol=1e-5, atol=1e-5)

    print("KERNEL_OK")
</pallas_src>

<mosaic_0001>
module attributes {stable_mosaic.version = 11 : i64} {
  func.func @_graph_network_kernel(%arg0: i32, %arg1: memref<8x8x8xf32, #tpu.memory_space<vmem>>, %arg2: memref<8x8x16xf32, #tpu.memory_space<vmem>>, %arg3: memref<16x512xf32, #tpu.memory_space<vmem>>, %arg4: memref<1x512xf32, #tpu.memory_space<vmem>>, %arg5: memref<512x512xbf16, #tpu.memory_space<vmem>>, %arg6: memref<1x512xf32, #tpu.memory_space<vmem>>, %arg7: memref<512x32xbf16, #tpu.memory_space<vmem>>, %arg8: memref<1x32xf32, #tpu.memory_space<vmem>>, %arg9: memref<32x32xf32, #tpu.memory_space<vmem>>, %arg10: memref<1x32xf32, #tpu.memory_space<vmem>>, %arg11: memref<32x128xf32, #tpu.memory_space<vmem>>, %arg12: memref<1x128xf32, #tpu.memory_space<vmem>>, %arg13: memref<8x128xf32, #tpu.memory_space<vmem>>) attributes {dimension_semantics = [#tpu.dimension_semantics<parallel>], iteration_bounds = array<i64: 2>, scalar_prefetch = 0 : i64, scratch_operands = 0 : i64, tpu.core_type = #tpu.core_type<tc>, window_params = [{transform_indices = @transform_0, window_bounds = array<i64: 8, 8, 8>}, {transform_indices = @transform_1, window_bounds = array<i64: 8, 8, 16>}, {pipeline_mode = #tpu.pipeline_mode<synchronous>, transform_indices = @transform_2, window_bounds = array<i64: 16, 512>}, {pipeline_mode = #tpu.pipeline_mode<synchronous>, transform_indices = @transform_3, window_bounds = array<i64: 1, 512>}, {pipeline_mode = #tpu.pipeline_mode<synchronous>, transform_indices = @transform_4, window_bounds = array<i64: 512, 512>}, {pipeline_mode = #tpu.pipeline_mode<synchronous>, transform_indices = @transform_5, window_bounds = array<i64: 1, 512>}, {pipeline_mode = #tpu.pipeline_mode<synchronous>, transform_indices = @transform_6, window_bounds = array<i64: 512, 32>}, {pipeline_mode = #tpu.pipeline_mode<synchronous>, transform_indices = @transform_7, window_bounds = array<i64: 1, 32>}, {pipeline_mode = #tpu.pipeline_mode<synchronous>, transform_indices = @transform_8, window_bounds = array<i64: 32, 32>}, {pipeline_mode = #tpu.pipeline_mode<synchronous>, transform_indices = @transform_9, window_bounds = array<i64: 1, 32>}, {pipeline_mode = #tpu.pipeline_mode<synchronous>, transform_indices = @transform_10, window_bounds = array<i64: 32, 128>}, {pipeline_mode = #tpu.pipeline_mode<synchronous>, transform_indices = @transform_11, window_bounds = array<i64: 1, 128>}, {transform_indices = @transform_12, window_bounds = array<i64: 8, 128>}]} {
    %c0 = arith.constant 0 : index
    %c0_0 = arith.constant 0 : index
    %c0_1 = arith.constant 0 : index
    %0 = vector.load %arg1[%c0, %c0_0, %c0_1] : memref<8x8x8xf32, #tpu.memory_space<vmem>>, vector<8x8x8xf32>
    %c0_2 = arith.constant 0 : index
    %c0_3 = arith.constant 0 : index
    %c0_4 = arith.constant 0 : index
    %1 = vector.load %arg2[%c0_2, %c0_3, %c0_4] : memref<8x8x16xf32, #tpu.memory_space<vmem>>, vector<8x8x16xf32>
    %2 = tpu.iota {dimensions = array<i32: 0>} : vector<8x8xi32>
    %3 = tpu.iota {dimensions = array<i32: 1>} : vector<8x8xi32>
    %4 = arith.cmpi eq, %2, %3 : vector<8x8xi32>
    %cst = arith.constant 1.000000e+00 : f32
    %cst_5 = arith.constant 0.000000e+00 : f32
    %5 = vector.broadcast %cst : f32 to vector<8x8xf32>
    %6 = vector.broadcast %cst_5 : f32 to vector<8x8xf32>
    %7 = arith.select %4, %5, %6 : vector<8x8xi1>, vector<8x8xf32>
    %8 = vector.shape_cast %7 : vector<8x8xf32> to vector<1x8x8xf32>
    %9 = vector.broadcast %8 : vector<1x8x8xf32> to vector<8x8x8xf32>
    %10 = arith.addf %0, %9 : vector<8x8x8xf32>
    %cst_6 = arith.constant dense<0.000000e+00> : vector<8x8xf32>
    %11 = vector.multi_reduction <add>, %10, %cst_6 [2] : vector<8x8x8xf32> to vector<8x8xf32>
    %12 = vector.shape_cast %11 : vector<8x8xf32> to vector<8x8x1xf32>
    %13 = math.rsqrt %12 : vector<8x8x1xf32>
    %14 = vector.broadcast %13 : vector<8x8x1xf32> to vector<8x8x16xf32>
    %15 = arith.mulf %14, %1 : vector<8x8x16xf32>
    %16 = vector.extract_strided_slice %10 {offsets = [0, 0, 0], sizes = [8, 8, 1], strides = [1, 1, 1]} : vector<8x8x8xf32> to vector<8x8x1xf32>
    %17 = vector.extract_strided_slice %15 {offsets = [0, 0, 0], sizes = [8, 1, 16], strides = [1, 1, 1]} : vector<8x8x16xf32> to vector<8x1x16xf32>
    %18 = vector.broadcast %16 : vector<8x8x1xf32> to vector<8x8x16xf32>
    %19 = vector.broadcast %17 : vector<8x1x16xf32> to vector<8x8x16xf32>
    %20 = arith.mulf %18, %19 : vector<8x8x16xf32>
    %21 = vector.extract_strided_slice %10 {offsets = [0, 0, 1], sizes = [8, 8, 1], strides = [1, 1, 1]} : vector<8x8x8xf32> to vector<8x8x1xf32>
    %22 = vector.extract_strided_slice %15 {offsets = [0, 1, 0], sizes = [8, 1, 16], strides = [1, 1, 1]} : vector<8x8x16xf32> to vector<8x1x16xf32>
    %23 = vector.broadcast %21 : vector<8x8x1xf32> to vector<8x8x16xf32>
    %24 = vector.broadcast %22 : vector<8x1x16xf32> to vector<8x8x16xf32>
    %25 = arith.mulf %23, %24 : vector<8x8x16xf32>
    %26 = arith.addf %20, %25 : vector<8x8x16xf32>
    %27 = vector.extract_strided_slice %10 {offsets = [0, 0, 2], sizes = [8, 8, 1], strides = [1, 1, 1]} : vector<8x8x8xf32> to vector<8x8x1xf32>
    %28 = vector.extract_strided_slice %15 {offsets = [0, 2, 0], sizes = [8, 1, 16], strides = [1, 1, 1]} : vector<8x8x16xf32> to vector<8x1x16xf32>
    %29 = vector.broadcast %27 : vector<8x8x1xf32> to vector<8x8x16xf32>
    %30 = vector.broadcast %28 : vector<8x1x16xf32> to vector<8x8x16xf32>
    %31 = arith.mulf %29, %30 : vector<8x8x16xf32>
    %32 = arith.addf %26, %31 : vector<8x8x16xf32>
    %33 = vector.extract_strided_slice %10 {offsets = [0, 0, 3], sizes = [8, 8, 1], strides = [1, 1, 1]} : vector<8x8x8xf32> to vector<8x8x1xf32>
    %34 = vector.extract_strided_slice %15 {offsets = [0, 3, 0], sizes = [8, 1, 16], strides = [1, 1, 1]} : vector<8x8x16xf32> to vector<8x1x16xf32>
    %35 = vector.broadcast %33 : vector<8x8x1xf32> to vector<8x8x16xf32>
    %36 = vector.broadcast %34 : vector<8x1x16xf32> to vector<8x8x16xf32>
    %37 = arith.mulf %35, %36 : vector<8x8x16xf32>
    %38 = arith.addf %32, %37 : vector<8x8x16xf32>
    %39 = vector.extract_strided_slice %10 {offsets = [0, 0, 4], sizes = [8, 8, 1], strides = [1, 1, 1]} : vector<8x8x8xf32> to vector<8x8x1xf32>
    %40 = vector.extract_strided_slice %15 {offsets = [0, 4, 0], sizes = [8, 1, 16], strides = [1, 1, 1]} : vector<8x8x16xf32> to vector<8x1x16xf32>
    %41 = vector.broadcast %39 : vector<8x8x1xf32> to vector<8x8x16xf32>
    %42 = vector.broadcast %40 : vector<8x1x16xf32> to vector<8x8x16xf32>
    %43 = arith.mulf %41, %42 : vector<8x8x16xf32>
    %44 = arith.addf %38, %43 : vector<8x8x16xf32>
    %45 = vector.extract_strided_slice %10 {offsets = [0, 0, 5], sizes = [8, 8, 1], strides = [1, 1, 1]} : vector<8x8x8xf32> to vector<8x8x1xf32>
    %46 = vector.extract_strided_slice %15 {offsets = [0, 5, 0], sizes = [8, 1, 16], strides = [1, 1, 1]} : vector<8x8x16xf32> to vector<8x1x16xf32>
    %47 = vector.broadcast %45 : vector<8x8x1xf32> to vector<8x8x16xf32>
    %48 = vector.broadcast %46 : vector<8x1x16xf32> to vector<8x8x16xf32>
    %49 = arith.mulf %47, %48 : vector<8x8x16xf32>
    %50 = arith.addf %44, %49 : vector<8x8x16xf32>
    %51 = vector.extract_strided_slice %10 {offsets = [0, 0, 6], sizes = [8, 8, 1], strides = [1, 1, 1]} : vector<8x8x8xf32> to vector<8x8x1xf32>
    %52 = vector.extract_strided_slice %15 {offsets = [0, 6, 0], sizes = [8, 1, 16], strides = [1, 1, 1]} : vector<8x8x16xf32> to vector<8x1x16xf32>
    %53 = vector.broadcast %51 : vector<8x8x1xf32> to vector<8x8x16xf32>
    %54 = vector.broadcast %52 : vector<8x1x16xf32> to vector<8x8x16xf32>
    %55 = arith.mulf %53, %54 : vector<8x8x16xf32>
    %56 = arith.addf %50, %55 : vector<8x8x16xf32>
    %57 = vector.extract_strided_slice %10 {offsets = [0, 0, 7], sizes = [8, 8, 1], strides = [1, 1, 1]} : vector<8x8x8xf32> to vector<8x8x1xf32>
    %58 = vector.extract_strided_slice %15 {offsets = [0, 7, 0], sizes = [8, 1, 16], strides = [1, 1, 1]} : vector<8x8x16xf32> to vector<8x1x16xf32>
    %59 = vector.broadcast %57 : vector<8x8x1xf32> to vector<8x8x16xf32>
    %60 = vector.broadcast %58 : vector<8x1x16xf32> to vector<8x8x16xf32>
    %61 = arith.mulf %59, %60 : vector<8x8x16xf32>
    %62 = arith.addf %56, %61 : vector<8x8x16xf32>
    %63 = vector.broadcast %13 : vector<8x8x1xf32> to vector<8x8x16xf32>
    %64 = arith.mulf %63, %62 : vector<8x8x16xf32>
    %65 = vector.shape_cast %64 : vector<8x8x16xf32> to vector<64x16xf32>
    %c0_7 = arith.constant 0 : index
    %c0_8 = arith.constant 0 : index
    %66 = vector.load %arg3[%c0_7, %c0_8] : memref<16x512xf32, #tpu.memory_space<vmem>>, vector<16x512xf32>
    %cst_9 = arith.constant dense<0.000000e+00> : vector<64x512xf32>
    %67 = tpu.matmul %65, %66, %cst_9 {dimension_numbers = #tpu.dot_dimension_numbers<[1], [0], [0], [1], [0, 0, 1, 1], [], []>} : vector<64x16xf32>, vector<16x512xf32>, vector<64x512xf32> -> vector<64x512xf32>
    %c0_10 = arith.constant 0 : index
    %c0_11 = arith.constant 0 : index
    %68 = vector.load %arg4[%c0_10, %c0_11] : memref<1x512xf32, #tpu.memory_space<vmem>>, vector<1x512xf32>
    %69 = vector.broadcast %68 : vector<1x512xf32> to vector<64x512xf32>
    %70 = arith.addf %67, %69 : vector<64x512xf32>
    %cst_12 = arith.constant 0.000000e+00 : f32
    %71 = vector.broadcast %cst_12 : f32 to vector<64x512xf32>
    %72 = arith.maximumf %70, %71 : vector<64x512xf32>
    %73 = vector.shape_cast %72 : vector<64x512xf32> to vector<8x8x512xf32>
    %74 = vector.extract_strided_slice %13 {offsets = [0, 0, 0], sizes = [8, 1, 1], strides = [1, 1, 1]} : vector<8x8x1xf32> to vector<8x1x1xf32>
    %75 = vector.extract_strided_slice %10 {offsets = [0, 0, 0], sizes = [8, 8, 1], strides = [1, 1, 1]} : vector<8x8x8xf32> to vector<8x8x1xf32>
    %76 = vector.broadcast %74 : vector<8x1x1xf32> to vector<8x8x1xf32>
    %77 = arith.mulf %76, %75 : vector<8x8x1xf32>
    %78 = arith.mulf %77, %13 : vector<8x8x1xf32>
    %79 = vector.broadcast %78 : vector<8x8x1xf32> to vector<8x8x512xf32>
    %80 = arith.mulf %79, %73 : vector<8x8x512xf32>
    %cst_13 = arith.constant dense<0.000000e+00> : vector<8x512xf32>
    %81 = vector.multi_reduction <add>, %80, %cst_13 [1] : vector<8x8x512xf32> to vector<8x512xf32>
    %82 = arith.truncf %81 : vector<8x512xf32> to vector<8x512xbf16>
    %c0_14 = arith.constant 0 : index
    %c0_15 = arith.constant 0 : index
    %83 = vector.load %arg5[%c0_14, %c0_15] : memref<512x512xbf16, #tpu.memory_space<vmem>>, vector<512x512xbf16>
    %cst_16 = arith.constant dense<0.000000e+00> : vector<8x512xf32>
    %84 = tpu.matmul %82, %83, %cst_16 {dimension_numbers = #tpu.dot_dimension_numbers<[1], [0], [0], [1], [0, 0, 1, 1], [], []>} : vector<8x512xbf16>, vector<512x512xbf16>, vector<8x512xf32> -> vector<8x512xf32>
    %c0_17 = arith.constant 0 : index
    %c0_18 = arith.constant 0 : index
    %85 = vector.load %arg6[%c0_17, %c0_18] : memref<1x512xf32, #tpu.memory_space<vmem>>, vector<1x512xf32>
    %86 = vector.broadcast %85 : vector<1x512xf32> to vector<8x512xf32>
    %87 = arith.addf %84, %86 : vector<8x512xf32>
    %cst_19 = arith.constant 0.000000e+00 : f32
    %88 = vector.broadcast %cst_19 : f32 to vector<8x512xf32>
    %89 = arith.maximumf %87, %88 : vector<8x512xf32>
    %90 = arith.truncf %89 : vector<8x512xf32> to vector<8x512xbf16>
    %c0_20 = arith.constant 0 : index
    %c0_21 = arith.constant 0 : index
    %91 = vector.load %arg7[%c0_20, %c0_21] : memref<512x32xbf16, #tpu.memory_space<vmem>>, vector<512x32xbf16>
    %cst_22 = arith.constant dense<0.000000e+00> : vector<8x32xf32>
    %92 = tpu.matmul %90, %91, %cst_22 {dimension_numbers = #tpu.dot_dimension_numbers<[1], [0], [0], [1], [0, 0, 1, 1], [], []>} : vector<8x512xbf16>, vector<512x32xbf16>, vector<8x32xf32> -> vector<8x32xf32>
    %c0_23 = arith.constant 0 : index
    %c0_24 = arith.constant 0 : index
    %93 = vector.load %arg8[%c0_23, %c0_24] : memref<1x32xf32, #tpu.memory_space<vmem>>, vector<1x32xf32>
    %94 = vector.broadcast %93 : vector<1x32xf32> to vector<8x32xf32>
    %95 = arith.addf %92, %94 : vector<8x32xf32>
    %cst_25 = arith.constant 0.000000e+00 : f32
    %96 = vector.broadcast %cst_25 : f32 to vector<8x32xf32>
    %97 = arith.maximumf %95, %96 : vector<8x32xf32>
    %c0_26 = arith.constant 0 : index
    %c0_27 = arith.constant 0 : index
    %98 = vector.load %arg9[%c0_26, %c0_27] : memref<32x32xf32, #tpu.memory_space<vmem>>, vector<32x32xf32>
    %cst_28 = arith.constant dense<0.000000e+00> : vector<8x32xf32>
    %99 = tpu.matmul %97, %98, %cst_28 {dimension_numbers = #tpu.dot_dimension_numbers<[1], [0], [0], [1], [0, 0, 1, 1], [], []>} : vector<8x32xf32>, vector<32x32xf32>, vector<8x32xf32> -> vector<8x32xf32>
    %c0_29 = arith.constant 0 : index
    %c0_30 = arith.constant 0 : index
    %100 = vector.load %arg10[%c0_29, %c0_30] : memref<1x32xf32, #tpu.memory_space<vmem>>, vector<1x32xf32>
    %101 = vector.broadcast %100 : vector<1x32xf32> to vector<8x32xf32>
    %102 = arith.addf %99, %101 : vector<8x32xf32>
    %cst_31 = arith.constant 0.000000e+00 : f32
    %103 = vector.broadcast %cst_31 : f32 to vector<8x32xf32>
    %104 = arith.maximumf %102, %103 : vector<8x32xf32>
    %c0_32 = arith.constant 0 : index
    %c0_33 = arith.constant 0 : index
    %105 = vector.load %arg11[%c0_32, %c0_33] : memref<32x128xf32, #tpu.memory_space<vmem>>, vector<32x128xf32>
    %cst_34 = arith.constant dense<0.000000e+00> : vector<8x128xf32>
    %106 = tpu.matmul %104, %105, %cst_34 {dimension_numbers = #tpu.dot_dimension_numbers<[1], [0], [0], [1], [0, 0, 1, 1], [], []>} : vector<8x32xf32>, vector<32x128xf32>, vector<8x128xf32> -> vector<8x128xf32>
    %c0_35 = arith.constant 0 : index
    %c0_36 = arith.constant 0 : index
    %107 = vector.load %arg12[%c0_35, %c0_36] : memref<1x128xf32, #tpu.memory_space<vmem>>, vector<1x128xf32>
    %108 = vector.broadcast %107 : vector<1x128xf32> to vector<8x128xf32>
    %109 = arith.addf %106, %108 : vector<8x128xf32>
    %cst_37 = arith.constant 0.000000e+00 : f32
    %110 = vector.broadcast %cst_37 : f32 to vector<8x128xf32>
    %111 = arith.maximumf %109, %110 : vector<8x128xf32>
    %c0_38 = arith.constant 0 : index
    %c0_39 = arith.constant 0 : index
    %112 = vector.load %arg13[%c0_38, %c0_39] : memref<8x128xf32, #tpu.memory_space<vmem>>, vector<8x128xf32>
    tpu.vector_store %arg13[%c0_38, %c0_39], %111 {strides = array<i32>} : memref<8x128xf32, #tpu.memory_space<vmem>>, vector<8x128xf32>,
    return
  }
  func.func @transform_0(%arg0: i32) -> (i32, i32, i32) {
    %c0_i32 = arith.constant 0 : i32
    %c0_i32_0 = arith.constant 0 : i32
    %c0_i32_1 = arith.constant 0 : i32
    return %arg0, %c0_i32, %c0_i32_0 : i32, i32, i32
  }
  func.func @transform_1(%arg0: i32) -> (i32, i32, i32) {
    %c0_i32 = arith.constant 0 : i32
    %c0_i32_0 = arith.constant 0 : i32
    %c0_i32_1 = arith.constant 0 : i32
    return %arg0, %c0_i32, %c0_i32_0 : i32, i32, i32
  }
  func.func @transform_2(%arg0: i32) -> (i32, i32) {
    %c0_i32 = arith.constant 0 : i32
    %c0_i32_0 = arith.constant 0 : i32
    %c0_i32_1 = arith.constant 0 : i32
    return %c0_i32, %c0_i32_0 : i32, i32
  }
  func.func @transform_3(%arg0: i32) -> (i32, i32) {
    %c0_i32 = arith.constant 0 : i32
    %c0_i32_0 = arith.constant 0 : i32
    %c0_i32_1 = arith.constant 0 : i32
    return %c0_i32, %c0_i32_0 : i32, i32
  }
  func.func @transform_4(%arg0: i32) -> (i32, i32) {
    %c0_i32 = arith.constant 0 : i32
    %c0_i32_0 = arith.constant 0 : i32
    %c0_i32_1 = arith.constant 0 : i32
    return %c0_i32, %c0_i32_0 : i32, i32
  }
  func.func @transform_5(%arg0: i32) -> (i32, i32) {
    %c0_i32 = arith.constant 0 : i32
    %c0_i32_0 = arith.constant 0 : i32
    %c0_i32_1 = arith.constant 0 : i32
    return %c0_i32, %c0_i32_0 : i32, i32
  }
  func.func @transform_6(%arg0: i32) -> (i32, i32) {
    %c0_i32 = arith.constant 0 : i32
    %c0_i32_0 = arith.constant 0 : i32
    %c0_i32_1 = arith.constant 0 : i32
    return %c0_i32, %c0_i32_0 : i32, i32
  }
  func.func @transform_7(%arg0: i32) -> (i32, i32) {
    %c0_i32 = arith.constant 0 : i32
    %c0_i32_0 = arith.constant 0 : i32
    %c0_i32_1 = arith.constant 0 : i32
    return %c0_i32, %c0_i32_0 : i32, i32
  }
  func.func @transform_8(%arg0: i32) -> (i32, i32) {
    %c0_i32 = arith.constant 0 : i32
    %c0_i32_0 = arith.constant 0 : i32
    %c0_i32_1 = arith.constant 0 : i32
    return %c0_i32, %c0_i32_0 : i32, i32
  }
  func.func @transform_9(%arg0: i32) -> (i32, i32) {
    %c0_i32 = arith.constant 0 : i32
    %c0_i32_0 = arith.constant 0 : i32
    %c0_i32_1 = arith.constant 0 : i32
    return %c0_i32, %c0_i32_0 : i32, i32
  }
  func.func @transform_10(%arg0: i32) -> (i32, i32) {
    %c0_i32 = arith.constant 0 : i32
    %c0_i32_0 = arith.constant 0 : i32
    %c0_i32_1 = arith.constant 0 : i32
    return %c0_i32, %c0_i32_0 : i32, i32
  }
  func.func @transform_11(%arg0: i32) -> (i32, i32) {
    %c0_i32 = arith.constant 0 : i32
    %c0_i32_0 = arith.constant 0 : i32
    %c0_i32_1 = arith.constant 0 : i32
    return %c0_i32, %c0_i32_0 : i32, i32
  }
  func.func @transform_12(%arg0: i32) -> (i32, i32) {
    %c0_i32 = arith.constant 0 : i32
    %c0_i32_0 = arith.constant 0 : i32
    return %arg0, %c0_i32 : i32, i32
  }
}

</mosaic_0001>

<llo_original>
// kernel: tpu_custom_call.1
$region0: #{tpu_custom_call.1}
  #allocation0 [shape = 'u32[]', space=smem, size = 0x4, offset = 0x4, fixed_abs, tag = 'smem constant byte address 0x4 - core index']
  #allocation1 [shape = 'u32[144,128]{1,0:T(1,128)}', space=vmem, size = 0x12000, scoped, tag = 'internal scratch']
  %s0 = inlined_call_operand.vmem [shape: f32[16,8,8], index: 0, kind: input, shape index: {}]
  %s1 = inlined_call_operand.vmem [shape: f32[16,8,16], index: 1, kind: input, shape index: {}]
  %s2 = inlined_call_operand.vmem [shape: f32[16,512], index: 2, kind: input, shape index: {}]
  %s3 = inlined_call_operand.vmem [shape: f32[1,512], index: 3, kind: input, shape index: {}]
  %s4 = inlined_call_operand.hbm [shape: bf16[512,512], index: 4, kind: input, shape index: {}]
  %s5 = inlined_call_operand.vmem [shape: f32[1,512], index: 5, kind: input, shape index: {}]
  %s6 = inlined_call_operand.vmem [shape: bf16[512,32], index: 6, kind: input, shape index: {}]
  %s7 = inlined_call_operand.vmem [shape: f32[1,32], index: 7, kind: input, shape index: {}]
  %s8 = inlined_call_operand.vmem [shape: f32[32,32], index: 8, kind: input, shape index: {}]
  %s9 = inlined_call_operand.vmem [shape: f32[1,32], index: 9, kind: input, shape index: {}]
  %s10 = inlined_call_operand.vmem [shape: f32[32,128], index: 10, kind: input, shape index: {}]
  %s11 = inlined_call_operand.vmem [shape: f32[1,128], index: 11, kind: input, shape index: {}]
  %s12 = inlined_call_operand.hbm [shape: f32[16,128], index: 12, kind: output, shape index: {}]
  %s13 = sld [smem:[#allocation0]]
  $region85: #{tpu_custom_call.1} parent=0
    _
  %s15 = ssub.s32 1, %s13
  %s16 = scalar_select 0, %s15, %s13
  $region1: #{tpu_custom_call.1} parent=0
    #allocation2 [shape = 'u8[524288]{0}', space=vmem, size = 0x80000, scoped, tag = 'input window, operand 4, single buffered']
    #allocation3 [shape = 's32[2]{0}', space=sflag, size = 0x8, scoped, tag = 'scoped memory for tpu_custom_call.1']
    #allocation4 [shape = 's32[2]{0}', space=sflag, size = 0x8, scoped, tag = 'scoped memory for tpu_custom_call.1']
    #allocation5 [shape = 'u8[8192]{0}', space=vmem, size = 0x2000, scoped, tag = 'output window, operand 0']
    %17 = vsyncpa [#allocation3], 0
    %18 = vsyncpa [#allocation4], 0
    %s19 = scalar_lea.sflag [#allocation4], 1
    %20 = vsyncpa %s19, 0
    loop: start=0, step=1, limit=4
    $region2: #{tpu_custom_call.1} parent=1 // loop_pre_header
      _
    $region3: #{tpu_custom_call.1} parent=1 // loop_header
      %s22 = sphi 0, %s26
      %p23 = scmp.ge.s32.totalorder %s22, 4
      %s32 = sphi 0, %s34
      %s35 = sphi 0, %s32
      %s36 = sphi 0, %s35
      %s52 = sphi 0, %s36
      %s58 = sphi 0, %s60
      %s61 = sphi 0, %s58
      %s62 = sphi 0, %s61
      %s78 = sphi 0, %s62
      %s82 = sphi 0, %s82
      %s84 = sphi 0, %s82
      %s85 = sphi 0, %s84
      %s99 = sphi 0, %s85
      %s103 = sphi 0, %s103
      %s105 = sphi 0, %s103
      %s106 = sphi 0, %s105
      %s120 = sphi 0, %s106
      %s124 = sphi 0, %s124
      %s126 = sphi 0, %s124
      %s127 = sphi 0, %s126
      %s141 = sphi 0, %s127
      %s145 = sphi 0, %s145
      %s147 = sphi 0, %s145
      %s148 = sphi 0, %s147
      %s162 = sphi 0, %s148
      %s166 = sphi 0, %s166
      %s168 = sphi 0, %s166
      %s169 = sphi 0, %s168
      %s183 = sphi 0, %s169
      %s187 = sphi 0, %s187
      %s189 = sphi 0, %s187
      %s190 = sphi 0, %s189
      %s204 = sphi 0, %s190
      %s208 = sphi 0, %s208
      %s210 = sphi 0, %s208
      %s211 = sphi 0, %s210
      %s225 = sphi 0, %s211
      %s229 = sphi 0, %s229
      %s231 = sphi 0, %s229
      %s232 = sphi 0, %s231
      %s246 = sphi 0, %s232
      %s250 = sphi 0, %s250
      %s252 = sphi 0, %s250
      %s253 = sphi 0, %s252
      %s267 = sphi 0, %s253
      %s271 = sphi 0, %s271
      %s273 = sphi 0, %s271
      %s274 = sphi 0, %s273
      %s288 = sphi 0, %s274
      %s294 = sphi 0, %s296
      %s297 = sphi 0, %s294
      %s298 = sphi 0, %s297
      %s314 = sphi 0, %s298
    $region4: #{tpu_custom_call.1} parent=1 // loop_header_branch
      %25 = sbr.rel (%p23) target = $region8
    $region5: #{tpu_custom_call.1} parent=1 // loop_body
      %s27 = ssub.s32 %s22, 1
      %s28 = ssub.s32 %s22, 2
      %s29 = sadd.s32 %s22, 1
      %s30 = ssub.s32 %s22, %s29
      %p31 = scmp.eq.s32.totalorder %s30, 0
      %s33 = sadd.s32 %s32, 1
      %s34 = scalar_select %p31, %s32, %s33
      %p37 = pneg %p31
      %p38 = scmp.eq.s32.totalorder %s22, 1
      %p39 = por %p37, %p38
      %p40 = scmp.ne.s32.totalorder %s32, %s35
      %p41 = scmp.eq.s32.totalorder %s22, 0
      %p42 = por %p40, %p41
      %p43 = scmp.ne.s32.totalorder %s32, %s35
      %p44 = scmp.eq.s32.totalorder %s27, 1
      %p45 = por %p43, %p44
      %p46 = scmp.ne.s32.totalorder %s35, %s36
      %p47 = scmp.eq.s32.totalorder %s27, 0
      %p48 = por %p46, %p47
      %p49 = scmp.ne.s32.totalorder %s35, %s36
      %p50 = scmp.eq.s32.totalorder %s28, 1
      %p51 = por %p49, %p50
      %p53 = scmp.ne.s32.totalorder %s36, %s52
      %p54 = scmp.eq.s32.totalorder %s28, 0
      %p55 = por %p53, %p54
      %s56 = ssub.s32 %s22, %s29
      %p57 = scmp.eq.s32.totalorder %s56, 0
      %s59 = sadd.s32 %s58, 1
      %s60 = scalar_select %p57, %s58, %s59
      %p63 = pneg %p57
      %p64 = scmp.eq.s32.totalorder %s22, 1
      %p65 = por %p63, %p64
      %p66 = scmp.ne.s32.totalorder %s58, %s61
      %p67 = scmp.eq.s32.totalorder %s22, 0
      %p68 = por %p66, %p67
      %p69 = scmp.ne.s32.totalorder %s58, %s61
      %p70 = scmp.eq.s32.totalorder %s27, 1
      %p71 = por %p69, %p70
      %p72 = scmp.ne.s32.totalorder %s61, %s62
      %p73 = scmp.eq.s32.totalorder %s27, 0
      %p74 = por %p72, %p73
      %p75 = scmp.ne.s32.totalorder %s61, %s62
      %p76 = scmp.eq.s32.totalorder %s28, 1
      %p77 = por %p75, %p76
      %p79 = scmp.ne.s32.totalorder %s62, %s78
      %p80 = scmp.eq.s32.totalorder %s28, 0
      %p81 = por %p79, %p80
      %s83 = sadd.s32 %s82, 1
      %p86 = scmp.eq.s32.totalorder %s22, 1
      %p87 = scmp.ne.s32.totalorder %s82, %s84
      %p88 = scmp.eq.s32.totalorder %s22, 0
      %p89 = por %p87, %p88
      %p90 = scmp.ne.s32.totalorder %s82, %s84
      %p91 = scmp.eq.s32.totalorder %s27, 1
      %p92 = por %p90, %p91
      %p93 = scmp.ne.s32.totalorder %s84, %s85
      %p94 = scmp.eq.s32.totalorder %s27, 0
      %p95 = por %p93, %p94
      %p96 = scmp.ne.s32.totalorder %s84, %s85
      %p97 = scmp.eq.s32.totalorder %s28, 1
      %p98 = por %p96, %p97
      %p100 = scmp.ne.s32.totalorder %s85, %s99
      %p101 = scmp.eq.s32.totalorder %s28, 0
      %p102 = por %p100, %p101
      %s104 = sadd.s32 %s103, 1
      %p107 = scmp.eq.s32.totalorder %s22, 1
      %p108 = scmp.ne.s32.totalorder %s103, %s105
      %p109 = scmp.eq.s32.totalorder %s22, 0
      %p110 = por %p108, %p109
      %p111 = scmp.ne.s32.totalorder %s103, %s105
      %p112 = scmp.eq.s32.totalorder %s27, 1
      %p113 = por %p111, %p112
      %p114 = scmp.ne.s32.totalorder %s105, %s106
      %p115 = scmp.eq.s32.totalorder %s27, 0
      %p116 = por %p114, %p115
      %p117 = scmp.ne.s32.totalorder %s105, %s106
      %p118 = scmp.eq.s32.totalorder %s28, 1
      %p119 = por %p117, %p118
      %p121 = scmp.ne.s32.totalorder %s106, %s120
      %p122 = scmp.eq.s32.totalorder %s28, 0
      %p123 = por %p121, %p122
      %s125 = sadd.s32 %s124, 1
      %p128 = scmp.eq.s32.totalorder %s22, 1
      %p129 = scmp.ne.s32.totalorder %s124, %s126
      %p130 = scmp.eq.s32.totalorder %s22, 0
      %p131 = por %p129, %p130
      %p132 = scmp.ne.s32.totalorder %s124, %s126
      %p133 = scmp.eq.s32.totalorder %s27, 1
      %p134 = por %p132, %p133
      %p135 = scmp.ne.s32.totalorder %s126, %s127
      %p136 = scmp.eq.s32.totalorder %s27, 0
      %p137 = por %p135, %p136
      %p138 = scmp.ne.s32.totalorder %s126, %s127
      %p139 = scmp.eq.s32.totalorder %s28, 1
      %p140 = por %p138, %p139
      %p142 = scmp.ne.s32.totalorder %s127, %s141
      %p143 = scmp.eq.s32.totalorder %s28, 0
      %p144 = por %p142, %p143
      %s146 = sadd.s32 %s145, 1
      %p149 = scmp.eq.s32.totalorder %s22, 1
      %p150 = scmp.ne.s32.totalorder %s145, %s147
      %p151 = scmp.eq.s32.totalorder %s22, 0
      %p152 = por %p150, %p151
      %p153 = scmp.ne.s32.totalorder %s145, %s147
      %p154 = scmp.eq.s32.totalorder %s27, 1
      %p155 = por %p153, %p154
      %p156 = scmp.ne.s32.totalorder %s147, %s148
      %p157 = scmp.eq.s32.totalorder %s27, 0
      %p158 = por %p156, %p157
      %p159 = scmp.ne.s32.totalorder %s147, %s148
      %p160 = scmp.eq.s32.totalorder %s28, 1
      %p161 = por %p159, %p160
      %p163 = scmp.ne.s32.totalorder %s148, %s162
      %p164 = scmp.eq.s32.totalorder %s28, 0
      %p165 = por %p163, %p164
      %s167 = sadd.s32 %s166, 1
      %p170 = scmp.eq.s32.totalorder %s22, 1
      %p171 = scmp.ne.s32.totalorder %s166, %s168
      %p172 = scmp.eq.s32.totalorder %s22, 0
      %p173 = por %p171, %p172
      %p174 = scmp.ne.s32.totalorder %s166, %s168
      %p175 = scmp.eq.s32.totalorder %s27, 1
      %p176 = por %p174, %p175
      %p177 = scmp.ne.s32.totalorder %s168, %s169
      %p178 = scmp.eq.s32.totalorder %s27, 0
      %p179 = por %p177, %p178
      %p180 = scmp.ne.s32.totalorder %s168, %s169
      %p181 = scmp.eq.s32.totalorder %s28, 1
      %p182 = por %p180, %p181
      %p184 = scmp.ne.s32.totalorder %s169, %s183
      %p185 = scmp.eq.s32.totalorder %s28, 0
      %p186 = por %p184, %p185
      %s188 = sadd.s32 %s187, 1
      %p191 = scmp.eq.s32.totalorder %s22, 1
      %p192 = scmp.ne.s32.totalorder %s187, %s189
      %p193 = scmp.eq.s32.totalorder %s22, 0
      %p194 = por %p192, %p193
      %p195 = scmp.ne.s32.totalorder %s187, %s189
      %p196 = scmp.eq.s32.totalorder %s27, 1
      %p197 = por %p195, %p196
      %p198 = scmp.ne.s32.totalorder %s189, %s190
      %p199 = scmp.eq.s32.totalorder %s27, 0
      %p200 = por %p198, %p199
      %p201 = scmp.ne.s32.totalorder %s189, %s190
      %p202 = scmp.eq.s32.totalorder %s28, 1
      %p203 = por %p201, %p202
      %p205 = scmp.ne.s32.totalorder %s190, %s204
      %p206 = scmp.eq.s32.totalorder %s28, 0
      %p207 = por %p205, %p206
      %s209 = sadd.s32 %s208, 1
      %p212 = scmp.eq.s32.totalorder %s22, 1
      %p213 = scmp.ne.s32.totalorder %s208, %s210
      %p214 = scmp.eq.s32.totalorder %s22, 0
      %p215 = por %p213, %p214
      %p216 = scmp.ne.s32.totalorder %s208, %s210
      %p217 = scmp.eq.s32.totalorder %s27, 1
      %p218 = por %p216, %p217
      %p219 = scmp.ne.s32.totalorder %s210, %s211
      %p220 = scmp.eq.s32.totalorder %s27, 0
      %p221 = por %p219, %p220
      %p222 = scmp.ne.s32.totalorder %s210, %s211
      %p223 = scmp.eq.s32.totalorder %s28, 1
      %p224 = por %p222, %p223
      %p226 = scmp.ne.s32.totalorder %s211, %s225
      %p227 = scmp.eq.s32.totalorder %s28, 0
      %p228 = por %p226, %p227
      %s230 = sadd.s32 %s229, 1
      %p233 = scmp.eq.s32.totalorder %s22, 1
      %p234 = scmp.ne.s32.totalorder %s229, %s231
      %p235 = scmp.eq.s32.totalorder %s22, 0
      %p236 = por %p234, %p235
      %p237 = scmp.ne.s32.totalorder %s229, %s231
      %p238 = scmp.eq.s32.totalorder %s27, 1
      %p239 = por %p237, %p238
      %p240 = scmp.ne.s32.totalorder %s231, %s232
      %p241 = scmp.eq.s32.totalorder %s27, 0
      %p242 = por %p240, %p241
      %p243 = scmp.ne.s32.totalorder %s231, %s232
      %p244 = scmp.eq.s32.totalorder %s28, 1
      %p245 = por %p243, %p244
      %p247 = scmp.ne.s32.totalorder %s232, %s246
      %p248 = scmp.eq.s32.totalorder %s28, 0
      %p249 = por %p247, %p248
      %s251 = sadd.s32 %s250, 1
      %p254 = scmp.eq.s32.totalorder %s22, 1
      %p255 = scmp.ne.s32.totalorder %s250, %s252
      %p256 = scmp.eq.s32.totalorder %s22, 0
      %p257 = por %p255, %p256
      %p258 = scmp.ne.s32.totalorder %s250, %s252
      %p259 = scmp.eq.s32.totalorder %s27, 1
      %p260 = por %p258, %p259
      %p261 = scmp.ne.s32.totalorder %s252, %s253
      %p262 = scmp.eq.s32.totalorder %s27, 0
      %p263 = por %p261, %p262
      %p264 = scmp.ne.s32.totalorder %s252, %s253
      %p265 = scmp.eq.s32.totalorder %s28, 1
      %p266 = por %p264, %p265
      %p268 = scmp.ne.s32.totalorder %s253, %s267
      %p269 = scmp.eq.s32.totalorder %s28, 0
      %p270 = por %p268, %p269
      %s272 = sadd.s32 %s271, 1
      %p275 = scmp.eq.s32.totalorder %s22, 1
      %p276 = scmp.ne.s32.totalorder %s271, %s273
      %p277 = scmp.eq.s32.totalorder %s22, 0
      %p278 = por %p276, %p277
      %p279 = scmp.ne.s32.totalorder %s271, %s273
      %p280 = scmp.eq.s32.totalorder %s27, 1
      %p281 = por %p279, %p280
      %p282 = scmp.ne.s32.totalorder %s273, %s274
      %p283 = scmp.eq.s32.totalorder %s27, 0
      %p284 = por %p282, %p283
      %p285 = scmp.ne.s32.totalorder %s273, %s274
      %p286 = scmp.eq.s32.totalorder %s28, 1
      %p287 = por %p285, %p286
      %p289 = scmp.ne.s32.totalorder %s274, %s288
      %p290 = scmp.eq.s32.totalorder %s28, 0
      %p291 = por %p289, %p290
      %s292 = ssub.s32 %s22, %s29
      %p293 = scmp.eq.s32.totalorder %s292, 0
      %s295 = sadd.s32 %s294, 1
      %s296 = scalar_select %p293, %s294, %s295
      %p299 = pneg %p293
      %p300 = scmp.eq.s32.totalorder %s22, 1
      %p301 = por %p299, %p300
      %p302 = scmp.ne.s32.totalorder %s294, %s297
      %p303 = scmp.eq.s32.totalorder %s22, 0
      %p304 = por %p302, %p303
      %p305 = scmp.ne.s32.totalorder %s294, %s297
      %p306 = scmp.eq.s32.totalorder %s27, 1
      %p307 = por %p305, %p306
      %p308 = scmp.ne.s32.totalorder %s297, %s298
      %p309 = scmp.eq.s32.totalorder %s27, 0
      %p310 = por %p308, %p309
      %p311 = scmp.ne.s32.totalorder %s297, %s298
      %p312 = scmp.eq.s32.totalorder %s28, 1
      %p313 = por %p311, %p312
      %p315 = scmp.ne.s32.totalorder %s298, %s314
      %p316 = scmp.eq.s32.totalorder %s28, 0
      %p317 = por %p315, %p316
      %p318 = scmp.le.s32.totalorder 1, %s22
      %p319 = scmp.lt.s32.totalorder %s22, 3
      %p320 = pnand %p318, %p319
      %p321 = pneg %p320
      // Predicated region
      $region9: #{tpu_custom_call.1} parent=5 // pred_check
        _
      $region10: #{tpu_custom_call.1} parent=5 // pred_check_branch
        %323 = sbr.rel (%p320) target = $region12
      $region11: #{tpu_custom_call.1} parent=5 // pred_region
        %s324 = ssub.s32 %s22, 1
        // Predicated region
        $region13: #{tpu_custom_call.1} parent=11 // pred_check
          %p325 = pneg %p95
        $region14: #{tpu_custom_call.1} parent=11 // pred_check_branch
          %327 = sbr.rel (%p325) target = $region16
        $region15: #{tpu_custom_call.1} parent=11 // pred_region
          _
        $region16: #{tpu_custom_call.1} parent=11 // pred_fallthru
          _
        // Predicated region
        $region17: #{tpu_custom_call.1} parent=11 // pred_check
          %p328 = pneg %p116
        $region18: #{tpu_custom_call.1} parent=11 // pred_check_branch
          %330 = sbr.rel (%p328) target = $region20
        $region19: #{tpu_custom_call.1} parent=11 // pred_region
          _
        $region20: #{tpu_custom_call.1} parent=11 // pred_fallthru
          _
        // Predicated region
        $region21: #{tpu_custom_call.1} parent=11 // pred_check
          %p331 = pneg %p137
        $region22: #{tpu_custom_call.1} parent=11 // pred_check_branch
          %333 = sbr.rel (%p331) target = $region24
        $region23: #{tpu_custom_call.1} parent=11 // pred_region
          %s335 = ssub.s32 16384, 16384
          %336 = vsyncadd [#allocation3], %s335
          %s337 = sshll.u32 [#allocation2], 4
          %s338 = int_to_ptr.vmem [resolvable:$true] %s337
          %343 = dma.hbm_to_vmem [thread:$0]  %s4, 16384, %s338, [#allocation3], 256, 256, 16
        $region24: #{tpu_custom_call.1} parent=11 // pred_fallthru
          _
        // Predicated region
        $region25: #{tpu_custom_call.1} parent=11 // pred_check
          %p344 = pneg %p158
        $region26: #{tpu_custom_call.1} parent=11 // pred_check_branch
          %346 = sbr.rel (%p344) target = $region28
        $region27: #{tpu_custom_call.1} parent=11 // pred_region
          _
        $region28: #{tpu_custom_call.1} parent=11 // pred_fallthru
          _
        // Predicated region
        $region29: #{tpu_custom_call.1} parent=11 // pred_check
          %p347 = pneg %p179
        $region30: #{tpu_custom_call.1} parent=11 // pred_check_branch
          %349 = sbr.rel (%p347) target = $region32
        $region31: #{tpu_custom_call.1} parent=11 // pred_region
          _
        $region32: #{tpu_custom_call.1} parent=11 // pred_fallthru
          _
        // Predicated region
        $region33: #{tpu_custom_call.1} parent=11 // pred_check
          %p350 = pneg %p200
        $region34: #{tpu_custom_call.1} parent=11 // pred_check_branch
          %352 = sbr.rel (%p350) target = $region36
        $region35: #{tpu_custom_call.1} parent=11 // pred_region
          _
        $region36: #{tpu_custom_call.1} parent=11 // pred_fallthru
          _
        // Predicated region
        $region37: #{tpu_custom_call.1} parent=11 // pred_check
          %p353 = pneg %p221
        $region38: #{tpu_custom_call.1} parent=11 // pred_check_branch
          %355 = sbr.rel (%p353) target = $region40
        $region39: #{tpu_custom_call.1} parent=11 // pred_region
          _
        $region40: #{tpu_custom_call.1} parent=11 // pred_fallthru
          _
        // Predicated region
        $region41: #{tpu_custom_call.1} parent=11 // pred_check
          %p356 = pneg %p242
        $region42: #{tpu_custom_call.1} parent=11 // pred_check_branch
          %358 = sbr.rel (%p356) target = $region44
        $region43: #{tpu_custom_call.1} parent=11 // pred_region
          _
        $region44: #{tpu_custom_call.1} parent=11 // pred_fallthru
          _
        // Predicated region
        $region45: #{tpu_custom_call.1} parent=11 // pred_check
          %p359 = pneg %p263
        $region46: #{tpu_custom_call.1} parent=11 // pred_check_branch
          %361 = sbr.rel (%p359) target = $region48
        $region47: #{tpu_custom_call.1} parent=11 // pred_region
          _
        $region48: #{tpu_custom_call.1} parent=11 // pred_fallthru
          _
        // Predicated region
        $region49: #{tpu_custom_call.1} parent=11 // pred_check
          %p362 = pneg %p284
        $region50: #{tpu_custom_call.1} parent=11 // pred_check_branch
          %364 = sbr.rel (%p362) target = $region52
        $region51: #{tpu_custom_call.1} parent=11 // pred_region
          _
        $region52: #{tpu_custom_call.1} parent=11 // pred_fallthru
          _
      $region12: #{tpu_custom_call.1} parent=5 // pred_fallthru
        _
      %p365 = scmp.lt.s32.totalorder %s22, 2
      // Predicated region
      $region53: #{tpu_custom_call.1} parent=5 // pred_check
        %p366 = pneg %p365
      $region54: #{tpu_custom_call.1} parent=5 // pred_check_branch
        %368 = sbr.rel (%p366) target = $region56
      $region55: #{tpu_custom_call.1} parent=5 // pred_region
        // Predicated region
        $region57: #{tpu_custom_call.1} parent=55 // pred_check
          %p369 = pneg %p42
        $region58: #{tpu_custom_call.1} parent=55 // pred_check_branch
          %371 = sbr.rel (%p369) target = $region60
        $region59: #{tpu_custom_call.1} parent=55 // pred_region
          %s372 = smul.u32 8, %s22
          %p373 = scmp.lt.s32.totalorder %s372, 15
          %s374 = scalar_select %p373, %s372, 15
          %s375 = smul.addr %s374, 8
          %s376 = scalar_lea.vmem %s0, %s375
          %s377 = smul.u32 8, %s22
        $region60: #{tpu_custom_call.1} parent=55 // pred_fallthru
          _
        // Predicated region
        $region61: #{tpu_custom_call.1} parent=55 // pred_check
          %p378 = pneg %p68
        $region62: #{tpu_custom_call.1} parent=55 // pred_check_branch
          %380 = sbr.rel (%p378) target = $region64
        $region63: #{tpu_custom_call.1} parent=55 // pred_region
          %s381 = smul.u32 8, %s22
          %p382 = scmp.lt.s32.totalorder %s381, 15
          %s383 = scalar_select %p382, %s381, 15
          %s384 = smul.addr %s383, 8
          %s385 = scalar_lea.vmem %s1, %s384
          %s386 = smul.u32 8, %s22
        $region64: #{tpu_custom_call.1} parent=55 // pred_fallthru
          _
      $region56: #{tpu_custom_call.1} parent=5 // pred_fallthru
        _
      %p387 = scmp.le.s32.totalorder 1, %s22
      %p388 = scmp.lt.s32.totalorder %s22, 3
      %p389 = pnand %p387, %p388
      %p390 = pneg %p389
      // Predicated region
      $region65: #{tpu_custom_call.1} parent=5 // pred_check
        _
      $region66: #{tpu_custom_call.1} parent=5 // pred_check_branch
        %392 = sbr.rel (%p389) target = $region68
      $region67: #{tpu_custom_call.1} parent=5 // pred_region
        %s393 = ssub.s32 %s22, 1
        // Predicated region
        $region69: #{tpu_custom_call.1} parent=67 // pred_check
          %p394 = pneg %p137
        $region70: #{tpu_custom_call.1} parent=67 // pred_check_branch
          %396 = sbr.rel (%p394) target = $region72
        $region71: #{tpu_custom_call.1} parent=67 // pred_region
          %397 = dma.done [#allocation3], 16384
        $region72: #{tpu_custom_call.1} parent=67 // pred_fallthru
          _
        %s398 = smul.u32 8, %s27
        %p399 = scmp.lt.s32.totalorder %s398, 15
        %s400 = scalar_select %p399, %s398, 15
        %s401 = smul.addr %s400, 8
        %s402 = scalar_lea.vmem %s0, %s401
        %p403 = pneg %p48
        %p404 = pneg %p45
        %s405 = smul.u32 8, %s27
        %p406 = scmp.lt.s32.totalorder %s405, 15
        %s407 = scalar_select %p406, %s405, 15
        %s408 = smul.addr %s407, 8
        %s409 = scalar_lea.vmem %s1, %s408
        %p410 = pneg %p74
        %p411 = pneg %p71
        %p412 = pneg %p95
        %p413 = pneg %p92
        %p414 = pneg %p116
        %p415 = pneg %p113
        %p416 = pneg %p137
        %p417 = pneg %p134
        %p418 = pneg %p158
        %p419 = pneg %p155
        %p420 = pneg %p179
        %p421 = pneg %p176
        %p422 = pneg %p200
        %p423 = pneg %p197
        %p424 = pneg %p221
        %p425 = pneg %p218
        %p426 = pneg %p242
        %p427 = pneg %p239
        %p428 = pneg %p263
        %p429 = pneg %p260
        %p430 = pneg %p284
        %p431 = pneg %p281
        %p432 = pneg %p310
        %p433 = pneg %p307
        %s434 = sand.u32 %s297, 1
        %s435 = scalar_lea.sflag [#allocation4], %s434
        %s436 = sand.u32 %s297, 1
        %s437 = smul.addr %s436, 8
        %s438 = scalar_lea.vmem [#allocation5], %s437
        %s439 = smul.u32 8, %s27
        %p440 = scmp.lt.s32.totalorder %s439, 15
        %s441 = scalar_select %p440, %s439, 15
        %s442 = smul.addr %s441, 8
        %s443 = scalar_lea.vmem %s0, %s442
        %s444 = smul.u32 8, %s27
        %s445 = smul.u32 8, %s27
        %p446 = scmp.lt.s32.totalorder %s445, 15
        %s447 = scalar_select %p446, %s445, 15
        %s448 = smul.addr %s447, 8
        %s449 = scalar_lea.vmem %s1, %s448
        %s450 = smul.u32 8, %s27
        %v452 = vld [vmem:[%s443] sm:$0xff]
        %v453 = vld [vmem:[%s443 + $0x8] sm:$0xff]
        %v454 = vld [vmem:[%s443 + $0x10] sm:$0xff]
        %v455 = vld [vmem:[%s443 + $0x18] sm:$0xff]
        %v456 = vld [vmem:[%s443 + $0x20] sm:$0xff]
        %v457 = vld [vmem:[%s443 + $0x28] sm:$0xff]
        %v458 = vld [vmem:[%s443 + $0x30] sm:$0xff]
        %v459 = vld [vmem:[%s443 + $0x38] sm:$0xff]
        %v460 = vld [vmem:[%s449] sm:$0xff]
        %v461 = vld [vmem:[%s449 + $0x8] sm:$0xff]
        %v462 = vld [vmem:[%s449 + $0x10] sm:$0xff]
        %v463 = vld [vmem:[%s449 + $0x18] sm:$0xff]
        %v464 = vld [vmem:[%s449 + $0x20] sm:$0xff]
        %v465 = vld [vmem:[%s449 + $0x28] sm:$0xff]
        %v466 = vld [vmem:[%s449 + $0x30] sm:$0xff]
        %v467 = vld [vmem:[%s449 + $0x38] sm:$0xff]
        %v468 = vlaneseq
        %v469 = vshrl.u32 %v468, 7
        %v470 = vlaneseq
        %v471 = vand.u32 %v470, 127
        %vm472 = vcmp.eq.s32.totalorder %v469, %v471
        %v473 = vsel %vm472, 1.0, 0.0
        %v474 = vadd.f32 %v452, %v473
        %v475 = vadd.f32 %v453, %v473
        %v476 = vadd.f32 %v454, %v473
        %v477 = vadd.f32 %v455, %v473
        %v478 = vadd.f32 %v456, %v473
        %v479 = vadd.f32 %v457, %v473
        %v480 = vadd.f32 %v458, %v473
        %v481 = vadd.f32 %v459, %v473
        %vm482 = vcmask 64512
        %v483 = vsel %vm482, %v474, 0.0
        %484 = vadd.xlane.f32.xlu0 %v483
        %v485 = vpop.xlane.xlu0 %484
        %v486 = vsel %vm482, %v475, 0.0
        %487 = vadd.xlane.f32.xlu0 %v486
        %v488 = vpop.xlane.xlu0 %487
        %v489 = vsel %vm482, %v476, 0.0
        %490 = vadd.xlane.f32.xlu0 %v489
        %v491 = vpop.xlane.xlu0 %490
        %v492 = vsel %vm482, %v477, 0.0
        %493 = vadd.xlane.f32.xlu0 %v492
        %v494 = vpop.xlane.xlu0 %493
        %v495 = vsel %vm482, %v478, 0.0
        %496 = vadd.xlane.f32.xlu0 %v495
        %v497 = vpop.xlane.xlu0 %496
        %v498 = vsel %vm482, %v479, 0.0
        %499 = vadd.xlane.f32.xlu0 %v498
        %v500 = vpop.xlane.xlu0 %499
        %v501 = vsel %vm482, %v480, 0.0
        %502 = vadd.xlane.f32.xlu0 %v501
        %v503 = vpop.xlane.xlu0 %502
        %v504 = vsel %vm482, %v481, 0.0
        %505 = vadd.xlane.f32.xlu0 %v504
        %v506 = vpop.xlane.xlu0 %505
        %v507 = vrsqrt.pop %v485
        %v508 = vrsqrt.pop %v488
        %v509 = vrsqrt.pop %v491
        %v510 = vrsqrt.pop %v494
        %v511 = vrsqrt.pop %v497
        %v512 = vrsqrt.pop %v500
        %v513 = vrsqrt.pop %v503
        %v514 = vrsqrt.pop %v506
        %v515 = vmul.f32 %v507, %v460
        %v516 = vmul.f32 %v508, %v461
        %v517 = vmul.f32 %v509, %v462
        %v518 = vmul.f32 %v510, %v463
        %v519 = vmul.f32 %v511, %v464
        %v520 = vmul.f32 %v512, %v465
        %v521 = vmul.f32 %v513, %v466
        %v522 = vmul.f32 %v514, %v467
        %524 = vset.pattern.permute.xlu0 0
        %525 = vperm.xlu0 %524, %v474
        %v526 = vpop.permute.xlu0 %525
        %529 = vset.pattern.permute.xlu0 0
        %530 = vperm.xlu0 %529, %v475
        %v531 = vpop.permute.xlu0 %530
        %534 = vset.pattern.permute.xlu0 0
        %535 = vperm.xlu0 %534, %v476
        %v536 = vpop.permute.xlu0 %535
        %539 = vset.pattern.permute.xlu0 0
        %540 = vperm.xlu0 %539, %v477
        %v541 = vpop.permute.xlu0 %540
        %544 = vset.pattern.permute.xlu0 0
        %545 = vperm.xlu0 %544, %v478
        %v546 = vpop.permute.xlu0 %545
        %549 = vset.pattern.permute.xlu0 0
        %550 = vperm.xlu0 %549, %v479
        %v551 = vpop.permute.xlu0 %550
        %554 = vset.pattern.permute.xlu0 0
        %555 = vperm.xlu0 %554, %v480
        %v556 = vpop.permute.xlu0 %555
        %559 = vset.pattern.permute.xlu0 0
        %560 = vperm.xlu0 %559, %v481
        %v561 = vpop.permute.xlu0 %560
        %v563 = vlaneseq
        %v564 = vshrl.u32 %v563, 7
        %v565 = vsub.s32 0, %v564
        %v566 = vrot.slane %v515, %v565
        %v567 = vlaneseq
        %v568 = vshrl.u32 %v567, 7
        %v569 = vsub.s32 0, %v568
        %v570 = vrot.slane %v516, %v569
        %v571 = vlaneseq
        %v572 = vshrl.u32 %v571, 7
        %v573 = vsub.s32 0, %v572
        %v574 = vrot.slane %v517, %v573
        %v575 = vlaneseq
        %v576 = vshrl.u32 %v575, 7
        %v577 = vsub.s32 0, %v576
        %v578 = vrot.slane %v518, %v577
        %v579 = vlaneseq
        %v580 = vshrl.u32 %v579, 7
        %v581 = vsub.s32 0, %v580
        %v582 = vrot.slane %v519, %v581
        %v583 = vlaneseq
        %v584 = vshrl.u32 %v583, 7
        %v585 = vsub.s32 0, %v584
        %v586 = vrot.slane %v520, %v585
        %v587 = vlaneseq
        %v588 = vshrl.u32 %v587, 7
        %v589 = vsub.s32 0, %v588
        %v590 = vrot.slane %v521, %v589
        %v591 = vlaneseq
        %v592 = vshrl.u32 %v591, 7
        %v593 = vsub.s32 0, %v592
        %v594 = vrot.slane %v522, %v593
        %v595 = vmul.f32 %v526, %v566
        %v596 = vmul.f32 %v531, %v570
        %v597 = vmul.f32 %v536, %v574
        %v598 = vmul.f32 %v541, %v578
        %v599 = vmul.f32 %v546, %v582
        %v600 = vmul.f32 %v551, %v586
        %v601 = vmul.f32 %v556, %v590
        %v602 = vmul.f32 %v561, %v594
        %603 = vset.pattern.permute.xlu0 1
        %604 = vperm.xlu0 %603, %v474
        %v605 = vpop.permute.xlu0 %604
        %607 = vset.pattern.permute.xlu0 1
        %608 = vperm.xlu0 %607, %v475
        %v609 = vpop.permute.xlu0 %608
        %611 = vset.pattern.permute.xlu0 1
        %612 = vperm.xlu0 %611, %v476
        %v613 = vpop.permute.xlu0 %612
        %615 = vset.pattern.permute.xlu0 1
        %616 = vperm.xlu0 %615, %v477
        %v617 = vpop.permute.xlu0 %616
        %619 = vset.pattern.permute.xlu0 1
        %620 = vperm.xlu0 %619, %v478
        %v621 = vpop.permute.xlu0 %620
        %623 = vset.pattern.permute.xlu0 1
        %624 = vperm.xlu0 %623, %v479
        %v625 = vpop.permute.xlu0 %624
        %627 = vset.pattern.permute.xlu0 1
        %628 = vperm.xlu0 %627, %v480
        %v629 = vpop.permute.xlu0 %628
        %631 = vset.pattern.permute.xlu0 1
        %632 = vperm.xlu0 %631, %v481
        %v633 = vpop.permute.xlu0 %632
        %v635 = vlaneseq
        %v636 = vshrl.u32 %v635, 7
        %v637 = vsub.s32 1, %v636
        %v638 = vrot.slane %v515, %v637
        %v639 = vlaneseq
        %v640 = vshrl.u32 %v639, 7
        %v641 = vsub.s32 1, %v640
        %v642 = vrot.slane %v516, %v641
        %v643 = vlaneseq
        %v644 = vshrl.u32 %v643, 7
        %v645 = vsub.s32 1, %v644
        %v646 = vrot.slane %v517, %v645
        %v647 = vlaneseq
        %v648 = vshrl.u32 %v647, 7
        %v649 = vsub.s32 1, %v648
        %v650 = vrot.slane %v518, %v649
        %v651 = vlaneseq
        %v652 = vshrl.u32 %v651, 7
        %v653 = vsub.s32 1, %v652
        %v654 = vrot.slane %v519, %v653
        %v655 = vlaneseq
        %v656 = vshrl.u32 %v655, 7
        %v657 = vsub.s32 1, %v656
        %v658 = vrot.slane %v520, %v657
        %v659 = vlaneseq
        %v660 = vshrl.u32 %v659, 7
        %v661 = vsub.s32 1, %v660
        %v662 = vrot.slane %v521, %v661
        %v663 = vlaneseq
        %v664 = vshrl.u32 %v663, 7
        %v665 = vsub.s32 1, %v664
        %v666 = vrot.slane %v522, %v665
        %v667 = vmul.f32 %v605, %v638
        %v668 = vmul.f32 %v609, %v642
        %v669 = vmul.f32 %v613, %v646
        %v670 = vmul.f32 %v617, %v650
        %v671 = vmul.f32 %v621, %v654
        %v672 = vmul.f32 %v625, %v658
        %v673 = vmul.f32 %v629, %v662
        %v674 = vmul.f32 %v633, %v666
        %v675 = vadd.f32 %v595, %v667
        %v676 = vadd.f32 %v596, %v668
        %v677 = vadd.f32 %v597, %v669
        %v678 = vadd.f32 %v598, %v670
        %v679 = vadd.f32 %v599, %v671
        %v680 = vadd.f32 %v600, %v672
        %v681 = vadd.f32 %v601, %v673
        %v682 = vadd.f32 %v602, %v674
        %683 = vset.pattern.permute.xlu0 2
        %684 = vperm.xlu0 %683, %v474
        %v685 = vpop.permute.xlu0 %684
        %687 = vset.pattern.permute.xlu0 2
        %688 = vperm.xlu0 %687, %v475
        %v689 = vpop.permute.xlu0 %688
        %691 = vset.pattern.permute.xlu0 2
        %692 = vperm.xlu0 %691, %v476
        %v693 = vpop.permute.xlu0 %692
        %695 = vset.pattern.permute.xlu0 2
        %696 = vperm.xlu0 %695, %v477
        %v697 = vpop.permute.xlu0 %696
        %699 = vset.pattern.permute.xlu0 2
        %700 = vperm.xlu0 %699, %v478
        %v701 = vpop.permute.xlu0 %700
        %703 = vset.pattern.permute.xlu0 2
        %704 = vperm.xlu0 %703, %v479
        %v705 = vpop.permute.xlu0 %704
        %707 = vset.pattern.permute.xlu0 2
        %708 = vperm.xlu0 %707, %v480
        %v709 = vpop.permute.xlu0 %708
        %711 = vset.pattern.permute.xlu0 2
        %712 = vperm.xlu0 %711, %v481
        %v713 = vpop.permute.xlu0 %712
        %v715 = vlaneseq
        %v716 = vshrl.u32 %v715, 7
        %v717 = vsub.s32 2, %v716
        %v718 = vrot.slane %v515, %v717
        %v719 = vlaneseq
        %v720 = vshrl.u32 %v719, 7
        %v721 = vsub.s32 2, %v720
        %v722 = vrot.slane %v516, %v721
        %v723 = vlaneseq
        %v724 = vshrl.u32 %v723, 7
        %v725 = vsub.s32 2, %v724
        %v726 = vrot.slane %v517, %v725
        %v727 = vlaneseq
        %v728 = vshrl.u32 %v727, 7
        %v729 = vsub.s32 2, %v728
        %v730 = vrot.slane %v518, %v729
        %v731 = vlaneseq
        %v732 = vshrl.u32 %v731, 7
        %v733 = vsub.s32 2, %v732
        %v734 = vrot.slane %v519, %v733
        %v735 = vlaneseq
        %v736 = vshrl.u32 %v735, 7
        %v737 = vsub.s32 2, %v736
        %v738 = vrot.slane %v520, %v737
        %v739 = vlaneseq
        %v740 = vshrl.u32 %v739, 7
        %v741 = vsub.s32 2, %v740
        %v742 = vrot.slane %v521, %v741
        %v743 = vlaneseq
        %v744 = vshrl.u32 %v743, 7
        %v745 = vsub.s32 2, %v744
        %v746 = vrot.slane %v522, %v745
        %v747 = vmul.f32 %v685, %v718
        %v748 = vmul.f32 %v689, %v722
        %v749 = vmul.f32 %v693, %v726
        %v750 = vmul.f32 %v697, %v730
        %v751 = vmul.f32 %v701, %v734
        %v752 = vmul.f32 %v705, %v738
        %v753 = vmul.f32 %v709, %v742
        %v754 = vmul.f32 %v713, %v746
        %v755 = vadd.f32 %v675, %v747
        %v756 = vadd.f32 %v676, %v748
        %v757 = vadd.f32 %v677, %v749
        %v758 = vadd.f32 %v678, %v750
        %v759 = vadd.f32 %v679, %v751
        %v760 = vadd.f32 %v680, %v752
        %v761 = vadd.f32 %v681, %v753
        %v762 = vadd.f32 %v682, %v754
        %763 = vset.pattern.permute.xlu0 3
        %764 = vperm.xlu0 %763, %v474
        %v765 = vpop.permute.xlu0 %764
        %767 = vset.pattern.permute.xlu0 3
        %768 = vperm.xlu0 %767, %v475
        %v769 = vpop.permute.xlu0 %768
        %771 = vset.pattern.permute.xlu0 3
        %772 = vperm.xlu0 %771, %v476
        %v773 = vpop.permute.xlu0 %772
        %775 = vset.pattern.permute.xlu0 3
        %776 = vperm.xlu0 %775, %v477
        %v777 = vpop.permute.xlu0 %776
        %779 = vset.pattern.permute.xlu0 3
        %780 = vperm.xlu0 %779, %v478
        %v781 = vpop.permute.xlu0 %780
        %783 = vset.pattern.permute.xlu0 3
        %784 = vperm.xlu0 %783, %v479
        %v785 = vpop.permute.xlu0 %784
        %787 = vset.pattern.permute.xlu0 3
        %788 = vperm.xlu0 %787, %v480
        %v789 = vpop.permute.xlu0 %788
        %791 = vset.pattern.permute.xlu0 3
        %792 = vperm.xlu0 %791, %v481
        %v793 = vpop.permute.xlu0 %792
        %v795 = vlaneseq
        %v796 = vshrl.u32 %v795, 7
        %v797 = vsub.s32 3, %v796
        %v798 = vrot.slane %v515, %v797
        %v799 = vlaneseq
        %v800 = vshrl.u32 %v799, 7
        %v801 = vsub.s32 3, %v800
        %v802 = vrot.slane %v516, %v801
        %v803 = vlaneseq
        %v804 = vshrl.u32 %v803, 7
        %v805 = vsub.s32 3, %v804
        %v806 = vrot.slane %v517, %v805
        %v807 = vlaneseq
        %v808 = vshrl.u32 %v807, 7
        %v809 = vsub.s32 3, %v808
        %v810 = vrot.slane %v518, %v809
        %v811 = vlaneseq
        %v812 = vshrl.u32 %v811, 7
        %v813 = vsub.s32 3, %v812
        %v814 = vrot.slane %v519, %v813
        %v815 = vlaneseq
        %v816 = vshrl.u32 %v815, 7
        %v817 = vsub.s32 3, %v816
        %v818 = vrot.slane %v520, %v817
        %v819 = vlaneseq
        %v820 = vshrl.u32 %v819, 7
        %v821 = vsub.s32 3, %v820
        %v822 = vrot.slane %v521, %v821
        %v823 = vlaneseq
        %v824 = vshrl.u32 %v823, 7
        %v825 = vsub.s32 3, %v824
        %v826 = vrot.slane %v522, %v825
        %v827 = vmul.f32 %v765, %v798
        %v828 = vmul.f32 %v769, %v802
        %v829 = vmul.f32 %v773, %v806
        %v830 = vmul.f32 %v777, %v810
        %v831 = vmul.f32 %v781, %v814
        %v832 = vmul.f32 %v785, %v818
        %v833 = vmul.f32 %v789, %v822
        %v834 = vmul.f32 %v793, %v826
        %v835 = vadd.f32 %v755, %v827
        %v836 = vadd.f32 %v756, %v828
        %v837 = vadd.f32 %v757, %v829
        %v838 = vadd.f32 %v758, %v830
        %v839 = vadd.f32 %v759, %v831
        %v840 = vadd.f32 %v760, %v832
        %v841 = vadd.f32 %v761, %v833
        %v842 = vadd.f32 %v762, %v834
        %843 = vset.pattern.permute.xlu0 4
        %844 = vperm.xlu0 %843, %v474
        %v845 = vpop.permute.xlu0 %844
        %847 = vset.pattern.permute.xlu0 4
        %848 = vperm.xlu0 %847, %v475
        %v849 = vpop.permute.xlu0 %848
        %851 = vset.pattern.permute.xlu0 4
        %852 = vperm.xlu0 %851, %v476
        %v853 = vpop.permute.xlu0 %852
        %855 = vset.pattern.permute.xlu0 4
        %856 = vperm.xlu0 %855, %v477
        %v857 = vpop.permute.xlu0 %856
        %859 = vset.pattern.permute.xlu0 4
        %860 = vperm.xlu0 %859, %v478
        %v861 = vpop.permute.xlu0 %860
        %863 = vset.pattern.permute.xlu0 4
        %864 = vperm.xlu0 %863, %v479
        %v865 = vpop.permute.xlu0 %864
        %867 = vset.pattern.permute.xlu0 4
        %868 = vperm.xlu0 %867, %v480
        %v869 = vpop.permute.xlu0 %868
        %871 = vset.pattern.permute.xlu0 4
        %872 = vperm.xlu0 %871, %v481
        %v873 = vpop.permute.xlu0 %872
        %v875 = vlaneseq
        %v876 = vshrl.u32 %v875, 7
        %v877 = vsub.s32 4, %v876
        %v878 = vrot.slane %v515, %v877
        %v879 = vlaneseq
        %v880 = vshrl.u32 %v879, 7
        %v881 = vsub.s32 4, %v880
        %v882 = vrot.slane %v516, %v881
        %v883 = vlaneseq
        %v884 = vshrl.u32 %v883, 7
        %v885 = vsub.s32 4, %v884
        %v886 = vrot.slane %v517, %v885
        %v887 = vlaneseq
        %v888 = vshrl.u32 %v887, 7
        %v889 = vsub.s32 4, %v888
        %v890 = vrot.slane %v518, %v889
        %v891 = vlaneseq
        %v892 = vshrl.u32 %v891, 7
        %v893 = vsub.s32 4, %v892
        %v894 = vrot.slane %v519, %v893
        %v895 = vlaneseq
        %v896 = vshrl.u32 %v895, 7
        %v897 = vsub.s32 4, %v896
        %v898 = vrot.slane %v520, %v897
        %v899 = vlaneseq
        %v900 = vshrl.u32 %v899, 7
        %v901 = vsub.s32 4, %v900
        %v902 = vrot.slane %v521, %v901
        %v903 = vlaneseq
        %v904 = vshrl.u32 %v903, 7
        %v905 = vsub.s32 4, %v904
        %v906 = vrot.slane %v522, %v905
        %v907 = vmul.f32 %v845, %v878
        %v908 = vmul.f32 %v849, %v882
        %v909 = vmul.f32 %v853, %v886
        %v910 = vmul.f32 %v857, %v890
        %v911 = vmul.f32 %v861, %v894
        %v912 = vmul.f32 %v865, %v898
        %v913 = vmul.f32 %v869, %v902
        %v914 = vmul.f32 %v873, %v906
        %v915 = vadd.f32 %v835, %v907
        %v916 = vadd.f32 %v836, %v908
        %v917 = vadd.f32 %v837, %v909
        %v918 = vadd.f32 %v838, %v910
        %v919 = vadd.f32 %v839, %v911
        %v920 = vadd.f32 %v840, %v912
        %v921 = vadd.f32 %v841, %v913
        %v922 = vadd.f32 %v842, %v914
        %923 = vset.pattern.permute.xlu0 5
        %924 = vperm.xlu0 %923, %v474
        %v925 = vpop.permute.xlu0 %924
        %927 = vset.pattern.permute.xlu0 5
        %928 = vperm.xlu0 %927, %v475
        %v929 = vpop.permute.xlu0 %928
        %931 = vset.pattern.permute.xlu0 5
        %932 = vperm.xlu0 %931, %v476
        %v933 = vpop.permute.xlu0 %932
        %935 = vset.pattern.permute.xlu0 5
        %936 = vperm.xlu0 %935, %v477
        %v937 = vpop.permute.xlu0 %936
        %939 = vset.pattern.permute.xlu0 5
        %940 = vperm.xlu0 %939, %v478
        %v941 = vpop.permute.xlu0 %940
        %943 = vset.pattern.permute.xlu0 5
        %944 = vperm.xlu0 %943, %v479
        %v945 = vpop.permute.xlu0 %944
        %947 = vset.pattern.permute.xlu0 5
        %948 = vperm.xlu0 %947, %v480
        %v949 = vpop.permute.xlu0 %948
        %951 = vset.pattern.permute.xlu0 5
        %952 = vperm.xlu0 %951, %v481
        %v953 = vpop.permute.xlu0 %952
        %v955 = vlaneseq
        %v956 = vshrl.u32 %v955, 7
        %v957 = vsub.s32 5, %v956
        %v958 = vrot.slane %v515, %v957
        %v959 = vlaneseq
        %v960 = vshrl.u32 %v959, 7
        %v961 = vsub.s32 5, %v960
        %v962 = vrot.slane %v516, %v961
        %v963 = vlaneseq
        %v964 = vshrl.u32 %v963, 7
        %v965 = vsub.s32 5, %v964
        %v966 = vrot.slane %v517, %v965
        %v967 = vlaneseq
        %v968 = vshrl.u32 %v967, 7
        %v969 = vsub.s32 5, %v968
        %v970 = vrot.slane %v518, %v969
        %v971 = vlaneseq
        %v972 = vshrl.u32 %v971, 7
        %v973 = vsub.s32 5, %v972
        %v974 = vrot.slane %v519, %v973
        %v975 = vlaneseq
        %v976 = vshrl.u32 %v975, 7
        %v977 = vsub.s32 5, %v976
        %v978 = vrot.slane %v520, %v977
        %v979 = vlaneseq
        %v980 = vshrl.u32 %v979, 7
        %v981 = vsub.s32 5, %v980
        %v982 = vrot.slane %v521, %v981
        %v983 = vlaneseq
        %v984 = vshrl.u32 %v983, 7
        %v985 = vsub.s32 5, %v984
        %v986 = vrot.slane %v522, %v985
        %v987 = vmul.f32 %v925, %v958
        %v988 = vmul.f32 %v929, %v962
        %v989 = vmul.f32 %v933, %v966
        %v990 = vmul.f32 %v937, %v970
        %v991 = vmul.f32 %v941, %v974
        %v992 = vmul.f32 %v945, %v978
        %v993 = vmul.f32 %v949, %v982
        %v994 = vmul.f32 %v953, %v986
        %v995 = vadd.f32 %v915, %v987
        %v996 = vadd.f32 %v916, %v988
        %v997 = vadd.f32 %v917, %v989
        %v998 = vadd.f32 %v918, %v990
        %v999 = vadd.f32 %v919, %v991
        %v1000 = vadd.f32 %v920, %v992
        %v1001 = vadd.f32 %v921, %v993
        %v1002 = vadd.f32 %v922, %v994
        %1003 = vset.pattern.permute.xlu0 6
        %1004 = vperm.xlu0 %1003, %v474
        %v1005 = vpop.permute.xlu0 %1004
        %1007 = vset.pattern.permute.xlu0 6
        %1008 = vperm.xlu0 %1007, %v475
        %v1009 = vpop.permute.xlu0 %1008
        %1011 = vset.pattern.permute.xlu0 6
        %1012 = vperm.xlu0 %1011, %v476
        %v1013 = vpop.permute.xlu0 %1012
        %1015 = vset.pattern.permute.xlu0 6
        %1016 = vperm.xlu0 %1015, %v477
        %v1017 = vpop.permute.xlu0 %1016
        %1019 = vset.pattern.permute.xlu0 6
        %1020 = vperm.xlu0 %1019, %v478
        %v1021 = vpop.permute.xlu0 %1020
        %1023 = vset.pattern.permute.xlu0 6
        %1024 = vperm.xlu0 %1023, %v479
        %v1025 = vpop.permute.xlu0 %1024
        %1027 = vset.pattern.permute.xlu0 6
        %1028 = vperm.xlu0 %1027, %v480
        %v1029 = vpop.permute.xlu0 %1028
        %1031 = vset.pattern.permute.xlu0 6
        %1032 = vperm.xlu0 %1031, %v481
        %v1033 = vpop.permute.xlu0 %1032
        %v1035 = vlaneseq
        %v1036 = vshrl.u32 %v1035, 7
        %v1037 = vsub.s32 6, %v1036
        %v1038 = vrot.slane %v515, %v1037
        %v1039 = vlaneseq
        %v1040 = vshrl.u32 %v1039, 7
        %v1041 = vsub.s32 6, %v1040
        %v1042 = vrot.slane %v516, %v1041
        %v1043 = vlaneseq
        %v1044 = vshrl.u32 %v1043, 7
        %v1045 = vsub.s32 6, %v1044
        %v1046 = vrot.slane %v517, %v1045
        %v1047 = vlaneseq
        %v1048 = vshrl.u32 %v1047, 7
        %v1049 = vsub.s32 6, %v1048
        %v1050 = vrot.slane %v518, %v1049
        %v1051 = vlaneseq
        %v1052 = vshrl.u32 %v1051, 7
        %v1053 = vsub.s32 6, %v1052
        %v1054 = vrot.slane %v519, %v1053
        %v1055 = vlaneseq
        %v1056 = vshrl.u32 %v1055, 7
        %v1057 = vsub.s32 6, %v1056
        %v1058 = vrot.slane %v520, %v1057
        %v1059 = vlaneseq
        %v1060 = vshrl.u32 %v1059, 7
        %v1061 = vsub.s32 6, %v1060
        %v1062 = vrot.slane %v521, %v1061
        %v1063 = vlaneseq
        %v1064 = vshrl.u32 %v1063, 7
        %v1065 = vsub.s32 6, %v1064
        %v1066 = vrot.slane %v522, %v1065
        %v1067 = vmul.f32 %v1005, %v1038
        %v1068 = vmul.f32 %v1009, %v1042
        %v1069 = vmul.f32 %v1013, %v1046
        %v1070 = vmul.f32 %v1017, %v1050
        %v1071 = vmul.f32 %v1021, %v1054
        %v1072 = vmul.f32 %v1025, %v1058
        %v1073 = vmul.f32 %v1029, %v1062
        %v1074 = vmul.f32 %v1033, %v1066
        %v1075 = vadd.f32 %v995, %v1067
        %v1076 = vadd.f32 %v996, %v1068
        %v1077 = vadd.f32 %v997, %v1069
        %v1078 = vadd.f32 %v998, %v1070
        %v1079 = vadd.f32 %v999, %v1071
        %v1080 = vadd.f32 %v1000, %v1072
        %v1081 = vadd.f32 %v1001, %v1073
        %v1082 = vadd.f32 %v1002, %v1074
        %1083 = vset.pattern.permute.xlu0 7
        %1084 = vperm.xlu0 %1083, %v474
        %v1085 = vpop.permute.xlu0 %1084
        %1087 = vset.pattern.permute.xlu0 7
        %1088 = vperm.xlu0 %1087, %v475
        %v1089 = vpop.permute.xlu0 %1088
        %1091 = vset.pattern.permute.xlu0 7
        %1092 = vperm.xlu0 %1091, %v476
        %v1093 = vpop.permute.xlu0 %1092
        %1095 = vset.pattern.permute.xlu0 7
        %1096 = vperm.xlu0 %1095, %v477
        %v1097 = vpop.permute.xlu0 %1096
        %1099 = vset.pattern.permute.xlu0 7
        %1100 = vperm.xlu0 %1099, %v478
        %v1101 = vpop.permute.xlu0 %1100
        %1103 = vset.pattern.permute.xlu0 7
        %1104 = vperm.xlu0 %1103, %v479
        %v1105 = vpop.permute.xlu0 %1104
        %1107 = vset.pattern.permute.xlu0 7
        %1108 = vperm.xlu0 %1107, %v480
        %v1109 = vpop.permute.xlu0 %1108
        %1111 = vset.pattern.permute.xlu0 7
        %1112 = vperm.xlu0 %1111, %v481
        %v1113 = vpop.permute.xlu0 %1112
        %v1115 = vlaneseq
        %v1116 = vshrl.u32 %v1115, 7
        %v1117 = vsub.s32 7, %v1116
        %v1118 = vrot.slane %v515, %v1117
        %v1119 = vlaneseq
        %v1120 = vshrl.u32 %v1119, 7
        %v1121 = vsub.s32 7, %v1120
        %v1122 = vrot.slane %v516, %v1121
        %v1123 = vlaneseq
        %v1124 = vshrl.u32 %v1123, 7
        %v1125 = vsub.s32 7, %v1124
        %v1126 = vrot.slane %v517, %v1125
        %v1127 = vlaneseq
        %v1128 = vshrl.u32 %v1127, 7
        %v1129 = vsub.s32 7, %v1128
        %v1130 = vrot.slane %v518, %v1129
        %v1131 = vlaneseq
        %v1132 = vshrl.u32 %v1131, 7
        %v1133 = vsub.s32 7, %v1132
        %v1134 = vrot.slane %v519, %v1133
        %v1135 = vlaneseq
        %v1136 = vshrl.u32 %v1135, 7
        %v1137 = vsub.s32 7, %v1136
        %v1138 = vrot.slane %v520, %v1137
        %v1139 = vlaneseq
        %v1140 = vshrl.u32 %v1139, 7
        %v1141 = vsub.s32 7, %v1140
        %v1142 = vrot.slane %v521, %v1141
        %v1143 = vlaneseq
        %v1144 = vshrl.u32 %v1143, 7
        %v1145 = vsub.s32 7, %v1144
        %v1146 = vrot.slane %v522, %v1145
        %v1147 = vmul.f32 %v1085, %v1118
        %v1148 = vmul.f32 %v1089, %v1122
        %v1149 = vmul.f32 %v1093, %v1126
        %v1150 = vmul.f32 %v1097, %v1130
        %v1151 = vmul.f32 %v1101, %v1134
        %v1152 = vmul.f32 %v1105, %v1138
        %v1153 = vmul.f32 %v1109, %v1142
        %v1154 = vmul.f32 %v1113, %v1146
        %v1155 = vadd.f32 %v1075, %v1147
        %v1156 = vadd.f32 %v1076, %v1148
        %v1157 = vadd.f32 %v1077, %v1149
        %v1158 = vadd.f32 %v1078, %v1150
        %v1159 = vadd.f32 %v1079, %v1151
        %v1160 = vadd.f32 %v1080, %v1152
        %v1161 = vadd.f32 %v1081, %v1153
        %v1162 = vadd.f32 %v1082, %v1154
        %v1163 = vmul.f32 %v507, %v1155
        %v1164 = vmul.f32 %v508, %v1156
        %v1165 = vmul.f32 %v509, %v1157
        %v1166 = vmul.f32 %v510, %v1158
        %v1167 = vmul.f32 %v511, %v1159
        %v1168 = vmul.f32 %v512, %v1160
        %v1169 = vmul.f32 %v513, %v1161
        %v1170 = vmul.f32 %v514, %v1162
        %v1171 = vld [vmem:[%s2] sm:$0xff]
        %v1172 = vld [vmem:[%s2 + $0x8] sm:$0xff]
        %v1173 = vld [vmem:[%s2 + $0x10] sm:$0xff]
        %v1174 = vld [vmem:[%s2 + $0x18] sm:$0xff]
        %v1175 = vld [vmem:[%s2 + $0x20] sm:$0xff]
        %v1176 = vld [vmem:[%s2 + $0x28] sm:$0xff]
        %v1177 = vld [vmem:[%s2 + $0x30] sm:$0xff]
        %v1178 = vld [vmem:[%s2 + $0x38] sm:$0xff]
        %v1179 = vld [vmem:[%s3] sm:$0xf]
        %v1181 = vlaneseq
        %v1182 = vshrl.u32 %v1181, 7
        %v1183 = vsub.s32 0, %v1182
        %v1184 = vrot.slane %v1179, %v1183
        %v1185 = vlaneseq
        %v1186 = vshrl.u32 %v1185, 7
        %v1187 = vsub.s32 1, %v1186
        %v1188 = vrot.slane %v1179, %v1187
        %v1189 = vlaneseq
        %v1190 = vshrl.u32 %v1189, 7
        %v1191 = vsub.s32 2, %v1190
        %v1192 = vrot.slane %v1179, %v1191
        %v1193 = vlaneseq
        %v1194 = vshrl.u32 %v1193, 7
        %v1195 = vsub.s32 3, %v1194
        %v1196 = vrot.slane %v1179, %v1195
        %vm1201 = vcmask 130048
        %v1203 = vsel %vm1201, %v1163, 0
        %v1206 = vsel %vm1201, %v1164, 0
        %v1209 = vsel %vm1201, %v1165, 0
        %v1212 = vsel %vm1201, %v1166, 0
        %v1215 = vsel %vm1201, %v1167, 0
        %v1218 = vsel %vm1201, %v1168, 0
        %v1221 = vsel %vm1201, %v1169, 0
        %v1224 = vsel %vm1201, %v1170, 0
        %1226 = vmatprep.subr.mxu0 %v1172
        %1227 = vmatpush1.msra.mxu0 %v1171
        %1228 = vmatprep.subr.mxu0 %v1176
        %1229 = vmatpush1.msra.mxu0 %v1175
        %1230 = vmatprep.subr.mxu0 0.0
        %1231 = vmatpush1.msra.mxu0 0.0
        %1232 = vmatprep.subr.mxu0 0.0
        %1233 = vmatpush1.msra.mxu0 0.0
        %1234 = vmatprep.subr.mxu0 0.0
        %1235 = vmatpush1.msra.mxu0 0.0
        %1236 = vmatprep.subr.mxu0 0.0
        %1237 = vmatpush1.msra.mxu0 0.0
        %1238 = vmatprep.subr.mxu0 0.0
        %1239 = vmatpush1.msra.mxu0 0.0
        %1240 = vmatprep.subr.mxu0 0.0
        %1241 = vmatpush1.msra.mxu0 0.0
        %1242 = vmatprep.subr.mxu0 0.0
        %1243 = vmatpush1.msra.mxu0 0.0
        %1244 = vmatprep.subr.mxu0 0.0
        %1245 = vmatpush1.msra.mxu0 0.0
        %1246 = vmatprep.subr.mxu0 0.0
        %1247 = vmatpush1.msra.mxu0 0.0
        %1248 = vmatprep.subr.mxu0 0.0
        %1249 = vmatpush1.msra.mxu0 0.0
        %1250 = vmatprep.subr.mxu0 0.0
        %1251 = vmatpush1.msra.mxu0 0.0
        %1252 = vmatprep.subr.mxu0 0.0
        %1253 = vmatpush1.msra.mxu0 0.0
        %1254 = vmatprep.subr.mxu0 0.0
        %1255 = vmatpush1.msra.mxu0 0.0
        %1256 = vmatprep.subr.mxu0 0.0
        %1257 = vmatpush1.msra.mxu0 0.0
        %1258 = vmatprep.subr.mxu0 0.0
        %1259 = vmatpush1.msra.mxu0 0.0
        %1260 = vmatprep.subr.mxu0 0.0
        %1261 = vmatpush1.msra.mxu0 0.0
        %1262 = vmatprep.subr.mxu0 0.0
        %1263 = vmatpush1.msra.mxu0 0.0
        %1264 = vmatprep.subr.mxu0 0.0
        %1265 = vmatpush1.msra.mxu0 0.0
        %1266 = vmatprep.subr.mxu0 0.0
        %1267 = vmatpush1.msra.mxu0 0.0
        %1268 = vmatprep.subr.mxu0 0.0
        %1269 = vmatpush1.msra.mxu0 0.0
        %1270 = vmatprep.subr.mxu0 0.0
        %1271 = vmatpush1.msra.mxu0 0.0
        %1272 = vmatprep.subr.mxu0 0.0
        %1273 = vmatpush1.msra.mxu0 0.0
        %1274 = vmatprep.subr.mxu0 0.0
        %1275 = vmatpush1.msra.mxu0 0.0
        %1276 = vmatprep.subr.mxu0 0.0
        %1277 = vmatpush1.msra.mxu0 0.0
        %1278 = vmatprep.subr.mxu0 0.0
        %1279 = vmatpush1.msra.mxu0 0.0
        %1280 = vmatprep.subr.mxu0 0.0
        %1281 = vmatpush1.msra.mxu0 0.0
        %1282 = vmatprep.subr.mxu0 0.0
        %1283 = vmatpush1.msra.mxu0 0.0
        %1284 = vmatprep.subr.mxu0 0.0
        %1285 = vmatpush1.msra.mxu0 0.0
        %1286 = vmatprep.subr.mxu0 0.0
        %1287 = vmatpush1.msra.mxu0 0.0
        %1288 = vmatprep.subr.mxu0 0.0
        %1289 = vmatpush1.msra.mxu0 0.0
        %1290 = vmatprep.mubr.f32.mxu0 0.0
        %1291 = vmatmul.mubr.f32.gmra.mrb[0].mxu0 %v1203
        %v1292 = vpop.f32.mrb[0].mxu0
        %v1293 = vadd.f32 %v1184, %v1292
        %v1294 = vpop.f32.mrb[0].mxu0
        %v1295 = vadd.f32 %v1188, %v1294
        %1296 = vmatprep.mubr.f32.mxu0 0.0
        %1297 = vmatmul.mubr.f32.gmra.mrb[0].mxu0 %v1206
        %v1298 = vpop.f32.mrb[0].mxu0
        %v1299 = vadd.f32 %v1184, %v1298
        %v1300 = vpop.f32.mrb[0].mxu0
        %v1301 = vadd.f32 %v1188, %v1300
        %1302 = vmatprep.mubr.f32.mxu0 0.0
        %1303 = vmatmul.mubr.f32.gmra.mrb[0].mxu0 %v1209
        %v1304 = vpop.f32.mrb[0].mxu0
        %v1305 = vadd.f32 %v1184, %v1304
        %v1306 = vpop.f32.mrb[0].mxu0
        %v1307 = vadd.f32 %v1188, %v1306
        %1308 = vmatprep.mubr.f32.mxu0 0.0
        %1309 = vmatmul.mubr.f32.gmra.mrb[0].mxu0 %v1212
        %v1310 = vpop.f32.mrb[0].mxu0
        %v1311 = vadd.f32 %v1184, %v1310
        %v1312 = vpop.f32.mrb[0].mxu0
        %v1313 = vadd.f32 %v1188, %v1312
        %1314 = vmatprep.mubr.f32.mxu0 0.0
        %1315 = vmatmul.mubr.f32.gmra.mrb[0].mxu0 %v1215
        %v1316 = vpop.f32.mrb[0].mxu0
        %v1317 = vadd.f32 %v1184, %v1316
        %v1318 = vpop.f32.mrb[0].mxu0
        %v1319 = vadd.f32 %v1188, %v1318
        %1320 = vmatprep.mubr.f32.mxu0 0.0
        %1321 = vmatmul.mubr.f32.gmra.mrb[0].mxu0 %v1218
        %v1322 = vpop.f32.mrb[0].mxu0
        %v1323 = vadd.f32 %v1184, %v1322
        %v1324 = vpop.f32.mrb[0].mxu0
        %v1325 = vadd.f32 %v1188, %v1324
        %1326 = vmatprep.mubr.f32.mxu0 0.0
        %1327 = vmatmul.mubr.f32.gmra.mrb[0].mxu0 %v1221
        %v1328 = vpop.f32.mrb[0].mxu0
        %v1329 = vadd.f32 %v1184, %v1328
        %v1330 = vpop.f32.mrb[0].mxu0
        %v1331 = vadd.f32 %v1188, %v1330
        %1332 = vmatprep.mubr.f32.mxu0 0.0
        %1333 = vmatmul.mubr.f32.gmra.mrb[0].mxu0 %v1224
        %v1334 = vpop.f32.mrb[0].mxu0
        %v1335 = vadd.f32 %v1184, %v1334
        %v1336 = vpop.f32.mrb[0].mxu0
        %v1337 = vadd.f32 %v1188, %v1336
        %1338 = vdwg.mxu0
        %1339 = vmatprep.subr.mxu0 %v1174
        %1340 = vmatpush1.msra.mxu0 %v1173
        %1341 = vmatprep.subr.mxu0 %v1178
        %1342 = vmatpush1.msra.mxu0 %v1177
        %1343 = vmatprep.subr.mxu0 0.0
        %1344 = vmatpush1.msra.mxu0 0.0
        %1345 = vmatprep.subr.mxu0 0.0
        %1346 = vmatpush1.msra.mxu0 0.0
        %1347 = vmatprep.subr.mxu0 0.0
        %1348 = vmatpush1.msra.mxu0 0.0
        %1349 = vmatprep.subr.mxu0 0.0
        %1350 = vmatpush1.msra.mxu0 0.0
        %1351 = vmatprep.subr.mxu0 0.0
        %1352 = vmatpush1.msra.mxu0 0.0
        %1353 = vmatprep.subr.mxu0 0.0
        %1354 = vmatpush1.msra.mxu0 0.0
        %1355 = vmatprep.subr.mxu0 0.0
        %1356 = vmatpush1.msra.mxu0 0.0
        %1357 = vmatprep.subr.mxu0 0.0
        %1358 = vmatpush1.msra.mxu0 0.0
        %1359 = vmatprep.subr.mxu0 0.0
        %1360 = vmatpush1.msra.mxu0 0.0
        %1361 = vmatprep.subr.mxu0 0.0
        %1362 = vmatpush1.msra.mxu0 0.0
        %1363 = vmatprep.subr.mxu0 0.0
        %1364 = vmatpush1.msra.mxu0 0.0
        %1365 = vmatprep.subr.mxu0 0.0
        %1366 = vmatpush1.msra.mxu0 0.0
        %1367 = vmatprep.subr.mxu0 0.0
        %1368 = vmatpush1.msra.mxu0 0.0
        %1369 = vmatprep.subr.mxu0 0.0
        %1370 = vmatpush1.msra.mxu0 0.0
        %1371 = vmatprep.subr.mxu0 0.0
        %1372 = vmatpush1.msra.mxu0 0.0
        %1373 = vmatprep.subr.mxu0 0.0
        %1374 = vmatpush1.msra.mxu0 0.0
        %1375 = vmatprep.subr.mxu0 0.0
        %1376 = vmatpush1.msra.mxu0 0.0
        %1377 = vmatprep.subr.mxu0 0.0
        %1378 = vmatpush1.msra.mxu0 0.0
        %1379 = vmatprep.subr.mxu0 0.0
        %1380 = vmatpush1.msra.mxu0 0.0
        %1381 = vmatprep.subr.mxu0 0.0
        %1382 = vmatpush1.msra.mxu0 0.0
        %1383 = vmatprep.subr.mxu0 0.0
        %1384 = vmatpush1.msra.mxu0 0.0
        %1385 = vmatprep.subr.mxu0 0.0
        %1386 = vmatpush1.msra.mxu0 0.0
        %1387 = vmatprep.subr.mxu0 0.0
        %1388 = vmatpush1.msra.mxu0 0.0
        %1389 = vmatprep.subr.mxu0 0.0
        %1390 = vmatpush1.msra.mxu0 0.0
        %1391 = vmatprep.subr.mxu0 0.0
        %1392 = vmatpush1.msra.mxu0 0.0
        %1393 = vmatprep.subr.mxu0 0.0
        %1394 = vmatpush1.msra.mxu0 0.0
        %1395 = vmatprep.subr.mxu0 0.0
        %1396 = vmatpush1.msra.mxu0 0.0
        %1397 = vmatprep.subr.mxu0 0.0
        %1398 = vmatpush1.msra.mxu0 0.0
        %1399 = vmatprep.subr.mxu0 0.0
        %1400 = vmatpush1.msra.mxu0 0.0
        %1401 = vmatprep.subr.mxu0 0.0
        %1402 = vmatpush1.msra.mxu0 0.0
        %1403 = vmatprep.mubr.f32.mxu0 0.0
        %1404 = vmatmul.mubr.f32.gmra.mrb[0].mxu0 %v1203
        %v1405 = vpop.f32.mrb[0].mxu0
        %v1406 = vadd.f32 %v1192, %v1405
        %v1407 = vpop.f32.mrb[0].mxu0
        %v1408 = vadd.f32 %v1196, %v1407
        %1409 = vmatprep.mubr.f32.mxu0 0.0
        %1410 = vmatmul.mubr.f32.gmra.mrb[0].mxu0 %v1206
        %v1411 = vpop.f32.mrb[0].mxu0
        %v1412 = vadd.f32 %v1192, %v1411
        %v1413 = vpop.f32.mrb[0].mxu0
        %v1414 = vadd.f32 %v1196, %v1413
        %1415 = vmatprep.mubr.f32.mxu0 0.0
        %1416 = vmatmul.mubr.f32.gmra.mrb[0].mxu0 %v1209
        %v1417 = vpop.f32.mrb[0].mxu0
        %v1418 = vadd.f32 %v1192, %v1417
        %v1419 = vpop.f32.mrb[0].mxu0
        %v1420 = vadd.f32 %v1196, %v1419
        %1421 = vmatprep.mubr.f32.mxu0 0.0
        %1422 = vmatmul.mubr.f32.gmra.mrb[0].mxu0 %v1212
        %v1423 = vpop.f32.mrb[0].mxu0
        %v1424 = vadd.f32 %v1192, %v1423
        %v1425 = vpop.f32.mrb[0].mxu0
        %v1426 = vadd.f32 %v1196, %v1425
        %1427 = vmatprep.mubr.f32.mxu0 0.0
        %1428 = vmatmul.mubr.f32.gmra.mrb[0].mxu0 %v1215
        %v1429 = vpop.f32.mrb[0].mxu0
        %v1430 = vadd.f32 %v1192, %v1429
        %v1431 = vpop.f32.mrb[0].mxu0
        %v1432 = vadd.f32 %v1196, %v1431
        %1433 = vmatprep.mubr.f32.mxu0 0.0
        %1434 = vmatmul.mubr.f32.gmra.mrb[0].mxu0 %v1218
        %v1435 = vpop.f32.mrb[0].mxu0
        %v1436 = vadd.f32 %v1192, %v1435
        %v1437 = vpop.f32.mrb[0].mxu0
        %v1438 = vadd.f32 %v1196, %v1437
        %1439 = vmatprep.mubr.f32.mxu0 0.0
        %1440 = vmatmul.mubr.f32.gmra.mrb[0].mxu0 %v1221
        %v1441 = vpop.f32.mrb[0].mxu0
        %v1442 = vadd.f32 %v1192, %v1441
        %v1443 = vpop.f32.mrb[0].mxu0
        %v1444 = vadd.f32 %v1196, %v1443
        %1445 = vmatprep.mubr.f32.mxu0 0.0
        %1446 = vmatmul.mubr.f32.gmra.mrb[0].mxu0 %v1224
        %v1447 = vpop.f32.mrb[0].mxu0
        %v1448 = vadd.f32 %v1192, %v1447
        %v1449 = vpop.f32.mrb[0].mxu0
        %v1450 = vadd.f32 %v1196, %v1449
        %1451 = vdwg.mxu0
        %v1452 = vmax.f32 %v1293, 0.0
        %v1453 = vmax.f32 %v1295, 0.0
        %v1454 = vmax.f32 %v1406, 0.0
        %v1455 = vmax.f32 %v1408, 0.0
        %v1456 = vmax.f32 %v1299, 0.0
        %v1457 = vmax.f32 %v1301, 0.0
        %v1458 = vmax.f32 %v1412, 0.0
        %v1459 = vmax.f32 %v1414, 0.0
        %v1460 = vmax.f32 %v1305, 0.0
        %v1461 = vmax.f32 %v1307, 0.0
        %v1462 = vmax.f32 %v1418, 0.0
        %v1463 = vmax.f32 %v1420, 0.0
        %v1464 = vmax.f32 %v1311, 0.0
        %v1465 = vmax.f32 %v1313, 0.0
        %v1466 = vmax.f32 %v1424, 0.0
        %v1467 = vmax.f32 %v1426, 0.0
        %v1468 = vmax.f32 %v1317, 0.0
        %v1469 = vmax.f32 %v1319, 0.0
        %v1470 = vmax.f32 %v1430, 0.0
        %v1471 = vmax.f32 %v1432, 0.0
        %v1472 = vmax.f32 %v1323, 0.0
        %v1473 = vmax.f32 %v1325, 0.0
        %v1474 = vmax.f32 %v1436, 0.0
        %v1475 = vmax.f32 %v1438, 0.0
        %v1476 = vmax.f32 %v1329, 0.0
        %v1477 = vmax.f32 %v1331, 0.0
        %v1478 = vmax.f32 %v1442, 0.0
        %v1479 = vmax.f32 %v1444, 0.0
        %v1480 = vmax.f32 %v1335, 0.0
        %v1481 = vmax.f32 %v1337, 0.0
        %v1482 = vmax.f32 %v1448, 0.0
        %v1483 = vmax.f32 %v1450, 0.0
        %v1484 = vlaneseq
        %v1485 = vshrl.u32 %v1484, 7
        %v1486 = vsub.s32 0, %v1485
        %v1487 = vrot.slane %v507, %v1486
        %v1488 = vlaneseq
        %v1489 = vshrl.u32 %v1488, 7
        %v1490 = vsub.s32 0, %v1489
        %v1491 = vrot.slane %v508, %v1490
        %v1492 = vlaneseq
        %v1493 = vshrl.u32 %v1492, 7
        %v1494 = vsub.s32 0, %v1493
        %v1495 = vrot.slane %v509, %v1494
        %v1496 = vlaneseq
        %v1497 = vshrl.u32 %v1496, 7
        %v1498 = vsub.s32 0, %v1497
        %v1499 = vrot.slane %v510, %v1498
        %v1500 = vlaneseq
        %v1501 = vshrl.u32 %v1500, 7
        %v1502 = vsub.s32 0, %v1501
        %v1503 = vrot.slane %v511, %v1502
        %v1504 = vlaneseq
        %v1505 = vshrl.u32 %v1504, 7
        %v1506 = vsub.s32 0, %v1505
        %v1507 = vrot.slane %v512, %v1506
        %v1508 = vlaneseq
        %v1509 = vshrl.u32 %v1508, 7
        %v1510 = vsub.s32 0, %v1509
        %v1511 = vrot.slane %v513, %v1510
        %v1512 = vlaneseq
        %v1513 = vshrl.u32 %v1512, 7
        %v1514 = vsub.s32 0, %v1513
        %v1515 = vrot.slane %v514, %v1514
        %v1516 = vmul.f32 %v1487, %v474
        %v1517 = vmul.f32 %v1491, %v475
        %v1518 = vmul.f32 %v1495, %v476
        %v1519 = vmul.f32 %v1499, %v477
        %v1520 = vmul.f32 %v1503, %v478
        %v1521 = vmul.f32 %v1507, %v479
        %v1522 = vmul.f32 %v1511, %v480
        %v1523 = vmul.f32 %v1515, %v481
        %v1524 = vmul.f32 %v1516, %v507
        %v1525 = vmul.f32 %v1517, %v508
        %v1526 = vmul.f32 %v1518, %v509
        %v1527 = vmul.f32 %v1519, %v510
        %v1528 = vmul.f32 %v1520, %v511
        %v1529 = vmul.f32 %v1521, %v512
        %v1530 = vmul.f32 %v1522, %v513
        %v1531 = vmul.f32 %v1523, %v514
        %1533 = vset.pattern.permute.xlu0 0
        %1534 = vperm.xlu0 %1533, %v1524
        %v1535 = vpop.permute.xlu0 %1534
        %1538 = vset.pattern.permute.xlu0 0
        %1539 = vperm.xlu0 %1538, %v1525
        %v1540 = vpop.permute.xlu0 %1539
        %1543 = vset.pattern.permute.xlu0 0
        %1544 = vperm.xlu0 %1543, %v1526
        %v1545 = vpop.permute.xlu0 %1544
        %1548 = vset.pattern.permute.xlu0 0
        %1549 = vperm.xlu0 %1548, %v1527
        %v1550 = vpop.permute.xlu0 %1549
        %1553 = vset.pattern.permute.xlu0 0
        %1554 = vperm.xlu0 %1553, %v1528
        %v1555 = vpop.permute.xlu0 %1554
        %1558 = vset.pattern.permute.xlu0 0
        %1559 = vperm.xlu0 %1558, %v1529
        %v1560 = vpop.permute.xlu0 %1559
        %1563 = vset.pattern.permute.xlu0 0
        %1564 = vperm.xlu0 %1563, %v1530
        %v1565 = vpop.permute.xlu0 %1564
        %1568 = vset.pattern.permute.xlu0 0
        %1569 = vperm.xlu0 %1568, %v1531
        %v1570 = vpop.permute.xlu0 %1569
        %v1572 = vmul.f32 %v1535, %v1452
        %v1573 = vmul.f32 %v1535, %v1453
        %v1574 = vmul.f32 %v1535, %v1454
        %v1575 = vmul.f32 %v1535, %v1455
        %v1576 = vmul.f32 %v1540, %v1456
        %v1577 = vmul.f32 %v1540, %v1457
        %v1578 = vmul.f32 %v1540, %v1458
        %v1579 = vmul.f32 %v1540, %v1459
        %v1580 = vmul.f32 %v1545, %v1460
        %v1581 = vmul.f32 %v1545, %v1461
        %v1582 = vmul.f32 %v1545, %v1462
        %v1583 = vmul.f32 %v1545, %v1463
        %v1584 = vmul.f32 %v1550, %v1464
        %v1585 = vmul.f32 %v1550, %v1465
        %v1586 = vmul.f32 %v1550, %v1466
        %v1587 = vmul.f32 %v1550, %v1467
        %v1588 = vmul.f32 %v1555, %v1468
        %v1589 = vmul.f32 %v1555, %v1469
        %v1590 = vmul.f32 %v1555, %v1470
        %v1591 = vmul.f32 %v1555, %v1471
        %v1592 = vmul.f32 %v1560, %v1472
        %v1593 = vmul.f32 %v1560, %v1473
        %v1594 = vmul.f32 %v1560, %v1474
        %v1595 = vmul.f32 %v1560, %v1475
        %v1596 = vmul.f32 %v1565, %v1476
        %v1597 = vmul.f32 %v1565, %v1477
        %v1598 = vmul.f32 %v1565, %v1478
        %v1599 = vmul.f32 %v1565, %v1479
        %v1600 = vmul.f32 %v1570, %v1480
        %v1601 = vmul.f32 %v1570, %v1481
        %v1602 = vmul.f32 %v1570, %v1482
        %v1603 = vmul.f32 %v1570, %v1483
        %v1604 = vrot.slane %v1572, 4
        %v1605 = vadd.f32 %v1572, %v1604
        %v1606 = vrot.slane %v1605, 2
        %v1607 = vadd.f32 %v1605, %v1606
        %v1608 = vrot.slane %v1607, 1
        %v1609 = vadd.f32 %v1607, %v1608
        %v1610 = vrot.slane %v1573, 4
        %v1611 = vadd.f32 %v1573, %v1610
        %v1612 = vrot.slane %v1611, 2
        %v1613 = vadd.f32 %v1611, %v1612
        %v1614 = vrot.slane %v1613, 1
        %v1615 = vadd.f32 %v1613, %v1614
        %v1616 = vrot.slane %v1574, 4
        %v1617 = vadd.f32 %v1574, %v1616
        %v1618 = vrot.slane %v1617, 2
        %v1619 = vadd.f32 %v1617, %v1618
        %v1620 = vrot.slane %v1619, 1
        %v1621 = vadd.f32 %v1619, %v1620
        %v1622 = vrot.slane %v1575, 4
        %v1623 = vadd.f32 %v1575, %v1622
        %v1624 = vrot.slane %v1623, 2
        %v1625 = vadd.f32 %v1623, %v1624
        %v1626 = vrot.slane %v1625, 1
        %v1627 = vadd.f32 %v1625, %v1626
        %v1628 = vrot.slane %v1576, 4
        %v1629 = vadd.f32 %v1576, %v1628
        %v1630 = vrot.slane %v1629, 2
        %v1631 = vadd.f32 %v1629, %v1630
        %v1632 = vrot.slane %v1631, 1
        %v1633 = vadd.f32 %v1631, %v1632
        %v1634 = vrot.slane %v1577, 4
        %v1635 = vadd.f32 %v1577, %v1634
        %v1636 = vrot.slane %v1635, 2
        %v1637 = vadd.f32 %v1635, %v1636
        %v1638 = vrot.slane %v1637, 1
        %v1639 = vadd.f32 %v1637, %v1638
        %v1640 = vrot.slane %v1578, 4
        %v1641 = vadd.f32 %v1578, %v1640
        %v1642 = vrot.slane %v1641, 2
        %v1643 = vadd.f32 %v1641, %v1642
        %v1644 = vrot.slane %v1643, 1
        %v1645 = vadd.f32 %v1643, %v1644
        %v1646 = vrot.slane %v1579, 4
        %v1647 = vadd.f32 %v1579, %v1646
        %v1648 = vrot.slane %v1647, 2
        %v1649 = vadd.f32 %v1647, %v1648
        %v1650 = vrot.slane %v1649, 1
        %v1651 = vadd.f32 %v1649, %v1650
        %v1652 = vrot.slane %v1580, 4
        %v1653 = vadd.f32 %v1580, %v1652
        %v1654 = vrot.slane %v1653, 2
        %v1655 = vadd.f32 %v1653, %v1654
        %v1656 = vrot.slane %v1655, 1
        %v1657 = vadd.f32 %v1655, %v1656
        %v1658 = vrot.slane %v1581, 4
        %v1659 = vadd.f32 %v1581, %v1658
        %v1660 = vrot.slane %v1659, 2
        %v1661 = vadd.f32 %v1659, %v1660
        %v1662 = vrot.slane %v1661, 1
        %v1663 = vadd.f32 %v1661, %v1662
        %v1664 = vrot.slane %v1582, 4
        %v1665 = vadd.f32 %v1582, %v1664
        %v1666 = vrot.slane %v1665, 2
        %v1667 = vadd.f32 %v1665, %v1666
        %v1668 = vrot.slane %v1667, 1
        %v1669 = vadd.f32 %v1667, %v1668
        %v1670 = vrot.slane %v1583, 4
        %v1671 = vadd.f32 %v1583, %v1670
        %v1672 = vrot.slane %v1671, 2
        %v1673 = vadd.f32 %v1671, %v1672
        %v1674 = vrot.slane %v1673, 1
        %v1675 = vadd.f32 %v1673, %v1674
        %v1676 = vrot.slane %v1584, 4
        %v1677 = vadd.f32 %v1584, %v1676
        %v1678 = vrot.slane %v1677, 2
        %v1679 = vadd.f32 %v1677, %v1678
        %v1680 = vrot.slane %v1679, 1
        %v1681 = vadd.f32 %v1679, %v1680
        %v1682 = vrot.slane %v1585, 4
        %v1683 = vadd.f32 %v1585, %v1682
        %v1684 = vrot.slane %v1683, 2
        %v1685 = vadd.f32 %v1683, %v1684
        %v1686 = vrot.slane %v1685, 1
        %v1687 = vadd.f32 %v1685, %v1686
        %v1688 = vrot.slane %v1586, 4
        %v1689 = vadd.f32 %v1586, %v1688
        %v1690 = vrot.slane %v1689, 2
        %v1691 = vadd.f32 %v1689, %v1690
        %v1692 = vrot.slane %v1691, 1
        %v1693 = vadd.f32 %v1691, %v1692
        %v1694 = vrot.slane %v1587, 4
        %v1695 = vadd.f32 %v1587, %v1694
        %v1696 = vrot.slane %v1695, 2
        %v1697 = vadd.f32 %v1695, %v1696
        %v1698 = vrot.slane %v1697, 1
        %v1699 = vadd.f32 %v1697, %v1698
        %v1700 = vrot.slane %v1588, 4
        %v1701 = vadd.f32 %v1588, %v1700
        %v1702 = vrot.slane %v1701, 2
        %v1703 = vadd.f32 %v1701, %v1702
        %v1704 = vrot.slane %v1703, 1
        %v1705 = vadd.f32 %v1703, %v1704
        %v1706 = vrot.slane %v1589, 4
        %v1707 = vadd.f32 %v1589, %v1706
        %v1708 = vrot.slane %v1707, 2
        %v1709 = vadd.f32 %v1707, %v1708
        %v1710 = vrot.slane %v1709, 1
        %v1711 = vadd.f32 %v1709, %v1710
        %v1712 = vrot.slane %v1590, 4
        %v1713 = vadd.f32 %v1590, %v1712
        %v1714 = vrot.slane %v1713, 2
        %v1715 = vadd.f32 %v1713, %v1714
        %v1716 = vrot.slane %v1715, 1
        %v1717 = vadd.f32 %v1715, %v1716
        %v1718 = vrot.slane %v1591, 4
        %v1719 = vadd.f32 %v1591, %v1718
        %v1720 = vrot.slane %v1719, 2
        %v1721 = vadd.f32 %v1719, %v1720
        %v1722 = vrot.slane %v1721, 1
        %v1723 = vadd.f32 %v1721, %v1722
        %v1724 = vrot.slane %v1592, 4
        %v1725 = vadd.f32 %v1592, %v1724
        %v1726 = vrot.slane %v1725, 2
        %v1727 = vadd.f32 %v1725, %v1726
        %v1728 = vrot.slane %v1727, 1
        %v1729 = vadd.f32 %v1727, %v1728
        %v1730 = vrot.slane %v1593, 4
        %v1731 = vadd.f32 %v1593, %v1730
        %v1732 = vrot.slane %v1731, 2
        %v1733 = vadd.f32 %v1731, %v1732
        %v1734 = vrot.slane %v1733, 1
        %v1735 = vadd.f32 %v1733, %v1734
        %v1736 = vrot.slane %v1594, 4
        %v1737 = vadd.f32 %v1594, %v1736
        %v1738 = vrot.slane %v1737, 2
        %v1739 = vadd.f32 %v1737, %v1738
        %v1740 = vrot.slane %v1739, 1
        %v1741 = vadd.f32 %v1739, %v1740
        %v1742 = vrot.slane %v1595, 4
        %v1743 = vadd.f32 %v1595, %v1742
        %v1744 = vrot.slane %v1743, 2
        %v1745 = vadd.f32 %v1743, %v1744
        %v1746 = vrot.slane %v1745, 1
        %v1747 = vadd.f32 %v1745, %v1746
        %v1748 = vrot.slane %v1596, 4
        %v1749 = vadd.f32 %v1596, %v1748
        %v1750 = vrot.slane %v1749, 2
        %v1751 = vadd.f32 %v1749, %v1750
        %v1752 = vrot.slane %v1751, 1
        %v1753 = vadd.f32 %v1751, %v1752
        %v1754 = vrot.slane %v1597, 4
        %v1755 = vadd.f32 %v1597, %v1754
        %v1756 = vrot.slane %v1755, 2
        %v1757 = vadd.f32 %v1755, %v1756
        %v1758 = vrot.slane %v1757, 1
        %v1759 = vadd.f32 %v1757, %v1758
        %v1760 = vrot.slane %v1598, 4
        %v1761 = vadd.f32 %v1598, %v1760
        %v1762 = vrot.slane %v1761, 2
        %v1763 = vadd.f32 %v1761, %v1762
        %v1764 = vrot.slane %v1763, 1
        %v1765 = vadd.f32 %v1763, %v1764
        %v1766 = vrot.slane %v1599, 4
        %v1767 = vadd.f32 %v1599, %v1766
        %v1768 = vrot.slane %v1767, 2
        %v1769 = vadd.f32 %v1767, %v1768
        %v1770 = vrot.slane %v1769, 1
        %v1771 = vadd.f32 %v1769, %v1770
        %v1772 = vrot.slane %v1600, 4
        %v1773 = vadd.f32 %v1600, %v1772
        %v1774 = vrot.slane %v1773, 2
        %v1775 = vadd.f32 %v1773, %v1774
        %v1776 = vrot.slane %v1775, 1
        %v1777 = vadd.f32 %v1775, %v1776
        %v1778 = vrot.slane %v1601, 4
        %v1779 = vadd.f32 %v1601, %v1778
        %v1780 = vrot.slane %v1779, 2
        %v1781 = vadd.f32 %v1779, %v1780
        %v1782 = vrot.slane %v1781, 1
        %v1783 = vadd.f32 %v1781, %v1782
        %v1784 = vrot.slane %v1602, 4
        %v1785 = vadd.f32 %v1602, %v1784
        %v1786 = vrot.slane %v1785, 2
        %v1787 = vadd.f32 %v1785, %v1786
        %v1788 = vrot.slane %v1787, 1
        %v1789 = vadd.f32 %v1787, %v1788
        %v1790 = vrot.slane %v1603, 4
        %v1791 = vadd.f32 %v1603, %v1790
        %v1792 = vrot.slane %v1791, 2
        %v1793 = vadd.f32 %v1791, %v1792
        %v1794 = vrot.slane %v1793, 1
        %v1795 = vadd.f32 %v1793, %v1794
        %v1796 = vpack.c.bf16 %v1609, %v1609
        %v1797 = vpack.c.bf16 %v1615, %v1615
        %v1798 = vpack.c.bf16 %v1621, %v1621
        %v1799 = vpack.c.bf16 %v1627, %v1627
        %v1800 = vpack.c.bf16 %v1633, %v1633
        %v1801 = vpack.c.bf16 %v1639, %v1639
        %v1802 = vpack.c.bf16 %v1645, %v1645
        %v1803 = vpack.c.bf16 %v1651, %v1651
        %v1804 = vpack.c.bf16 %v1657, %v1657
        %v1805 = vpack.c.bf16 %v1663, %v1663
        %v1806 = vpack.c.bf16 %v1669, %v1669
        %v1807 = vpack.c.bf16 %v1675, %v1675
        %v1808 = vpack.c.bf16 %v1681, %v1681
        %v1809 = vpack.c.bf16 %v1687, %v1687
        %v1810 = vpack.c.bf16 %v1693, %v1693
        %v1811 = vpack.c.bf16 %v1699, %v1699
        %v1812 = vpack.c.bf16 %v1705, %v1705
        %v1813 = vpack.c.bf16 %v1711, %v1711
        %v1814 = vpack.c.bf16 %v1717, %v1717
        %v1815 = vpack.c.bf16 %v1723, %v1723
        %v1816 = vpack.c.bf16 %v1729, %v1729
        %v1817 = vpack.c.bf16 %v1735, %v1735
        %v1818 = vpack.c.bf16 %v1741, %v1741
        %v1819 = vpack.c.bf16 %v1747, %v1747
        %v1820 = vpack.c.bf16 %v1753, %v1753
        %v1821 = vpack.c.bf16 %v1759, %v1759
        %v1822 = vpack.c.bf16 %v1765, %v1765
        %v1823 = vpack.c.bf16 %v1771, %v1771
        %v1824 = vpack.c.bf16 %v1777, %v1777
        %v1825 = vpack.c.bf16 %v1783, %v1783
        %v1826 = vpack.c.bf16 %v1789, %v1789
        %v1827 = vpack.c.bf16 %v1795, %v1795
        %v1828 = vld [vmem:[#allocation2] sm:$0xff]
        %v1829 = vld [vmem:[#allocation2 + $0x8] sm:$0xff]
        %v1830 = vld [vmem:[#allocation2 + $0x10] sm:$0xff]
        %v1831 = vld [vmem:[#allocation2 + $0x18] sm:$0xff]
        %v1832 = vld [vmem:[#allocation2 + $0x20] sm:$0xff]
        %v1833 = vld [vmem:[#allocation2 + $0x28] sm:$0xff]
        %v1834 = vld [vmem:[#allocation2 + $0x30] sm:$0xff]
        %v1835 = vld [vmem:[#allocation2 + $0x38] sm:$0xff]
        %v1836 = vld [vmem:[#allocation2 + $0x40] sm:$0xff]
        %v1837 = vld [vmem:[#allocation2 + $0x48] sm:$0xff]
        %v1838 = vld [vmem:[#allocation2 + $0x50] sm:$0xff]
        %v1839 = vld [vmem:[#allocation2 + $0x58] sm:$0xff]
        %v1840 = vld [vmem:[#allocation2 + $0x60] sm:$0xff]
        %v1841 = vld [vmem:[#allocation2 + $0x68] sm:$0xff]
        %v1842 = vld [vmem:[#allocation2 + $0x70] sm:$0xff]
        %v1843 = vld [vmem:[#allocation2 + $0x78] sm:$0xff]
        %v1844 = vld [vmem:[#allocation2 + $0x80] sm:$0xff]
        %v1845 = vld [vmem:[#allocation2 + $0x88] sm:$0xff]
        %v1846 = vld [vmem:[#allocation2 + $0x90] sm:$0xff]
        %v1847 = vld [vmem:[#allocation2 + $0x98] sm:$0xff]
        %v1848 = vld [vmem:[#allocation2 + $0xa0] sm:$0xff]
        %v1849 = vld [vmem:[#allocation2 + $0xa8] sm:$0xff]
        %v1850 = vld [vmem:[#allocation2 + $0xb0] sm:$0xff]
        %v1851 = vld [vmem:[#allocation2 + $0xb8] sm:$0xff]
        %v1852 = vld [vmem:[#allocation2 + $0xc0] sm:$0xff]
        %v1853 = vld [vmem:[#allocation2 + $0xc8] sm:$0xff]
        %v1854 = vld [vmem:[#allocation2 + $0xd0] sm:$0xff]
        %v1855 = vld [vmem:[#allocation2 + $0xd8] sm:$0xff]
        %v1856 = vld [vmem:[#allocation2 + $0xe0] sm:$0xff]
        %v1857 = vld [vmem:[#allocation2 + $0xe8] sm:$0xff]
        %v1858 = vld [vmem:[#allocation2 + $0xf0] sm:$0xff]
        %v1859 = vld [vmem:[#allocation2 + $0xf8] sm:$0xff]
        %v1860 = vld [vmem:[#allocation2 + $0x100] sm:$0xff]
        %v1861 = vld [vmem:[#allocation2 + $0x108] sm:$0xff]
        %v1862 = vld [vmem:[#allocation2 + $0x110] sm:$0xff]
        %v1863 = vld [vmem:[#allocation2 + $0x118] sm:$0xff]
        %v1864 = vld [vmem:[#allocation2 + $0x120] sm:$0xff]
        %v1865 = vld [vmem:[#allocation2 + $0x128] sm:$0xff]
        %v1866 = vld [vmem:[#allocation2 + $0x130] sm:$0xff]
        %v1867 = vld [vmem:[#allocation2 + $0x138] sm:$0xff]
        %v1868 = vld [vmem:[#allocation2 + $0x140] sm:$0xff]
        %v1869 = vld [vmem:[#allocation2 + $0x148] sm:$0xff]
        %v1870 = vld [vmem:[#allocation2 + $0x150] sm:$0xff]
        %v1871 = vld [vmem:[#allocation2 + $0x158] sm:$0xff]
        %v1872 = vld [vmem:[#allocation2 + $0x160] sm:$0xff]
        %v1873 = vld [vmem:[#allocation2 + $0x168] sm:$0xff]
        %v1874 = vld [vmem:[#allocation2 + $0x170] sm:$0xff]
        %v1875 = vld [vmem:[#allocation2 + $0x178] sm:$0xff]
        %v1876 = vld [vmem:[#allocation2 + $0x180] sm:$0xff]
        %v1877 = vld [vmem:[#allocation2 + $0x188] sm:$0xff]
        %v1878 = vld [vmem:[#allocation2 + $0x190] sm:$0xff]
        %v1879 = vld [vmem:[#allocation2 + $0x198] sm:$0xff]
        %v1880 = vld [vmem:[#allocation2 + $0x1a0] sm:$0xff]
        %v1881 = vld [vmem:[#allocation2 + $0x1a8] sm:$0xff]
        %v1882 = vld [vmem:[#allocation2 + $0x1b0] sm:$0xff]
        %v1883 = vld [vmem:[#allocation2 + $0x1b8] sm:$0xff]
        %v1884 = vld [vmem:[#allocation2 + $0x1c0] sm:$0xff]
        %v1885 = vld [vmem:[#allocation2 + $0x1c8] sm:$0xff]
        %v1886 = vld [vmem:[#allocation2 + $0x1d0] sm:$0xff]
        %v1887 = vld [vmem:[#allocation2 + $0x1d8] sm:$0xff]
        %v1888 = vld [vmem:[#allocation2 + $0x1e0] sm:$0xff]
        %v1889 = vld [vmem:[#allocation2 + $0x1e8] sm:$0xff]
        %v1890 = vld [vmem:[#allocation2 + $0x1f0] sm:$0xff]
        %v1891 = vld [vmem:[#allocation2 + $0x1f8] sm:$0xff]
        %v1892 = vld [vmem:[#allocation2 + $0x200] sm:$0xff]
        %v1893 = vld [vmem:[#allocation2 + $0x208] sm:$0xff]
        %v1894 = vld [vmem:[#allocation2 + $0x210] sm:$0xff]
        %v1895 = vld [vmem:[#allocation2 + $0x218] sm:$0xff]
        %v1896 = vld [vmem:[#allocation2 + $0x220] sm:$0xff]
        %v1897 = vld [vmem:[#allocation2 + $0x228] sm:$0xff]
        %v1898 = vld [vmem:[#allocation2 + $0x230] sm:$0xff]
        %v1899 = vld [vmem:[#allocation2 + $0x238] sm:$0xff]
        %v1900 = vld [vmem:[#allocation2 + $0x240] sm:$0xff]
        %v1901 = vld [vmem:[#allocation2 + $0x248] sm:$0xff]
        %v1902 = vld [vmem:[#allocation2 + $0x250] sm:$0xff]
        %v1903 = vld [vmem:[#allocation2 + $0x258] sm:$0xff]
        %v1904 = vld [vmem:[#allocation2 + $0x260] sm:$0xff]
        %v1905 = vld [vmem:[#allocation2 + $0x268] sm:$0xff]
        %v1906 = vld [vmem:[#allocation2 + $0x270] sm:$0xff]
        %v1907 = vld [vmem:[#allocation2 + $0x278] sm:$0xff]
        %v1908 = vld [vmem:[#allocation2 + $0x280] sm:$0xff]
        %v1909 = vld [vmem:[#allocation2 + $0x288] sm:$0xff]
        %v1910 = vld [vmem:[#allocation2 + $0x290] sm:$0xff]
        %v1911 = vld [vmem:[#allocation2 + $0x298] sm:$0xff]
        %v1912 = vld [vmem:[#allocation2 + $0x2a0] sm:$0xff]
        %v1913 = vld [vmem:[#allocation2 + $0x2a8] sm:$0xff]
        %v1914 = vld [vmem:[#allocation2 + $0x2b0] sm:$0xff]
        %v1915 = vld [vmem:[#allocation2 + $0x2b8] sm:$0xff]
        %v1916 = vld [vmem:[#allocation2 + $0x2c0] sm:$0xff]
        %v1917 = vld [vmem:[#allocation2 + $0x2c8] sm:$0xff]
        %v1918 = vld [vmem:[#allocation2 + $0x2d0] sm:$0xff]
        %v1919 = vld [vmem:[#allocation2 + $0x2d8] sm:$0xff]
        %v1920 = vld [vmem:[#allocation2 + $0x2e0] sm:$0xff]
        %v1921 = vld [vmem:[#allocation2 + $0x2e8] sm:$0xff]
        %v1922 = vld [vmem:[#allocation2 + $0x2f0] sm:$0xff]
        %v1923 = vld [vmem:[#allocation2 + $0x2f8] sm:$0xff]
        %v1924 = vld [vmem:[#allocation2 + $0x300] sm:$0xff]
        %v1925 = vld [vmem:[#allocation2 + $0x308] sm:$0xff]
        %v1926 = vld [vmem:[#allocation2 + $0x310] sm:$0xff]
        %v1927 = vld [vmem:[#allocation2 + $0x318] sm:$0xff]
        %v1928 = vld [vmem:[#allocation2 + $0x320] sm:$0xff]
        %v1929 = vld [vmem:[#allocation2 + $0x328] sm:$0xff]
        %v1930 = vld [vmem:[#allocation2 + $0x330] sm:$0xff]
        %v1931 = vld [vmem:[#allocation2 + $0x338] sm:$0xff]
        %v1932 = vld [vmem:[#allocation2 + $0x340] sm:$0xff]
        %v1933 = vld [vmem:[#allocation2 + $0x348] sm:$0xff]
        %v1934 = vld [vmem:[#allocation2 + $0x350] sm:$0xff]
        %v1935 = vld [vmem:[#allocation2 + $0x358] sm:$0xff]
        %v1936 = vld [vmem:[#allocation2 + $0x360] sm:$0xff]
        %v1937 = vld [vmem:[#allocation2 + $0x368] sm:$0xff]
        %v1938 = vld [vmem:[#allocation2 + $0x370] sm:$0xff]
        %v1939 = vld [vmem:[#allocation2 + $0x378] sm:$0xff]
        %v1940 = vld [vmem:[#allocation2 + $0x380] sm:$0xff]
        %v1941 = vld [vmem:[#allocation2 + $0x388] sm:$0xff]
        %v1942 = vld [vmem:[#allocation2 + $0x390] sm:$0xff]
        %v1943 = vld [vmem:[#allocation2 + $0x398] sm:$0xff]
        %v1944 = vld [vmem:[#allocation2 + $0x3a0] sm:$0xff]
        %v1945 = vld [vmem:[#allocation2 + $0x3a8] sm:$0xff]
        %v1946 = vld [vmem:[#allocation2 + $0x3b0] sm:$0xff]
        %v1947 = vld [vmem:[#allocation2 + $0x3b8] sm:$0xff]
        %v1948 = vld [vmem:[#allocation2 + $0x3c0] sm:$0xff]
        %v1949 = vld [vmem:[#allocation2 + $0x3c8] sm:$0xff]
        %v1950 = vld [vmem:[#allocation2 + $0x3d0] sm:$0xff]
        %v1951 = vld [vmem:[#allocation2 + $0x3d8] sm:$0xff]
        %v1952 = vld [vmem:[#allocation2 + $0x3e0] sm:$0xff]
        %v1953 = vld [vmem:[#allocation2 + $0x3e8] sm:$0xff]
        %v1954 = vld [vmem:[#allocation2 + $0x3f0] sm:$0xff]
        %v1955 = vld [vmem:[#allocation2 + $0x3f8] sm:$0xff]
        %v1956 = vld [vmem:[%s5] sm:$0xf]
        %v1958 = vlaneseq
        %v1959 = vshrl.u32 %v1958, 7
        %v1960 = vsub.s32 0, %v1959
        %v1961 = vrot.slane %v1956, %v1960
        %v1962 = vlaneseq
        %v1963 = vshrl.u32 %v1962, 7
        %v1964 = vsub.s32 1, %v1963
        %v1965 = vrot.slane %v1956, %v1964
        %v1966 = vlaneseq
        %v1967 = vshrl.u32 %v1966, 7
        %v1968 = vsub.s32 2, %v1967
        %v1969 = vrot.slane %v1956, %v1968
        %v1970 = vlaneseq
        %v1971 = vshrl.u32 %v1970, 7
        %v1972 = vsub.s32 3, %v1971
        %v1973 = vrot.slane %v1956, %v1972
        %v2010 = vunpack.c.l.b16 %v1796
        %v2011 = vunpack.c.l.b16 %v1797
        %v2012 = vunpack.c.l.b16 %v1798
        %v2013 = vunpack.c.l.b16 %v1799
        %v2014 = vunpack.c.l.b16 %v1800
        %v2015 = vunpack.c.l.b16 %v1801
        %v2016 = vunpack.c.l.b16 %v1802
        %v2017 = vunpack.c.l.b16 %v1803
        %v2018 = vunpack.c.l.b16 %v1804
        %v2019 = vunpack.c.l.b16 %v1805
        %v2020 = vunpack.c.l.b16 %v1806
        %v2021 = vunpack.c.l.b16 %v1807
        %v2022 = vunpack.c.l.b16 %v1808
        %v2023 = vunpack.c.l.b16 %v1809
        %v2024 = vunpack.c.l.b16 %v1810
        %v2025 = vunpack.c.l.b16 %v1811
        %v2026 = vunpack.c.l.b16 %v1812
        %v2027 = vunpack.c.l.b16 %v1813
        %v2028 = vunpack.c.l.b16 %v1814
        %v2029 = vunpack.c.l.b16 %v1815
        %v2030 = vunpack.c.l.b16 %v1816
        %v2031 = vunpack.c.l.b16 %v1817
        %v2032 = vunpack.c.l.b16 %v1818
        %v2033 = vunpack.c.l.b16 %v1819
        %v2034 = vunpack.c.l.b16 %v1820
        %v2035 = vunpack.c.l.b16 %v1821
        %v2036 = vunpack.c.l.b16 %v1822
        %v2037 = vunpack.c.l.b16 %v1823
        %v2038 = vunpack.c.l.b16 %v1824
        %v2039 = vunpack.c.l.b16 %v1825
        %v2040 = vunpack.c.l.b16 %v1826
        %v2041 = vunpack.c.l.b16 %v1827
        %vm2042 = vcmask 1041409
        %v2043 = vsel %vm2042, %v2014, %v2010
        %vm2044 = vcmask 1042434
        %v2045 = vsel %vm2044, %v2018, %v2043
        %vm2046 = vcmask 1043459
        %v2047 = vsel %vm2046, %v2022, %v2045
        %vm2048 = vcmask 1044484
        %v2049 = vsel %vm2048, %v2026, %v2047
        %vm2050 = vcmask 1045509
        %v2051 = vsel %vm2050, %v2030, %v2049
        %vm2052 = vcmask 1046534
        %v2053 = vsel %vm2052, %v2034, %v2051
        %vm2054 = vcmask 1047559
        %v2055 = vsel %vm2054, %v2038, %v2053
        %v2056 = vsel %vm2042, %v2015, %v2011
        %v2057 = vsel %vm2044, %v2019, %v2056
        %v2058 = vsel %vm2046, %v2023, %v2057
        %v2059 = vsel %vm2048, %v2027, %v2058
        %v2060 = vsel %vm2050, %v2031, %v2059
        %v2061 = vsel %vm2052, %v2035, %v2060
        %v2062 = vsel %vm2054, %v2039, %v2061
        %v2063 = vsel %vm2042, %v2016, %v2012
        %v2064 = vsel %vm2044, %v2020, %v2063
        %v2065 = vsel %vm2046, %v2024, %v2064
        %v2066 = vsel %vm2048, %v2028, %v2065
        %v2067 = vsel %vm2050, %v2032, %v2066
        %v2068 = vsel %vm2052, %v2036, %v2067
        %v2069 = vsel %vm2054, %v2040, %v2068
        %v2070 = vsel %vm2042, %v2017, %v2013
        %v2071 = vsel %vm2044, %v2021, %v2070
        %v2072 = vsel %vm2046, %v2025, %v2071
        %v2073 = vsel %vm2048, %v2029, %v2072
        %v2074 = vsel %vm2050, %v2033, %v2073
        %v2075 = vsel %vm2052, %v2037, %v2074
        %v2076 = vsel %vm2054, %v2041, %v2075
        %v2077 = vpack.c.b16 %v2055, %v2055
        %v2078 = vpack.c.b16 %v2062, %v2062
        %v2079 = vpack.c.b16 %v2069, %v2069
        %v2080 = vpack.c.b16 %v2076, %v2076
        %v2213 = vunpack.c.l.b16 %v1828
        %v2214 = vunpack.c.h.b16 %v1828
        %v2215 = vunpack.c.l.b16 %v1829
        %v2216 = vunpack.c.h.b16 %v1829
        %v2217 = vunpack.c.l.b16 %v1830
        %v2218 = vunpack.c.h.b16 %v1830
        %v2219 = vunpack.c.l.b16 %v1831
        %v2220 = vunpack.c.h.b16 %v1831
        %v2221 = vunpack.c.l.b16 %v1832
        %v2222 = vunpack.c.h.b16 %v1832
        %v2223 = vunpack.c.l.b16 %v1833
        %v2224 = vunpack.c.h.b16 %v1833
        %v2225 = vunpack.c.l.b16 %v1834
        %v2226 = vunpack.c.h.b16 %v1834
        %v2227 = vunpack.c.l.b16 %v1835
        %v2228 = vunpack.c.h.b16 %v1835
        %v2229 = vunpack.c.l.b16 %v1836
        %v2230 = vunpack.c.h.b16 %v1836
        %v2231 = vunpack.c.l.b16 %v1837
        %v2232 = vunpack.c.h.b16 %v1837
        %v2233 = vunpack.c.l.b16 %v1838
        %v2234 = vunpack.c.h.b16 %v1838
        %v2235 = vunpack.c.l.b16 %v1839
        %v2236 = vunpack.c.h.b16 %v1839
        %v2237 = vunpack.c.l.b16 %v1840
        %v2238 = vunpack.c.h.b16 %v1840
        %v2239 = vunpack.c.l.b16 %v1841
        %v2240 = vunpack.c.h.b16 %v1841
        %v2241 = vunpack.c.l.b16 %v1842
        %v2242 = vunpack.c.h.b16 %v1842
        %v2243 = vunpack.c.l.b16 %v1843
        %v2244 = vunpack.c.h.b16 %v1843
        %v2245 = vunpack.c.l.b16 %v1844
        %v2246 = vunpack.c.h.b16 %v1844
        %v2247 = vunpack.c.l.b16 %v1845
        %v2248 = vunpack.c.h.b16 %v1845
        %v2249 = vunpack.c.l.b16 %v1846
        %v2250 = vunpack.c.h.b16 %v1846
        %v2251 = vunpack.c.l.b16 %v1847
        %v2252 = vunpack.c.h.b16 %v1847
        %v2253 = vunpack.c.l.b16 %v1848
        %v2254 = vunpack.c.h.b16 %v1848
        %v2255 = vunpack.c.l.b16 %v1849
        %v2256 = vunpack.c.h.b16 %v1849
        %v2257 = vunpack.c.l.b16 %v1850
        %v2258 = vunpack.c.h.b16 %v1850
        %v2259 = vunpack.c.l.b16 %v1851
        %v2260 = vunpack.c.h.b16 %v1851
        %v2261 = vunpack.c.l.b16 %v1852
        %v2262 = vunpack.c.h.b16 %v1852
        %v2263 = vunpack.c.l.b16 %v1853
        %v2264 = vunpack.c.h.b16 %v1853
        %v2265 = vunpack.c.l.b16 %v1854
        %v2266 = vunpack.c.h.b16 %v1854
        %v2267 = vunpack.c.l.b16 %v1855
        %v2268 = vunpack.c.h.b16 %v1855
        %v2269 = vunpack.c.l.b16 %v1856
        %v2270 = vunpack.c.h.b16 %v1856
        %v2271 = vunpack.c.l.b16 %v1857
        %v2272 = vunpack.c.h.b16 %v1857
        %v2273 = vunpack.c.l.b16 %v1858
        %v2274 = vunpack.c.h.b16 %v1858
        %v2275 = vunpack.c.l.b16 %v1859
        %v2276 = vunpack.c.h.b16 %v1859
        %v2277 = vunpack.c.l.b16 %v1860
        %v2278 = vunpack.c.h.b16 %v1860
        %v2279 = vunpack.c.l.b16 %v1861
        %v2280 = vunpack.c.h.b16 %v1861
        %v2281 = vunpack.c.l.b16 %v1862
        %v2282 = vunpack.c.h.b16 %v1862
        %v2283 = vunpack.c.l.b16 %v1863
        %v2284 = vunpack.c.h.b16 %v1863
        %v2285 = vunpack.c.l.b16 %v1864
        %v2286 = vunpack.c.h.b16 %v1864
        %v2287 = vunpack.c.l.b16 %v1865
        %v2288 = vunpack.c.h.b16 %v1865
        %v2289 = vunpack.c.l.b16 %v1866
        %v2290 = vunpack.c.h.b16 %v1866
        %v2291 = vunpack.c.l.b16 %v1867
        %v2292 = vunpack.c.h.b16 %v1867
        %v2293 = vunpack.c.l.b16 %v1868
        %v2294 = vunpack.c.h.b16 %v1868
        %v2295 = vunpack.c.l.b16 %v1869
        %v2296 = vunpack.c.h.b16 %v1869
        %v2297 = vunpack.c.l.b16 %v1870
        %v2298 = vunpack.c.h.b16 %v1870
        %v2299 = vunpack.c.l.b16 %v1871
        %v2300 = vunpack.c.h.b16 %v1871
        %v2301 = vunpack.c.l.b16 %v1872
        %v2302 = vunpack.c.h.b16 %v1872
        %v2303 = vunpack.c.l.b16 %v1873
        %v2304 = vunpack.c.h.b16 %v1873
        %v2305 = vunpack.c.l.b16 %v1874
        %v2306 = vunpack.c.h.b16 %v1874
        %v2307 = vunpack.c.l.b16 %v1875
        %v2308 = vunpack.c.h.b16 %v1875
        %v2309 = vunpack.c.l.b16 %v1876
        %v2310 = vunpack.c.h.b16 %v1876
        %v2311 = vunpack.c.l.b16 %v1877
        %v2312 = vunpack.c.h.b16 %v1877
        %v2313 = vunpack.c.l.b16 %v1878
        %v2314 = vunpack.c.h.b16 %v1878
        %v2315 = vunpack.c.l.b16 %v1879
        %v2316 = vunpack.c.h.b16 %v1879
        %v2317 = vunpack.c.l.b16 %v1880
        %v2318 = vunpack.c.h.b16 %v1880
        %v2319 = vunpack.c.l.b16 %v1881
        %v2320 = vunpack.c.h.b16 %v1881
        %v2321 = vunpack.c.l.b16 %v1882
        %v2322 = vunpack.c.h.b16 %v1882
        %v2323 = vunpack.c.l.b16 %v1883
        %v2324 = vunpack.c.h.b16 %v1883
        %v2325 = vunpack.c.l.b16 %v1884
        %v2326 = vunpack.c.h.b16 %v1884
        %v2327 = vunpack.c.l.b16 %v1885
        %v2328 = vunpack.c.h.b16 %v1885
        %v2329 = vunpack.c.l.b16 %v1886
        %v2330 = vunpack.c.h.b16 %v1886
        %v2331 = vunpack.c.l.b16 %v1887
        %v2332 = vunpack.c.h.b16 %v1887
        %v2333 = vunpack.c.l.b16 %v1888
        %v2334 = vunpack.c.h.b16 %v1888
        %v2335 = vunpack.c.l.b16 %v1889
        %v2336 = vunpack.c.h.b16 %v1889
        %v2337 = vunpack.c.l.b16 %v1890
        %v2338 = vunpack.c.h.b16 %v1890
        %v2339 = vunpack.c.l.b16 %v1891
        %v2340 = vunpack.c.h.b16 %v1891
        %v2341 = vunpack.c.l.b16 %v1892
        %v2342 = vunpack.c.h.b16 %v1892
        %v2343 = vunpack.c.l.b16 %v1893
        %v2344 = vunpack.c.h.b16 %v1893
        %v2345 = vunpack.c.l.b16 %v1894
        %v2346 = vunpack.c.h.b16 %v1894
        %v2347 = vunpack.c.l.b16 %v1895
        %v2348 = vunpack.c.h.b16 %v1895
        %v2349 = vunpack.c.l.b16 %v1896
        %v2350 = vunpack.c.h.b16 %v1896
        %v2351 = vunpack.c.l.b16 %v1897
        %v2352 = vunpack.c.h.b16 %v1897
        %v2353 = vunpack.c.l.b16 %v1898
        %v2354 = vunpack.c.h.b16 %v1898
        %v2355 = vunpack.c.l.b16 %v1899
        %v2356 = vunpack.c.h.b16 %v1899
        %v2357 = vunpack.c.l.b16 %v1900
        %v2358 = vunpack.c.h.b16 %v1900
        %v2359 = vunpack.c.l.b16 %v1901
        %v2360 = vunpack.c.h.b16 %v1901
        %v2361 = vunpack.c.l.b16 %v1902
        %v2362 = vunpack.c.h.b16 %v1902
        %v2363 = vunpack.c.l.b16 %v1903
        %v2364 = vunpack.c.h.b16 %v1903
        %v2365 = vunpack.c.l.b16 %v1904
        %v2366 = vunpack.c.h.b16 %v1904
        %v2367 = vunpack.c.l.b16 %v1905
        %v2368 = vunpack.c.h.b16 %v1905
        %v2369 = vunpack.c.l.b16 %v1906
        %v2370 = vunpack.c.h.b16 %v1906
        %v2371 = vunpack.c.l.b16 %v1907
        %v2372 = vunpack.c.h.b16 %v1907
        %v2373 = vunpack.c.l.b16 %v1908
        %v2374 = vunpack.c.h.b16 %v1908
        %v2375 = vunpack.c.l.b16 %v1909
        %v2376 = vunpack.c.h.b16 %v1909
        %v2377 = vunpack.c.l.b16 %v1910
        %v2378 = vunpack.c.h.b16 %v1910
        %v2379 = vunpack.c.l.b16 %v1911
        %v2380 = vunpack.c.h.b16 %v1911
        %v2381 = vunpack.c.l.b16 %v1912
        %v2382 = vunpack.c.h.b16 %v1912
        %v2383 = vunpack.c.l.b16 %v1913
        %v2384 = vunpack.c.h.b16 %v1913
        %v2385 = vunpack.c.l.b16 %v1914
        %v2386 = vunpack.c.h.b16 %v1914
        %v2387 = vunpack.c.l.b16 %v1915
        %v2388 = vunpack.c.h.b16 %v1915
        %v2389 = vunpack.c.l.b16 %v1916
        %v2390 = vunpack.c.h.b16 %v1916
        %v2391 = vunpack.c.l.b16 %v1917
        %v2392 = vunpack.c.h.b16 %v1917
        %v2393 = vunpack.c.l.b16 %v1918
        %v2394 = vunpack.c.h.b16 %v1918
        %v2395 = vunpack.c.l.b16 %v1919
        %v2396 = vunpack.c.h.b16 %v1919
        %v2397 = vunpack.c.l.b16 %v1920
        %v2398 = vunpack.c.h.b16 %v1920
        %v2399 = vunpack.c.l.b16 %v1921
        %v2400 = vunpack.c.h.b16 %v1921
        %v2401 = vunpack.c.l.b16 %v1922
        %v2402 = vunpack.c.h.b16 %v1922
        %v2403 = vunpack.c.l.b16 %v1923
        %v2404 = vunpack.c.h.b16 %v1923
        %v2405 = vunpack.c.l.b16 %v1924
        %v2406 = vunpack.c.h.b16 %v1924
        %v2407 = vunpack.c.l.b16 %v1925
        %v2408 = vunpack.c.h.b16 %v1925
        %v2409 = vunpack.c.l.b16 %v1926
        %v2410 = vunpack.c.h.b16 %v1926
        %v2411 = vunpack.c.l.b16 %v1927
        %v2412 = vunpack.c.h.b16 %v1927
        %v2413 = vunpack.c.l.b16 %v1928
        %v2414 = vunpack.c.h.b16 %v1928
        %v2415 = vunpack.c.l.b16 %v1929
        %v2416 = vunpack.c.h.b16 %v1929
        %v2417 = vunpack.c.l.b16 %v1930
        %v2418 = vunpack.c.h.b16 %v1930
        %v2419 = vunpack.c.l.b16 %v1931
        %v2420 = vunpack.c.h.b16 %v1931
        %v2421 = vunpack.c.l.b16 %v1932
        %v2422 = vunpack.c.h.b16 %v1932
        %v2423 = vunpack.c.l.b16 %v1933
        %v2424 = vunpack.c.h.b16 %v1933
        %v2425 = vunpack.c.l.b16 %v1934
        %v2426 = vunpack.c.h.b16 %v1934
        %v2427 = vunpack.c.l.b16 %v1935
        %v2428 = vunpack.c.h.b16 %v1935
        %v2429 = vunpack.c.l.b16 %v1936
        %v2430 = vunpack.c.h.b16 %v1936
        %v2431 = vunpack.c.l.b16 %v1937
        %v2432 = vunpack.c.h.b16 %v1937
        %v2433 = vunpack.c.l.b16 %v1938
        %v2434 = vunpack.c.h.b16 %v1938
        %v2435 = vunpack.c.l.b16 %v1939
        %v2436 = vunpack.c.h.b16 %v1939
        %v2437 = vunpack.c.l.b16 %v1940
        %v2438 = vunpack.c.h.b16 %v1940
        %v2439 = vunpack.c.l.b16 %v1941
        %v2440 = vunpack.c.h.b16 %v1941
        %v2441 = vunpack.c.l.b16 %v1942
        %v2442 = vunpack.c.h.b16 %v1942
        %v2443 = vunpack.c.l.b16 %v1943
        %v2444 = vunpack.c.h.b16 %v1943
        %v2445 = vunpack.c.l.b16 %v1944
        %v2446 = vunpack.c.h.b16 %v1944
        %v2447 = vunpack.c.l.b16 %v1945
        %v2448 = vunpack.c.h.b16 %v1945
        %v2449 = vunpack.c.l.b16 %v1946
        %v2450 = vunpack.c.h.b16 %v1946
        %v2451 = vunpack.c.l.b16 %v1947
        %v2452 = vunpack.c.h.b16 %v1947
        %v2453 = vunpack.c.l.b16 %v1948
        %v2454 = vunpack.c.h.b16 %v1948
        %v2455 = vunpack.c.l.b16 %v1949
        %v2456 = vunpack.c.h.b16 %v1949
        %v2457 = vunpack.c.l.b16 %v1950
        %v2458 = vunpack.c.h.b16 %v1950
        %v2459 = vunpack.c.l.b16 %v1951
        %v2460 = vunpack.c.h.b16 %v1951
        %v2461 = vunpack.c.l.b16 %v1952
        %v2462 = vunpack.c.h.b16 %v1952
        %v2463 = vunpack.c.l.b16 %v1953
        %v2464 = vunpack.c.h.b16 %v1953
        %v2465 = vunpack.c.l.b16 %v1954
        %v2466 = vunpack.c.h.b16 %v1954
        %v2467 = vunpack.c.l.b16 %v1955
        %v2468 = vunpack.c.h.b16 %v1955
        %v2469 = vpack.c.b16 %v2217, %v2213
        %v2470 = vpack.c.b16 %v2218, %v2214
        %v2471 = vpack.c.b16 %v2219, %v2215
        %v2472 = vpack.c.b16 %v2220, %v2216
        %v2473 = vpack.c.b16 %v2225, %v2221
        %v2474 = vpack.c.b16 %v2226, %v2222
        %v2475 = vpack.c.b16 %v2227, %v2223
        %v2476 = vpack.c.b16 %v2228, %v2224
        %v2477 = vpack.c.b16 %v2233, %v2229
        %v2478 = vpack.c.b16 %v2234, %v2230
        %v2479 = vpack.c.b16 %v2235, %v2231
        %v2480 = vpack.c.b16 %v2236, %v2232
        %v2481 = vpack.c.b16 %v2241, %v2237
        %v2482 = vpack.c.b16 %v2242, %v2238
        %v2483 = vpack.c.b16 %v2243, %v2239
        %v2484 = vpack.c.b16 %v2244, %v2240
        %v2485 = vpack.c.b16 %v2249, %v2245
        %v2486 = vpack.c.b16 %v2250, %v2246
        %v2487 = vpack.c.b16 %v2251, %v2247
        %v2488 = vpack.c.b16 %v2252, %v2248
        %v2489 = vpack.c.b16 %v2257, %v2253
        %v2490 = vpack.c.b16 %v2258, %v2254
        %v2491 = vpack.c.b16 %v2259, %v2255
        %v2492 = vpack.c.b16 %v2260, %v2256
        %v2493 = vpack.c.b16 %v2265, %v2261
        %v2494 = vpack.c.b16 %v2266, %v2262
        %v2495 = vpack.c.b16 %v2267, %v2263
        %v2496 = vpack.c.b16 %v2268, %v2264
        %v2497 = vpack.c.b16 %v2273, %v2269
        %v2498 = vpack.c.b16 %v2274, %v2270
        %v2499 = vpack.c.b16 %v2275, %v2271
        %v2500 = vpack.c.b16 %v2276, %v2272
        %v2501 = vpack.c.b16 %v2281, %v2277
        %v2502 = vpack.c.b16 %v2282, %v2278
        %v2503 = vpack.c.b16 %v2283, %v2279
        %v2504 = vpack.c.b16 %v2284, %v2280
        %v2505 = vpack.c.b16 %v2289, %v2285
        %v2506 = vpack.c.b16 %v2290, %v2286
        %v2507 = vpack.c.b16 %v2291, %v2287
        %v2508 = vpack.c.b16 %v2292, %v2288
        %v2509 = vpack.c.b16 %v2297, %v2293
        %v2510 = vpack.c.b16 %v2298, %v2294
        %v2511 = vpack.c.b16 %v2299, %v2295
        %v2512 = vpack.c.b16 %v2300, %v2296
        %v2513 = vpack.c.b16 %v2305, %v2301
        %v2514 = vpack.c.b16 %v2306, %v2302
        %v2515 = vpack.c.b16 %v2307, %v2303
        %v2516 = vpack.c.b16 %v2308, %v2304
        %v2517 = vpack.c.b16 %v2313, %v2309
        %v2518 = vpack.c.b16 %v2314, %v2310
        %v2519 = vpack.c.b16 %v2315, %v2311
        %v2520 = vpack.c.b16 %v2316, %v2312
        %v2521 = vpack.c.b16 %v2321, %v2317
        %v2522 = vpack.c.b16 %v2322, %v2318
        %v2523 = vpack.c.b16 %v2323, %v2319
        %v2524 = vpack.c.b16 %v2324, %v2320
        %v2525 = vpack.c.b16 %v2329, %v2325
        %v2526 = vpack.c.b16 %v2330, %v2326
        %v2527 = vpack.c.b16 %v2331, %v2327
        %v2528 = vpack.c.b16 %v2332, %v2328
        %v2529 = vpack.c.b16 %v2337, %v2333
        %v2530 = vpack.c.b16 %v2338, %v2334
        %v2531 = vpack.c.b16 %v2339, %v2335
        %v2532 = vpack.c.b16 %v2340, %v2336
        %v2533 = vpack.c.b16 %v2345, %v2341
        %v2534 = vpack.c.b16 %v2346, %v2342
        %v2535 = vpack.c.b16 %v2347, %v2343
        %v2536 = vpack.c.b16 %v2348, %v2344
        %v2537 = vpack.c.b16 %v2353, %v2349
        %v2538 = vpack.c.b16 %v2354, %v2350
        %v2539 = vpack.c.b16 %v2355, %v2351
        %v2540 = vpack.c.b16 %v2356, %v2352
        %v2541 = vpack.c.b16 %v2361, %v2357
        %v2542 = vpack.c.b16 %v2362, %v2358
        %v2543 = vpack.c.b16 %v2363, %v2359
        %v2544 = vpack.c.b16 %v2364, %v2360
        %v2545 = vpack.c.b16 %v2369, %v2365
        %v2546 = vpack.c.b16 %v2370, %v2366
        %v2547 = vpack.c.b16 %v2371, %v2367
        %v2548 = vpack.c.b16 %v2372, %v2368
        %v2549 = vpack.c.b16 %v2377, %v2373
        %v2550 = vpack.c.b16 %v2378, %v2374
        %v2551 = vpack.c.b16 %v2379, %v2375
        %v2552 = vpack.c.b16 %v2380, %v2376
        %v2553 = vpack.c.b16 %v2385, %v2381
        %v2554 = vpack.c.b16 %v2386, %v2382
        %v2555 = vpack.c.b16 %v2387, %v2383
        %v2556 = vpack.c.b16 %v2388, %v2384
        %v2557 = vpack.c.b16 %v2393, %v2389
        %v2558 = vpack.c.b16 %v2394, %v2390
        %v2559 = vpack.c.b16 %v2395, %v2391
        %v2560 = vpack.c.b16 %v2396, %v2392
        %v2561 = vpack.c.b16 %v2401, %v2397
        %v2562 = vpack.c.b16 %v2402, %v2398
        %v2563 = vpack.c.b16 %v2403, %v2399
        %v2564 = vpack.c.b16 %v2404, %v2400
        %v2565 = vpack.c.b16 %v2409, %v2405
        %v2566 = vpack.c.b16 %v2410, %v2406
        %v2567 = vpack.c.b16 %v2411, %v2407
        %v2568 = vpack.c.b16 %v2412, %v2408
        %v2569 = vpack.c.b16 %v2417, %v2413
        %v2570 = vpack.c.b16 %v2418, %v2414
        %v2571 = vpack.c.b16 %v2419, %v2415
        %v2572 = vpack.c.b16 %v2420, %v2416
        %v2573 = vpack.c.b16 %v2425, %v2421
        %v2574 = vpack.c.b16 %v2426, %v2422
        %v2575 = vpack.c.b16 %v2427, %v2423
        %v2576 = vpack.c.b16 %v2428, %v2424
        %v2577 = vpack.c.b16 %v2433, %v2429
        %v2578 = vpack.c.b16 %v2434, %v2430
        %v2579 = vpack.c.b16 %v2435, %v2431
        %v2580 = vpack.c.b16 %v2436, %v2432
        %v2581 = vpack.c.b16 %v2441, %v2437
        %v2582 = vpack.c.b16 %v2442, %v2438
        %v2583 = vpack.c.b16 %v2443, %v2439
        %v2584 = vpack.c.b16 %v2444, %v2440
        %v2585 = vpack.c.b16 %v2449, %v2445
        %v2586 = vpack.c.b16 %v2450, %v2446
        %v2587 = vpack.c.b16 %v2451, %v2447
        %v2588 = vpack.c.b16 %v2452, %v2448
        %v2589 = vpack.c.b16 %v2457, %v2453
        %v2590 = vpack.c.b16 %v2458, %v2454
        %v2591 = vpack.c.b16 %v2459, %v2455
        %v2592 = vpack.c.b16 %v2460, %v2456
        %v2593 = vpack.c.b16 %v2465, %v2461
        %v2594 = vpack.c.b16 %v2466, %v2462
        %v2595 = vpack.c.b16 %v2467, %v2463
        %v2596 = vpack.c.b16 %v2468, %v2464
        %2725 = vmatprep.subr.bf16.mxu0 %v2470
        %2726 = vmatpush1.bf16.msra.mxu0 %v2469
        %2727 = vmatprep.subr.bf16.mxu0 %v2474
        %2728 = vmatpush1.bf16.msra.mxu0 %v2473
        %2729 = vmatprep.subr.bf16.mxu0 %v2478
        %2730 = vmatpush1.bf16.msra.mxu0 %v2477
        %2731 = vmatprep.subr.bf16.mxu0 %v2482
        %2732 = vmatpush1.bf16.msra.mxu0 %v2481
        %2733 = vmatprep.subr.bf16.mxu0 %v2486
        %2734 = vmatpush1.bf16.msra.mxu0 %v2485
        %2735 = vmatprep.subr.bf16.mxu0 %v2490
        %2736 = vmatpush1.bf16.msra.mxu0 %v2489
        %2737 = vmatprep.subr.bf16.mxu0 %v2494
        %2738 = vmatpush1.bf16.msra.mxu0 %v2493
        %2739 = vmatprep.subr.bf16.mxu0 %v2498
        %2740 = vmatpush1.bf16.msra.mxu0 %v2497
        %2741 = vmatprep.subr.bf16.mxu0 %v2502
        %2742 = vmatpush1.bf16.msra.mxu0 %v2501
        %2743 = vmatprep.subr.bf16.mxu0 %v2506
        %2744 = vmatpush1.bf16.msra.mxu0 %v2505
        %2745 = vmatprep.subr.bf16.mxu0 %v2510
        %2746 = vmatpush1.bf16.msra.mxu0 %v2509
        %2747 = vmatprep.subr.bf16.mxu0 %v2514
        %2748 = vmatpush1.bf16.msra.mxu0 %v2513
        %2749 = vmatprep.subr.bf16.mxu0 %v2518
        %2750 = vmatpush1.bf16.msra.mxu0 %v2517
        %2751 = vmatprep.subr.bf16.mxu0 %v2522
        %2752 = vmatpush1.bf16.msra.mxu0 %v2521
        %2753 = vmatprep.subr.bf16.mxu0 %v2526
        %2754 = vmatpush1.bf16.msra.mxu0 %v2525
        %2755 = vmatprep.subr.bf16.mxu0 %v2530
        %2756 = vmatpush1.bf16.msra.mxu0 %v2529
        %2757 = vmatprep.mubr.bf16.mxu0 %v2078
        %2758 = vmatmul.mubr.bf16.gmra.mrb[0].mxu0 %v2077
        %v2759 = vpop.f32.mrb[0].mxu0
        %v2760 = vadd.f32 %v1961, %v2759
        %v2761 = vpop.f32.mrb[0].mxu0
        %v2762 = vadd.f32 %v1965, %v2761
        %v2763 = vpop.f32.mrb[0].mxu0
        %v2764 = vpop.f32.mrb[0].mxu0
        %2765 = vdwg.mxu0
        %2766 = vmatprep.subr.bf16.mxu0 %v2534
        %2767 = vmatpush1.bf16.msra.mxu0 %v2533
        %2768 = vmatprep.subr.bf16.mxu0 %v2538
        %2769 = vmatpush1.bf16.msra.mxu0 %v2537
        %2770 = vmatprep.subr.bf16.mxu0 %v2542
        %2771 = vmatpush1.bf16.msra.mxu0 %v2541
        %2772 = vmatprep.subr.bf16.mxu0 %v2546
        %2773 = vmatpush1.bf16.msra.mxu0 %v2545
        %2774 = vmatprep.subr.bf16.mxu0 %v2550
        %2775 = vmatpush1.bf16.msra.mxu0 %v2549
        %2776 = vmatprep.subr.bf16.mxu0 %v2554
        %2777 = vmatpush1.bf16.msra.mxu0 %v2553
        %2778 = vmatprep.subr.bf16.mxu0 %v2558
        %2779 = vmatpush1.bf16.msra.mxu0 %v2557
        %2780 = vmatprep.subr.bf16.mxu0 %v2562
        %2781 = vmatpush1.bf16.msra.mxu0 %v2561
        %2782 = vmatprep.subr.bf16.mxu0 %v2566
        %2783 = vmatpush1.bf16.msra.mxu0 %v2565
        %2784 = vmatprep.subr.bf16.mxu0 %v2570
        %2785 = vmatpush1.bf16.msra.mxu0 %v2569
        %2786 = vmatprep.subr.bf16.mxu0 %v2574
        %2787 = vmatpush1.bf16.msra.mxu0 %v2573
        %2788 = vmatprep.subr.bf16.mxu0 %v2578
        %2789 = vmatpush1.bf16.msra.mxu0 %v2577
        %2790 = vmatprep.subr.bf16.mxu0 %v2582
        %2791 = vmatpush1.bf16.msra.mxu0 %v2581
        %2792 = vmatprep.subr.bf16.mxu0 %v2586
        %2793 = vmatpush1.bf16.msra.mxu0 %v2585
        %2794 = vmatprep.subr.bf16.mxu0 %v2590
        %2795 = vmatpush1.bf16.msra.mxu0 %v2589
        %2796 = vmatprep.subr.bf16.mxu0 %v2594
        %2797 = vmatpush1.bf16.msra.mxu0 %v2593
        %2798 = vmatprep.mubr.bf16.mxu0 %v2080
        %2799 = vmatmul.mubr.bf16.gmra.mrb[0].mxu0 %v2079
        %v2800 = vpop.f32.mrb[0].mxu0
        %v2801 = vadd.f32 %v2760, %v2800
        %v2802 = vpop.f32.mrb[0].mxu0
        %v2803 = vadd.f32 %v2762, %v2802
        %v2804 = vpop.f32.mrb[0].mxu0
        %v2805 = vpop.f32.mrb[0].mxu0
        %2806 = vdwg.mxu0
        %2807 = vmatprep.subr.bf16.mxu0 %v2472
        %2808 = vmatpush1.bf16.msra.mxu0 %v2471
        %2809 = vmatprep.subr.bf16.mxu0 %v2476
        %2810 = vmatpush1.bf16.msra.mxu0 %v2475
        %2811 = vmatprep.subr.bf16.mxu0 %v2480
        %2812 = vmatpush1.bf16.msra.mxu0 %v2479
        %2813 = vmatprep.subr.bf16.mxu0 %v2484
        %2814 = vmatpush1.bf16.msra.mxu0 %v2483
        %2815 = vmatprep.subr.bf16.mxu0 %v2488
        %2816 = vmatpush1.bf16.msra.mxu0 %v2487
        %2817 = vmatprep.subr.bf16.mxu0 %v2492
        %2818 = vmatpush1.bf16.msra.mxu0 %v2491
        %2819 = vmatprep.subr.bf16.mxu0 %v2496
        %2820 = vmatpush1.bf16.msra.mxu0 %v2495
        %2821 = vmatprep.subr.bf16.mxu0 %v2500
        %2822 = vmatpush1.bf16.msra.mxu0 %v2499
        %2823 = vmatprep.subr.bf16.mxu0 %v2504
        %2824 = vmatpush1.bf16.msra.mxu0 %v2503
        %2825 = vmatprep.subr.bf16.mxu0 %v2508
        %2826 = vmatpush1.bf16.msra.mxu0 %v2507
        %2827 = vmatprep.subr.bf16.mxu0 %v2512
        %2828 = vmatpush1.bf16.msra.mxu0 %v2511
        %2829 = vmatprep.subr.bf16.mxu0 %v2516
        %2830 = vmatpush1.bf16.msra.mxu0 %v2515
        %2831 = vmatprep.subr.bf16.mxu0 %v2520
        %2832 = vmatpush1.bf16.msra.mxu0 %v2519
        %2833 = vmatprep.subr.bf16.mxu0 %v2524
        %2834 = vmatpush1.bf16.msra.mxu0 %v2523
        %2835 = vmatprep.subr.bf16.mxu0 %v2528
        %2836 = vmatpush1.bf16.msra.mxu0 %v2527
        %2837 = vmatprep.subr.bf16.mxu0 %v2532
        %2838 = vmatpush1.bf16.msra.mxu0 %v2531
        %2839 = vmatprep.mubr.bf16.mxu0 %v2078
        %2840 = vmatmul.mubr.bf16.gmra.mrb[0].mxu0 %v2077
        %v2841 = vpop.f32.mrb[0].mxu0
        %v2842 = vadd.f32 %v1969, %v2841
        %v2843 = vpop.f32.mrb[0].mxu0
        %v2844 = vadd.f32 %v1973, %v2843
        %v2845 = vpop.f32.mrb[0].mxu0
        %v2846 = vpop.f32.mrb[0].mxu0
        %2847 = vdwg.mxu0
        %2848 = vmatprep.subr.bf16.mxu0 %v2536
        %2849 = vmatpush1.bf16.msra.mxu0 %v2535
        %2850 = vmatprep.subr.bf16.mxu0 %v2540
        %2851 = vmatpush1.bf16.msra.mxu0 %v2539
        %2852 = vmatprep.subr.bf16.mxu0 %v2544
        %2853 = vmatpush1.bf16.msra.mxu0 %v2543
        %2854 = vmatprep.subr.bf16.mxu0 %v2548
        %2855 = vmatpush1.bf16.msra.mxu0 %v2547
        %2856 = vmatprep.subr.bf16.mxu0 %v2552
        %2857 = vmatpush1.bf16.msra.mxu0 %v2551
        %2858 = vmatprep.subr.bf16.mxu0 %v2556
        %2859 = vmatpush1.bf16.msra.mxu0 %v2555
        %2860 = vmatprep.subr.bf16.mxu0 %v2560
        %2861 = vmatpush1.bf16.msra.mxu0 %v2559
        %2862 = vmatprep.subr.bf16.mxu0 %v2564
        %2863 = vmatpush1.bf16.msra.mxu0 %v2563
        %2864 = vmatprep.subr.bf16.mxu0 %v2568
        %2865 = vmatpush1.bf16.msra.mxu0 %v2567
        %2866 = vmatprep.subr.bf16.mxu0 %v2572
        %2867 = vmatpush1.bf16.msra.mxu0 %v2571
        %2868 = vmatprep.subr.bf16.mxu0 %v2576
        %2869 = vmatpush1.bf16.msra.mxu0 %v2575
        %2870 = vmatprep.subr.bf16.mxu0 %v2580
        %2871 = vmatpush1.bf16.msra.mxu0 %v2579
        %2872 = vmatprep.subr.bf16.mxu0 %v2584
        %2873 = vmatpush1.bf16.msra.mxu0 %v2583
        %2874 = vmatprep.subr.bf16.mxu0 %v2588
        %2875 = vmatpush1.bf16.msra.mxu0 %v2587
        %2876 = vmatprep.subr.bf16.mxu0 %v2592
        %2877 = vmatpush1.bf16.msra.mxu0 %v2591
        %2878 = vmatprep.subr.bf16.mxu0 %v2596
        %2879 = vmatpush1.bf16.msra.mxu0 %v2595
        %2880 = vmatprep.mubr.bf16.mxu0 %v2080
        %2881 = vmatmul.mubr.bf16.gmra.mrb[0].mxu0 %v2079
        %v2882 = vpop.f32.mrb[0].mxu0
        %v2883 = vadd.f32 %v2842, %v2882
        %v2884 = vpop.f32.mrb[0].mxu0
        %v2885 = vadd.f32 %v2844, %v2884
        %v2886 = vpop.f32.mrb[0].mxu0
        %v2887 = vpop.f32.mrb[0].mxu0
        %2888 = vdwg.mxu0
        %v2889 = vmax.f32 %v2801, 0.0
        %v2890 = vmax.f32 %v2803, 0.0
        %v2891 = vmax.f32 %v2883, 0.0
        %v2892 = vmax.f32 %v2885, 0.0
        %v2893 = vpack.c.bf16 %v2889, %v2889
        %v2894 = vpack.c.bf16 %v2890, %v2890
        %v2895 = vpack.c.bf16 %v2891, %v2891
        %v2896 = vpack.c.bf16 %v2892, %v2892
        %v2897 = vld [vmem:[%s6] sm:$0xf]
        %v2898 = vld [vmem:[%s6 + $0x4] sm:$0xf]
        %v2899 = vld [vmem:[%s6 + $0x8] sm:$0xf]
        %v2900 = vld [vmem:[%s6 + $0xc] sm:$0xf]
        %v2901 = vld [vmem:[%s6 + $0x10] sm:$0xf]
        %v2902 = vld [vmem:[%s6 + $0x14] sm:$0xf]
        %v2903 = vld [vmem:[%s6 + $0x18] sm:$0xf]
        %v2904 = vld [vmem:[%s6 + $0x1c] sm:$0xf]
        %v2905 = vld [vmem:[%s6 + $0x20] sm:$0xf]
        %v2906 = vld [vmem:[%s6 + $0x24] sm:$0xf]
        %v2907 = vld [vmem:[%s6 + $0x28] sm:$0xf]
        %v2908 = vld [vmem:[%s6 + $0x2c] sm:$0xf]
        %v2909 = vld [vmem:[%s6 + $0x30] sm:$0xf]
        %v2910 = vld [vmem:[%s6 + $0x34] sm:$0xf]
        %v2911 = vld [vmem:[%s6 + $0x38] sm:$0xf]
        %v2912 = vld [vmem:[%s6 + $0x3c] sm:$0xf]
        %v2913 = vld [vmem:[%s6 + $0x40] sm:$0xf]
        %v2914 = vld [vmem:[%s6 + $0x44] sm:$0xf]
        %v2915 = vld [vmem:[%s6 + $0x48] sm:$0xf]
        %v2916 = vld [vmem:[%s6 + $0x4c] sm:$0xf]
        %v2917 = vld [vmem:[%s6 + $0x50] sm:$0xf]
        %v2918 = vld [vmem:[%s6 + $0x54] sm:$0xf]
        %v2919 = vld [vmem:[%s6 + $0x58] sm:$0xf]
        %v2920 = vld [vmem:[%s6 + $0x5c] sm:$0xf]
        %v2921 = vld [vmem:[%s6 + $0x60] sm:$0xf]
        %v2922 = vld [vmem:[%s6 + $0x64] sm:$0xf]
        %v2923 = vld [vmem:[%s6 + $0x68] sm:$0xf]
        %v2924 = vld [vmem:[%s6 + $0x6c] sm:$0xf]
        %v2925 = vld [vmem:[%s6 + $0x70] sm:$0xf]
        %v2926 = vld [vmem:[%s6 + $0x74] sm:$0xf]
        %v2927 = vld [vmem:[%s6 + $0x78] sm:$0xf]
        %v2928 = vld [vmem:[%s6 + $0x7c] sm:$0xf]
        %v2929 = vld [vmem:[%s6 + $0x80] sm:$0xf]
        %v2930 = vld [vmem:[%s6 + $0x84] sm:$0xf]
        %v2931 = vld [vmem:[%s6 + $0x88] sm:$0xf]
        %v2932 = vld [vmem:[%s6 + $0x8c] sm:$0xf]
        %v2933 = vld [vmem:[%s6 + $0x90] sm:$0xf]
        %v2934 = vld [vmem:[%s6 + $0x94] sm:$0xf]
        %v2935 = vld [vmem:[%s6 + $0x98] sm:$0xf]
        %v2936 = vld [vmem:[%s6 + $0x9c] sm:$0xf]
        %v2937 = vld [vmem:[%s6 + $0xa0] sm:$0xf]
        %v2938 = vld [vmem:[%s6 + $0xa4] sm:$0xf]
        %v2939 = vld [vmem:[%s6 + $0xa8] sm:$0xf]
        %v2940 = vld [vmem:[%s6 + $0xac] sm:$0xf]
        %v2941 = vld [vmem:[%s6 + $0xb0] sm:$0xf]
        %v2942 = vld [vmem:[%s6 + $0xb4] sm:$0xf]
        %v2943 = vld [vmem:[%s6 + $0xb8] sm:$0xf]
        %v2944 = vld [vmem:[%s6 + $0xbc] sm:$0xf]
        %v2945 = vld [vmem:[%s6 + $0xc0] sm:$0xf]
        %v2946 = vld [vmem:[%s6 + $0xc4] sm:$0xf]
        %v2947 = vld [vmem:[%s6 + $0xc8] sm:$0xf]
        %v2948 = vld [vmem:[%s6 + $0xcc] sm:$0xf]
        %v2949 = vld [vmem:[%s6 + $0xd0] sm:$0xf]
        %v2950 = vld [vmem:[%s6 + $0xd4] sm:$0xf]
        %v2951 = vld [vmem:[%s6 + $0xd8] sm:$0xf]
        %v2952 = vld [vmem:[%s6 + $0xdc] sm:$0xf]
        %v2953 = vld [vmem:[%s6 + $0xe0] sm:$0xf]
        %v2954 = vld [vmem:[%s6 + $0xe4] sm:$0xf]
        %v2955 = vld [vmem:[%s6 + $0xe8] sm:$0xf]
        %v2956 = vld [vmem:[%s6 + $0xec] sm:$0xf]
        %v2957 = vld [vmem:[%s6 + $0xf0] sm:$0xf]
        %v2958 = vld [vmem:[%s6 + $0xf4] sm:$0xf]
        %v2959 = vld [vmem:[%s6 + $0xf8] sm:$0xf]
        %v2960 = vld [vmem:[%s6 + $0xfc] sm:$0xf]
        %v2961 = vld [vmem:[%s7] sm:$0x1]
        %v2963 = vlaneseq
        %v2964 = vshrl.u32 %v2963, 7
        %v2965 = vsub.s32 0, %v2964
        %v2966 = vrot.slane %v2961, %v2965
        %v3032 = vunpack.c.l.b16 %v2897
        %v3033 = vunpack.c.l.b16 %v2898
        %v3034 = vunpack.c.l.b16 %v2899
        %v3035 = vunpack.c.l.b16 %v2900
        %v3036 = vunpack.c.l.b16 %v2901
        %v3037 = vunpack.c.l.b16 %v2902
        %v3038 = vunpack.c.l.b16 %v2903
        %v3039 = vunpack.c.l.b16 %v2904
        %v3040 = vunpack.c.l.b16 %v2905
        %v3041 = vunpack.c.l.b16 %v2906
        %v3042 = vunpack.c.l.b16 %v2907
        %v3043 = vunpack.c.l.b16 %v2908
        %v3044 = vunpack.c.l.b16 %v2909
        %v3045 = vunpack.c.l.b16 %v2910
        %v3046 = vunpack.c.l.b16 %v2911
        %v3047 = vunpack.c.l.b16 %v2912
        %v3048 = vunpack.c.l.b16 %v2913
        %v3049 = vunpack.c.l.b16 %v2914
        %v3050 = vunpack.c.l.b16 %v2915
        %v3051 = vunpack.c.l.b16 %v2916
        %v3052 = vunpack.c.l.b16 %v2917
        %v3053 = vunpack.c.l.b16 %v2918
        %v3054 = vunpack.c.l.b16 %v2919
        %v3055 = vunpack.c.l.b16 %v2920
        %v3056 = vunpack.c.l.b16 %v2921
        %v3057 = vunpack.c.l.b16 %v2922
        %v3058 = vunpack.c.l.b16 %v2923
        %v3059 = vunpack.c.l.b16 %v2924
        %v3060 = vunpack.c.l.b16 %v2925
        %v3061 = vunpack.c.l.b16 %v2926
        %v3062 = vunpack.c.l.b16 %v2927
        %v3063 = vunpack.c.l.b16 %v2928
        %v3064 = vunpack.c.l.b16 %v2929
        %v3065 = vunpack.c.l.b16 %v2930
        %v3066 = vunpack.c.l.b16 %v2931
        %v3067 = vunpack.c.l.b16 %v2932
        %v3068 = vunpack.c.l.b16 %v2933
        %v3069 = vunpack.c.l.b16 %v2934
        %v3070 = vunpack.c.l.b16 %v2935
        %v3071 = vunpack.c.l.b16 %v2936
        %v3072 = vunpack.c.l.b16 %v2937
        %v3073 = vunpack.c.l.b16 %v2938
        %v3074 = vunpack.c.l.b16 %v2939
        %v3075 = vunpack.c.l.b16 %v2940
        %v3076 = vunpack.c.l.b16 %v2941
        %v3077 = vunpack.c.l.b16 %v2942
        %v3078 = vunpack.c.l.b16 %v2943
        %v3079 = vunpack.c.l.b16 %v2944
        %v3080 = vunpack.c.l.b16 %v2945
        %v3081 = vunpack.c.l.b16 %v2946
        %v3082 = vunpack.c.l.b16 %v2947
        %v3083 = vunpack.c.l.b16 %v2948
        %v3084 = vunpack.c.l.b16 %v2949
        %v3085 = vunpack.c.l.b16 %v2950
        %v3086 = vunpack.c.l.b16 %v2951
        %v3087 = vunpack.c.l.b16 %v2952
        %v3088 = vunpack.c.l.b16 %v2953
        %v3089 = vunpack.c.l.b16 %v2954
        %v3090 = vunpack.c.l.b16 %v2955
        %v3091 = vunpack.c.l.b16 %v2956
        %v3092 = vunpack.c.l.b16 %v2957
        %v3093 = vunpack.c.l.b16 %v2958
        %v3094 = vunpack.c.l.b16 %v2959
        %v3095 = vunpack.c.l.b16 %v2960
        %v3096 = vpack.c.b16 %v3033, %v3032
        %v3097 = vpack.c.b16 %v3035, %v3034
        %v3098 = vpack.c.b16 %v3037, %v3036
        %v3099 = vpack.c.b16 %v3039, %v3038
        %v3100 = vpack.c.b16 %v3041, %v3040
        %v3101 = vpack.c.b16 %v3043, %v3042
        %v3102 = vpack.c.b16 %v3045, %v3044
        %v3103 = vpack.c.b16 %v3047, %v3046
        %v3104 = vpack.c.b16 %v3049, %v3048
        %v3105 = vpack.c.b16 %v3051, %v3050
        %v3106 = vpack.c.b16 %v3053, %v3052
        %v3107 = vpack.c.b16 %v3055, %v3054
        %v3108 = vpack.c.b16 %v3057, %v3056
        %v3109 = vpack.c.b16 %v3059, %v3058
        %v3110 = vpack.c.b16 %v3061, %v3060
        %v3111 = vpack.c.b16 %v3063, %v3062
        %v3112 = vpack.c.b16 %v3065, %v3064
        %v3113 = vpack.c.b16 %v3067, %v3066
        %v3114 = vpack.c.b16 %v3069, %v3068
        %v3115 = vpack.c.b16 %v3071, %v3070
        %v3116 = vpack.c.b16 %v3073, %v3072
        %v3117 = vpack.c.b16 %v3075, %v3074
        %v3118 = vpack.c.b16 %v3077, %v3076
        %v3119 = vpack.c.b16 %v3079, %v3078
        %v3120 = vpack.c.b16 %v3081, %v3080
        %v3121 = vpack.c.b16 %v3083, %v3082
        %v3122 = vpack.c.b16 %v3085, %v3084
        %v3123 = vpack.c.b16 %v3087, %v3086
        %v3124 = vpack.c.b16 %v3089, %v3088
        %v3125 = vpack.c.b16 %v3091, %v3090
        %v3126 = vpack.c.b16 %v3093, %v3092
        %v3127 = vpack.c.b16 %v3095, %v3094
        %3160 = vmatprep.subr.bf16.mxu0 0
        %3161 = vmatpush1.bf16.msra.mxu0 %v3096
        %3162 = vmatprep.subr.bf16.mxu0 0
        %3163 = vmatpush1.bf16.msra.mxu0 %v3097
        %3164 = vmatprep.subr.bf16.mxu0 0
        %3165 = vmatpush1.bf16.msra.mxu0 %v3098
        %3166 = vmatprep.subr.bf16.mxu0 0
        %3167 = vmatpush1.bf16.msra.mxu0 %v3099
        %3168 = vmatprep.subr.bf16.mxu0 0
        %3169 = vmatpush1.bf16.msra.mxu0 %v3100
        %3170 = vmatprep.subr.bf16.mxu0 0
        %3171 = vmatpush1.bf16.msra.mxu0 %v3101
        %3172 = vmatprep.subr.bf16.mxu0 0
        %3173 = vmatpush1.bf16.msra.mxu0 %v3102
        %3174 = vmatprep.subr.bf16.mxu0 0
        %3175 = vmatpush1.bf16.msra.mxu0 %v3103
        %3176 = vmatprep.subr.bf16.mxu0 0
        %3177 = vmatpush1.bf16.msra.mxu0 %v3104
        %3178 = vmatprep.subr.bf16.mxu0 0
        %3179 = vmatpush1.bf16.msra.mxu0 %v3105
        %3180 = vmatprep.subr.bf16.mxu0 0
        %3181 = vmatpush1.bf16.msra.mxu0 %v3106
        %3182 = vmatprep.subr.bf16.mxu0 0
        %3183 = vmatpush1.bf16.msra.mxu0 %v3107
        %3184 = vmatprep.subr.bf16.mxu0 0
        %3185 = vmatpush1.bf16.msra.mxu0 %v3108
        %3186 = vmatprep.subr.bf16.mxu0 0
        %3187 = vmatpush1.bf16.msra.mxu0 %v3109
        %3188 = vmatprep.subr.bf16.mxu0 0
        %3189 = vmatpush1.bf16.msra.mxu0 %v3110
        %3190 = vmatprep.subr.bf16.mxu0 0
        %3191 = vmatpush1.bf16.msra.mxu0 %v3111
        %3192 = vmatprep.mubr.bf16.mxu0 %v2894
        %3193 = vmatmul.mubr.bf16.gmra.mrb[0].mxu0 %v2893
        %v3194 = vpop.f32.mrb[0].mxu0
        %v3195 = vadd.f32 %v2966, %v3194
        %v3196 = vpop.f32.mrb[0].mxu0
        %v3197 = vpop.f32.mrb[0].mxu0
        %v3198 = vpop.f32.mrb[0].mxu0
        %3199 = vdwg.mxu0
        %3200 = vmatprep.subr.bf16.mxu0 0
        %3201 = vmatpush1.bf16.msra.mxu0 %v3112
        %3202 = vmatprep.subr.bf16.mxu0 0
        %3203 = vmatpush1.bf16.msra.mxu0 %v3113
        %3204 = vmatprep.subr.bf16.mxu0 0
        %3205 = vmatpush1.bf16.msra.mxu0 %v3114
        %3206 = vmatprep.subr.bf16.mxu0 0
        %3207 = vmatpush1.bf16.msra.mxu0 %v3115
        %3208 = vmatprep.subr.bf16.mxu0 0
        %3209 = vmatpush1.bf16.msra.mxu0 %v3116
        %3210 = vmatprep.subr.bf16.mxu0 0
        %3211 = vmatpush1.bf16.msra.mxu0 %v3117
        %3212 = vmatprep.subr.bf16.mxu0 0
        %3213 = vmatpush1.bf16.msra.mxu0 %v3118
        %3214 = vmatprep.subr.bf16.mxu0 0
        %3215 = vmatpush1.bf16.msra.mxu0 %v3119
        %3216 = vmatprep.subr.bf16.mxu0 0
        %3217 = vmatpush1.bf16.msra.mxu0 %v3120
        %3218 = vmatprep.subr.bf16.mxu0 0
        %3219 = vmatpush1.bf16.msra.mxu0 %v3121
        %3220 = vmatprep.subr.bf16.mxu0 0
        %3221 = vmatpush1.bf16.msra.mxu0 %v3122
        %3222 = vmatprep.subr.bf16.mxu0 0
        %3223 = vmatpush1.bf16.msra.mxu0 %v3123
        %3224 = vmatprep.subr.bf16.mxu0 0
        %3225 = vmatpush1.bf16.msra.mxu0 %v3124
        %3226 = vmatprep.subr.bf16.mxu0 0
        %3227 = vmatpush1.bf16.msra.mxu0 %v3125
        %3228 = vmatprep.subr.bf16.mxu0 0
        %3229 = vmatpush1.bf16.msra.mxu0 %v3126
        %3230 = vmatprep.subr.bf16.mxu0 0
        %3231 = vmatpush1.bf16.msra.mxu0 %v3127
        %3232 = vmatprep.mubr.bf16.mxu0 %v2896
        %3233 = vmatmul.mubr.bf16.gmra.mrb[0].mxu0 %v2895
        %v3234 = vpop.f32.mrb[0].mxu0
        %v3235 = vadd.f32 %v3195, %v3234
        %v3236 = vpop.f32.mrb[0].mxu0
        %v3237 = vpop.f32.mrb[0].mxu0
        %v3238 = vpop.f32.mrb[0].mxu0
        %3239 = vdwg.mxu0
        %v3240 = vmax.f32 %v3235, 0.0
        %v3241 = vld [vmem:[%s8] sm:$0xff]
        %v3242 = vld [vmem:[%s8 + $0x8] sm:$0xff]
        %v3243 = vld [vmem:[%s8 + $0x10] sm:$0xff]
        %v3244 = vld [vmem:[%s8 + $0x18] sm:$0xff]
        %v3245 = vld [vmem:[%s9] sm:$0x1]
        %v3247 = vlaneseq
        %v3248 = vshrl.u32 %v3247, 7
        %v3249 = vsub.s32 0, %v3248
        %v3250 = vrot.slane %v3245, %v3249
        %vm3252 = vcmask 261120
        %v3254 = vsel %vm3252, %v3240, 0
        %3256 = vmatprep.subr.mxu0 0.0
        %3257 = vmatpush1.msra.mxu0 %v3241
        %3258 = vmatprep.subr.mxu0 0.0
        %3259 = vmatpush1.msra.mxu0 %v3242
        %3260 = vmatprep.subr.mxu0 0.0
        %3261 = vmatpush1.msra.mxu0 %v3243
        %3262 = vmatprep.subr.mxu0 0.0
        %3263 = vmatpush1.msra.mxu0 %v3244
        %3264 = vmatprep.subr.mxu0 0.0
        %3265 = vmatpush1.msra.mxu0 0.0
        %3266 = vmatprep.subr.mxu0 0.0
        %3267 = vmatpush1.msra.mxu0 0.0
        %3268 = vmatprep.subr.mxu0 0.0
        %3269 = vmatpush1.msra.mxu0 0.0
        %3270 = vmatprep.subr.mxu0 0.0
        %3271 = vmatpush1.msra.mxu0 0.0
        %3272 = vmatprep.subr.mxu0 0.0
        %3273 = vmatpush1.msra.mxu0 0.0
        %3274 = vmatprep.subr.mxu0 0.0
        %3275 = vmatpush1.msra.mxu0 0.0
        %3276 = vmatprep.subr.mxu0 0.0
        %3277 = vmatpush1.msra.mxu0 0.0
        %3278 = vmatprep.subr.mxu0 0.0
        %3279 = vmatpush1.msra.mxu0 0.0
        %3280 = vmatprep.subr.mxu0 0.0
        %3281 = vmatpush1.msra.mxu0 0.0
        %3282 = vmatprep.subr.mxu0 0.0
        %3283 = vmatpush1.msra.mxu0 0.0
        %3284 = vmatprep.subr.mxu0 0.0
        %3285 = vmatpush1.msra.mxu0 0.0
        %3286 = vmatprep.subr.mxu0 0.0
        %3287 = vmatpush1.msra.mxu0 0.0
        %3288 = vmatprep.subr.mxu0 0.0
        %3289 = vmatpush1.msra.mxu0 0.0
        %3290 = vmatprep.subr.mxu0 0.0
        %3291 = vmatpush1.msra.mxu0 0.0
        %3292 = vmatprep.subr.mxu0 0.0
        %3293 = vmatpush1.msra.mxu0 0.0
        %3294 = vmatprep.subr.mxu0 0.0
        %3295 = vmatpush1.msra.mxu0 0.0
        %3296 = vmatprep.subr.mxu0 0.0
        %3297 = vmatpush1.msra.mxu0 0.0
        %3298 = vmatprep.subr.mxu0 0.0
        %3299 = vmatpush1.msra.mxu0 0.0
        %3300 = vmatprep.subr.mxu0 0.0
        %3301 = vmatpush1.msra.mxu0 0.0
        %3302 = vmatprep.subr.mxu0 0.0
        %3303 = vmatpush1.msra.mxu0 0.0
        %3304 = vmatprep.subr.mxu0 0.0
        %3305 = vmatpush1.msra.mxu0 0.0
        %3306 = vmatprep.subr.mxu0 0.0
        %3307 = vmatpush1.msra.mxu0 0.0
        %3308 = vmatprep.subr.mxu0 0.0
        %3309 = vmatpush1.msra.mxu0 0.0
        %3310 = vmatprep.subr.mxu0 0.0
        %3311 = vmatpush1.msra.mxu0 0.0
        %3312 = vmatprep.subr.mxu0 0.0
        %3313 = vmatpush1.msra.mxu0 0.0
        %3314 = vmatprep.subr.mxu0 0.0
        %3315 = vmatpush1.msra.mxu0 0.0
        %3316 = vmatprep.subr.mxu0 0.0
        %3317 = vmatpush1.msra.mxu0 0.0
        %3318 = vmatprep.subr.mxu0 0.0
        %3319 = vmatpush1.msra.mxu0 0.0
        %3320 = vmatprep.mubr.f32.mxu0 0.0
        %3321 = vmatmul.mubr.f32.gmra.mrb[0].mxu0 %v3254
        %v3322 = vpop.f32.mrb[0].mxu0
        %v3323 = vadd.f32 %v3250, %v3322
        %v3324 = vpop.f32.mrb[0].mxu0
        %3325 = vdwg.mxu0
        %v3326 = vmax.f32 %v3323, 0.0
        %v3327 = vld [vmem:[%s10] sm:$0xff]
        %v3328 = vld [vmem:[%s10 + $0x8] sm:$0xff]
        %v3329 = vld [vmem:[%s10 + $0x10] sm:$0xff]
        %v3330 = vld [vmem:[%s10 + $0x18] sm:$0xff]
        %v3331 = vld [vmem:[%s11] sm:$0x1]
        %v3333 = vlaneseq
        %v3334 = vshrl.u32 %v3333, 7
        %v3335 = vsub.s32 0, %v3334
        %v3336 = vrot.slane %v3331, %v3335
        %v3339 = vsel %vm3252, %v3326, 0
        %3341 = vmatprep.subr.mxu0 0.0
        %3342 = vmatpush1.msra.mxu0 %v3327
        %3343 = vmatprep.subr.mxu0 0.0
        %3344 = vmatpush1.msra.mxu0 %v3328
        %3345 = vmatprep.subr.mxu0 0.0
        %3346 = vmatpush1.msra.mxu0 %v3329
        %3347 = vmatprep.subr.mxu0 0.0
        %3348 = vmatpush1.msra.mxu0 %v3330
        %3349 = vmatprep.subr.mxu0 0.0
        %3350 = vmatpush1.msra.mxu0 0.0
        %3351 = vmatprep.subr.mxu0 0.0
        %3352 = vmatpush1.msra.mxu0 0.0
        %3353 = vmatprep.subr.mxu0 0.0
        %3354 = vmatpush1.msra.mxu0 0.0
        %3355 = vmatprep.subr.mxu0 0.0
        %3356 = vmatpush1.msra.mxu0 0.0
        %3357 = vmatprep.subr.mxu0 0.0
        %3358 = vmatpush1.msra.mxu0 0.0
        %3359 = vmatprep.subr.mxu0 0.0
        %3360 = vmatpush1.msra.mxu0 0.0
        %3361 = vmatprep.subr.mxu0 0.0
        %3362 = vmatpush1.msra.mxu0 0.0
        %3363 = vmatprep.subr.mxu0 0.0
        %3364 = vmatpush1.msra.mxu0 0.0
        %3365 = vmatprep.subr.mxu0 0.0
        %3366 = vmatpush1.msra.mxu0 0.0
        %3367 = vmatprep.subr.mxu0 0.0
        %3368 = vmatpush1.msra.mxu0 0.0
        %3369 = vmatprep.subr.mxu0 0.0
        %3370 = vmatpush1.msra.mxu0 0.0
        %3371 = vmatprep.subr.mxu0 0.0
        %3372 = vmatpush1.msra.mxu0 0.0
        %3373 = vmatprep.subr.mxu0 0.0
        %3374 = vmatpush1.msra.mxu0 0.0
        %3375 = vmatprep.subr.mxu0 0.0
        %3376 = vmatpush1.msra.mxu0 0.0
        %3377 = vmatprep.subr.mxu0 0.0
        %3378 = vmatpush1.msra.mxu0 0.0
        %3379 = vmatprep.subr.mxu0 0.0
        %3380 = vmatpush1.msra.mxu0 0.0
        %3381 = vmatprep.subr.mxu0 0.0
        %3382 = vmatpush1.msra.mxu0 0.0
        %3383 = vmatprep.subr.mxu0 0.0
        %3384 = vmatpush1.msra.mxu0 0.0
        %3385 = vmatprep.subr.mxu0 0.0
        %3386 = vmatpush1.msra.mxu0 0.0
        %3387 = vmatprep.subr.mxu0 0.0
        %3388 = vmatpush1.msra.mxu0 0.0
        %3389 = vmatprep.subr.mxu0 0.0
        %3390 = vmatpush1.msra.mxu0 0.0
        %3391 = vmatprep.subr.mxu0 0.0
        %3392 = vmatpush1.msra.mxu0 0.0
        %3393 = vmatprep.subr.mxu0 0.0
        %3394 = vmatpush1.msra.mxu0 0.0
        %3395 = vmatprep.subr.mxu0 0.0
        %3396 = vmatpush1.msra.mxu0 0.0
        %3397 = vmatprep.subr.mxu0 0.0
        %3398 = vmatpush1.msra.mxu0 0.0
        %3399 = vmatprep.subr.mxu0 0.0
        %3400 = vmatpush1.msra.mxu0 0.0
        %3401 = vmatprep.subr.mxu0 0.0
        %3402 = vmatpush1.msra.mxu0 0.0
        %3403 = vmatprep.subr.mxu0 0.0
        %3404 = vmatpush1.msra.mxu0 0.0
        %3405 = vmatprep.mubr.f32.mxu0 0.0
        %3406 = vmatmul.mubr.f32.gmra.mrb[0].mxu0 %v3339
        %v3407 = vpop.f32.mrb[0].mxu0
        %v3408 = vadd.f32 %v3336, %v3407
        %v3409 = vpop.f32.mrb[0].mxu0
        %3410 = vdwg.mxu0
        %v3411 = vmax.f32 %v3408, 0.0
        %3412 = vst [vmem:[%s438] sm:$0xff] %v3411
        %s3413 = sand.u32 %s297, 1
        %s3414 = scalar_lea.sflag [#allocation4], %s3413
        %s3415 = sand.u32 %s297, 1
        %s3416 = smul.addr %s3415, 8
        %s3417 = scalar_lea.vmem [#allocation5], %s3416
        // Predicated region
        $region73: #{tpu_custom_call.1} parent=67 // pred_check
          %p3418 = pneg %p307
        $region74: #{tpu_custom_call.1} parent=67 // pred_check_branch
          %3420 = sbr.rel (%p3418) target = $region76
        $region75: #{tpu_custom_call.1} parent=67 // pred_region
          %s3422 = ssub.s32 128, 128
          %3423 = vsyncadd %s3414, %s3422
          %s3424 = smul.addr %s27, 128
          %s3425 = scalar_lea.hbm %s12, %s3424
          %s3427 = sshll.u32 %s3417, 4
          %s3428 = int_to_ptr.vmem [resolvable:$true] %s3427
          %3430 = dma.vmem_to_hbm [thread:$0]  %s3428, 128, %s3425, %s3414
        $region76: #{tpu_custom_call.1} parent=67 // pred_fallthru
          _
      $region68: #{tpu_custom_call.1} parent=5 // pred_fallthru
        _
      %p3431 = scmp.le.s32.totalorder 2, %s22
      // Predicated region
      $region77: #{tpu_custom_call.1} parent=5 // pred_check
        %p3432 = pneg %p3431
      $region78: #{tpu_custom_call.1} parent=5 // pred_check_branch
        %3434 = sbr.rel (%p3432) target = $region80
      $region79: #{tpu_custom_call.1} parent=5 // pred_region
        %s3435 = ssub.s32 %s22, 2
        // Predicated region
        $region81: #{tpu_custom_call.1} parent=79 // pred_check
          %p3436 = pneg %p313
        $region82: #{tpu_custom_call.1} parent=79 // pred_check_branch
          %3438 = sbr.rel (%p3436) target = $region84
        $region83: #{tpu_custom_call.1} parent=79 // pred_region
          %s3439 = sand.u32 %s298, 1
          %s3440 = scalar_lea.sflag [#allocation4], %s3439
          %s3441 = sand.u32 %s298, 1
          %s3442 = smul.addr %s3441, 8
          %s3443 = scalar_lea.vmem [#allocation5], %s3442
          %3444 = dma.done %s3440, 128
        $region84: #{tpu_custom_call.1} parent=79 // pred_fallthru
          _
      $region80: #{tpu_custom_call.1} parent=5 // pred_fallthru
        _
    $region6: #{tpu_custom_call.1} parent=1 // loop_footer
      %s26 = sadd.s32 1, %s22
    $region7: #{tpu_custom_call.1} parent=1 // loop_footer_branch
      %21 = sbr.rel target = $region3
    $region8: #{tpu_custom_call.1} parent=1 // loop_exit
      _
    %3445 = vsyncpa [#allocation3], 1
    %s3446 = scalar_lea.sflag [#allocation3], 1
    %3447 = vsyncpa %s3446, 1
    %3448 = vsyncpa [#allocation4], 1
    %s3449 = scalar_lea.sflag [#allocation4], 1
    %3450 = vsyncpa %s3449, 1

</llo_original>
